<compile_context>
chip_gen: v7x
topology: tpu7x:2x2x1
jax: 0.10.0
libtpu: 0.0.40
codegen_flags: <defaults>
</compile_context>

<pallas_src>
import functools
import math

import jax
import jax.numpy as jnp
from jax.experimental import pallas as pl
from jax.experimental.pallas import tpu as pltpu


# --------------------------- per-generation hardware knobs ---------------------

@functools.lru_cache(maxsize=None)
def _vmem_capacity_bytes():
    """Physical VMEM per TensorCore (128 MiB on v5e/v6e, 64 MiB on v7x)."""
    try:
        return int(pltpu.get_tpu_info().vmem_capacity_bytes)
    except Exception:
        return 64 * 1024 * 1024  # conservative fallback (v7x per-TC)


def _vmem_limit_bytes():
    # ~75% of physical VMEM: ~96 MiB on v5e/v6e, ~48 MiB on v7x (headroom for
    # Mosaic-internal scratch).
    return (_vmem_capacity_bytes() * 3) // 4


def _big_vmem():
    return _vmem_capacity_bytes() >= 100 * 1024 * 1024


@functools.lru_cache(maxsize=None)
def _buffered_single_ok():
    """Probe (once) whether pipeline_mode=pl.Buffered(1) is supported & correct
    for grid-invariant blocks on this jax/libtpu build.  Falls back gracefully."""
    try:
        def k(x_ref, w_ref, o_ref):
            o_ref[...] = x_ref[...] + w_ref[...]
        x = jnp.arange(32 * 128, dtype=jnp.float32).reshape(32, 128)
        w = jnp.full((8, 128), 3.0, jnp.float32)
        out = pl.pallas_call(
            k,
            grid=(4,),
            in_specs=[pl.BlockSpec((8, 128), lambda i: (i, 0)),
                      pl.BlockSpec((8, 128), lambda i: (0, 0),
                                   pipeline_mode=pl.Buffered(1))],
            out_specs=pl.BlockSpec((8, 128), lambda i: (i, 0)),
            out_shape=jax.ShapeDtypeStruct((32, 128), jnp.float32),
        )(x, w)
        return bool(jnp.allclose(out, x + 3.0))
    except Exception:
        return False


def _const_spec(block_shape):
    """BlockSpec for a grid-invariant operand (weights/biases/LN params):
    constant index_map, single-buffered when supported."""
    nd = len(block_shape)
    idx = lambda *_: (0,) * nd
    if _buffered_single_ok():
        return pl.BlockSpec(block_shape, idx, pipeline_mode=pl.Buffered(1))
    return pl.BlockSpec(block_shape, idx)


def _cparams(dim_semantics):
    return pltpu.CompilerParams(
        dimension_semantics=dim_semantics,
        vmem_limit_bytes=_vmem_limit_bytes(),
    )


def _row_tile(m, max_tile):
    return m if m <= max_tile else max_tile


def _layer_norm(y, gamma, beta, eps):
    mean = jnp.mean(y, axis=-1, keepdims=True)
    yc = y - mean
    var = jnp.mean(yc * yc, axis=-1, keepdims=True)
    return yc * jax.lax.rsqrt(var + eps) * gamma + beta


# --------------------------- row-tiled linear (embedding) ----------------------

def _linear_kernel(x_ref, w_ref, b_ref, o_ref):
    x = x_ref[...].astype(jnp.bfloat16)
    y = jnp.dot(x, w_ref[...], preferred_element_type=jnp.float32) + b_ref[...]
    o_ref[...] = y.astype(o_ref.dtype)


def linear(x, w_bf16, b_f32, max_rows=None):
    """y = x @ w + b.  x: (M, K), w: (K, N) bf16, b: (N,) f32 -> (M, N) bf16."""
    M, K = x.shape
    N = w_bf16.shape[1]
    if max_rows is None:
        max_rows = 1024 if _big_vmem() else 512
    tm = _row_tile(M, max_rows)
    return pl.pallas_call(
        _linear_kernel,
        grid=(pl.cdiv(M, tm),),
        in_specs=[pl.BlockSpec((tm, K), lambda i: (i, 0)),
                  _const_spec((K, N)),
                  _const_spec((1, N))],
        out_specs=pl.BlockSpec((tm, N), lambda i: (i, 0)),
        out_shape=jax.ShapeDtypeStruct((M, N), jnp.bfloat16),
        compiler_params=_cparams(("parallel",)),
    )(x, w_bf16, b_f32.reshape(1, N))


# --------------------------- fused attention block -----------------------------
# in_proj -> per-head attention -> out_proj -> +residual -> LayerNorm1
# One grid step = one batch element x one query-row tile (all H heads).

def _attn_block_kernel(xq_ref, xf_ref, wq_ref, wk_ref, wv_ref,
                       bq_ref, bk_ref, bv_ref, wo_ref, bo_ref,
                       g_ref, beta_ref, o_ref, *, num_heads, eps):
    xq = xq_ref[0]          # (tq, D) bf16  -- query rows of this grid step
    xf = xf_ref[0]          # (S,  D) bf16  -- full sequence (for keys/values)
    D = xq.shape[-1]
    H = num_heads
    Dh = D // H
    scale = 1.0 / math.sqrt(Dh)

    # Projections: K=D MXU matmuls with f32 accumulation, biases in f32.
    q = jnp.dot(xq, wq_ref[...], preferred_element_type=jnp.float32) + bq_ref[...]
    k = jnp.dot(xf, wk_ref[...], preferred_element_type=jnp.float32) + bk_ref[...]
    v = jnp.dot(xf, wv_ref[...], preferred_element_type=jnp.float32) + bv_ref[...]

    # Scale q (tq*D elements) instead of the (tq, S) score matrix.
    q = (q * scale).astype(jnp.bfloat16)
    k = k.astype(jnp.bfloat16)
    v = v.astype(jnp.bfloat16)

    # Per-head softmax(q k^T) v; head outputs go to lane-contiguous column slices,
    # then ONE (tq,D)@(D,D) out_proj matmul (full-K MXU pass, no per-head folding).
    # TODO(synk): pad per-head columns to 128-lane boundaries when Dh % 128 != 0
    # to avoid masked lane slices per head.
    head_outs = []
    for h in range(H):                                   # unrolled; H is small
        qh = q[:, h * Dh:(h + 1) * Dh]
        kh = k[:, h * Dh:(h + 1) * Dh]
        vh = v[:, h * Dh:(h + 1) * Dh]
        s = jax.lax.dot_general(qh, kh, (((1,), (1,)), ((), ())),
                                preferred_element_type=jnp.float32)   # (tq, S)
        s = s - jnp.max(s, axis=-1, keepdims=True)
        p = jnp.exp(s)
        p = p * pl.reciprocal(jnp.sum(p, axis=-1, keepdims=True), approx=True)
        head_outs.append(
            jnp.dot(p.astype(jnp.bfloat16), vh,
                    preferred_element_type=jnp.float32).astype(jnp.bfloat16))
    attn = jnp.concatenate(head_outs, axis=-1)                        # (tq, D) bf16
    attn = jnp.dot(attn, wo_ref[...], preferred_element_type=jnp.float32) + bo_ref[...]

    # residual + LayerNorm1 (post-norm); dropout is identity at inference.
    y = xq.astype(jnp.float32) + attn
    y = _layer_norm(y, g_ref[...], beta_ref[...], eps)
    o_ref[0] = y.astype(o_ref.dtype)


def attention_block(x, in_proj_w, in_proj_b, out_proj_w, out_proj_b,
                    gamma, beta, num_heads, eps=1e-5, q_tile=256):
    """x: (B, S, D) bf16 -> (B, S, D) bf16."""
    B, S, D = x.shape
    tq = S if S <= q_tile else q_tile
    wq, wk, wv = in_proj_w[:, :D], in_proj_w[:, D:2 * D], in_proj_w[:, 2 * D:]
    bq = in_proj_b[:D].reshape(1, D)
    bk = in_proj_b[D:2 * D].reshape(1, D)
    bv = in_proj_b[2 * D:].reshape(1, D)
    # TODO(synk): for very long S also tile K/V (flash-style online softmax) instead
    # of projecting the full (S, D) K/V per q-tile step.
    # TODO(synk): for S < ~256, pack several batch elements per grid step to fill
    # the MXU M dimension and amortize per-step overhead.
    # TODO(synk): optionally fuse the FFN (and final mean-pool) into this kernel to
    # drop one (B,S,D) HBM round trip per layer (VMEM-permitting on v7x).
    return pl.pallas_call(
        functools.partial(_attn_block_kernel, num_heads=num_heads, eps=eps),
        grid=(B, pl.cdiv(S, tq)),
        in_specs=[
            pl.BlockSpec((1, tq, D), lambda b, qi: (b, qi, 0)),   # query-row tile
            pl.BlockSpec((1, S, D), lambda b, qi: (b, 0, 0)),     # full sequence (K/V)
            _const_spec((D, D)), _const_spec((D, D)), _const_spec((D, D)),
            _const_spec((1, D)), _const_spec((1, D)), _const_spec((1, D)),
            _const_spec((D, D)), _const_spec((1, D)),
            _const_spec((1, D)), _const_spec((1, D)),
        ],
        out_specs=pl.BlockSpec((1, tq, D), lambda b, qi: (b, qi, 0)),
        out_shape=jax.ShapeDtypeStruct((B, S, D), jnp.bfloat16),
        compiler_params=_cparams(("parallel", "parallel")),
    )(x, x, wq, wk, wv, bq, bk, bv,
      out_proj_w, out_proj_b.reshape(1, D),
      gamma.reshape(1, D), beta.reshape(1, D))


# --------------------------- fused FFN block ------------------------------------
# W1 + ReLU + W2 -> +residual -> LayerNorm2, row-tiled; both weights resident.

def _ffn_block_kernel(x_ref, w1_ref, b1_ref, w2_ref, b2_ref, g_ref, beta_ref,
                      o_ref, *, eps):
    x = x_ref[...]                                            # (tm, D) bf16
    h = jnp.dot(x, w1_ref[...], preferred_element_type=jnp.float32) + b1_ref[...]
    h = jnp.maximum(h, 0.0)                                   # ReLU
    y = jnp.dot(h.astype(jnp.bfloat16), w2_ref[...],
                preferred_element_type=jnp.float32) + b2_ref[...]
    y = x.astype(jnp.float32) + y                             # residual (dropout = id)
    y = _layer_norm(y, g_ref[...], beta_ref[...], eps)
    o_ref[...] = y.astype(o_ref.dtype)


def ffn_block(x, w1, b1, w2, b2, gamma, beta, eps=1e-5, max_rows=None):
    """x: (M, D) bf16 -> (M, D) bf16.  Row tile sized per VMEM generation."""
    M, D = x.shape
    F = w1.shape[1]
    if max_rows is None:
        if _big_vmem():                       # v5e / v6e: 128 MiB VMEM
            max_rows = 1024
        else:                                 # v7x: 64 MiB VMEM
            max_rows = 512 if _buffered_single_ok() else 256
    tm = _row_tile(M, max_rows)
    return pl.pallas_call(
        functools.partial(_ffn_block_kernel, eps=eps),
        grid=(pl.cdiv(M, tm),),
        in_specs=[
            pl.BlockSpec((tm, D), lambda i: (i, 0)),
            _const_spec((D, F)), _const_spec((1, F)),
            _const_spec((F, D)), _const_spec((1, D)),
            _const_spec((1, D)), _const_spec((1, D)),
        ],
        out_specs=pl.BlockSpec((tm, D), lambda i: (i, 0)),
        out_shape=jax.ShapeDtypeStruct((M, D), jnp.bfloat16),
        compiler_params=_cparams(("parallel",)),
    )(x, w1, b1.reshape(1, F), w2, b2.reshape(1, D),
      gamma.reshape(1, D), beta.reshape(1, D))


# --------------------------- mean pool + fc_out ----------------------------------

def _pool_fc_kernel(x_ref, w_ref, b_ref, o_ref):
    x = x_ref[...].astype(jnp.float32)                        # (tb, S, D)
    pooled = jnp.mean(x, axis=1)                              # (tb, D) == src.mean(dim=1)
    # N=1 output: VPU reduction instead of a 1-lane-wide MXU matmul.
    y = jnp.sum(pooled * w_ref[...].astype(jnp.float32), axis=-1, keepdims=True)
    o_ref[...] = y + b_ref[...]


def mean_pool_fc(x, fc_w, fc_b, max_batch_tile=128):
    """x: (B, S, D) bf16, fc_w: (D, 1) bf16, fc_b: (1,) f32 -> (B, 1) f32."""
    B, S, D = x.shape
    tb = _row_tile(B, max_batch_tile)
    return pl.pallas_call(
        _pool_fc_kernel,
        grid=(pl.cdiv(B, tb),),
        in_specs=[pl.BlockSpec((tb, S, D), lambda i: (i, 0, 0)),
                  _const_spec((1, D)),
                  _const_spec((1, 1))],
        out_specs=pl.BlockSpec((tb, 1), lambda i: (i, 0)),
        out_shape=jax.ShapeDtypeStruct((B, 1), jnp.float32),
        compiler_params=_cparams(("parallel",)),
    )(x, fc_w.reshape(1, D), fc_b.reshape(1, 1))


# --------------------------- parameters ------------------------------------------

def _dense_init(key, fan_in, fan_out):
    kw, kb = jax.random.split(key)
    lim = 1.0 / math.sqrt(fan_in)
    w = jax.random.uniform(kw, (fan_in, fan_out), jnp.float32, -lim, lim)
    b = jax.random.uniform(kb, (fan_out,), jnp.float32, -lim, lim)
    return w.astype(jnp.bfloat16), b   # matmul weights stored bf16; biases f32


def init_params(key, input_size, num_heads, num_layers, hidden_dim, ffn_dim=2048):
    keys = jax.random.split(key, 2 + num_layers)
    embed_w, embed_b = _dense_init(keys[0], input_size, hidden_dim)
    fc_w, fc_b = _dense_init(keys[1], hidden_dim, 1)
    layers = []
    for l in range(num_layers):
        lk = jax.random.split(keys[2 + l], 4)
        in_proj_w, in_proj_b = _dense_init(lk[0], hidden_dim, 3 * hidden_dim)
        out_proj_w, out_proj_b = _dense_init(lk[1], hidden_dim, hidden_dim)
        ffn_w1, ffn_b1 = _dense_init(lk[2], hidden_dim, ffn_dim)
        ffn_w2, ffn_b2 = _dense_init(lk[3], ffn_dim, hidden_dim)
        layers.append(dict(
            in_proj_w=in_proj_w, in_proj_b=in_proj_b,
            out_proj_w=out_proj_w, out_proj_b=out_proj_b,
            ffn_w1=ffn_w1, ffn_b1=ffn_b1, ffn_w2=ffn_w2, ffn_b2=ffn_b2,
            ln1_g=jnp.ones((hidden_dim,), jnp.float32),
            ln1_b=jnp.zeros((hidden_dim,), jnp.float32),
            ln2_g=jnp.ones((hidden_dim,), jnp.float32),
            ln2_b=jnp.zeros((hidden_dim,), jnp.float32),
        ))
    return dict(embed_w=embed_w, embed_b=embed_b, fc_w=fc_w, fc_b=fc_b, layers=layers)


# --------------------------- forward pass -----------------------------------------

def transformer_forward(params, src, num_heads):
    """src: (B, S, input_size) f32 -> (B, 1) f32."""
    B, S, F = src.shape
    D = params["embed_w"].shape[1]

    # embedding (output bf16 in HBM)
    x = linear(src.reshape(B * S, F), params["embed_w"], params["embed_b"])   # (B*S, D)

    for lp in params["layers"]:
        # fused self-attention block (in_proj + MHA + out_proj + add&LN1)
        x3 = attention_block(x.reshape(B, S, D),
                             lp["in_proj_w"], lp["in_proj_b"],
                             lp["out_proj_w"], lp["out_proj_b"],
                             lp["ln1_g"], lp["ln1_b"], num_heads)             # (B, S, D)
        # fused feed-forward block (W1 + ReLU + W2 + add&LN2)
        x = ffn_block(x3.reshape(B * S, D),
                      lp["ffn_w1"], lp["ffn_b1"], lp["ffn_w2"], lp["ffn_b2"],
                      lp["ln2_g"], lp["ln2_b"])                               # (B*S, D)

    # final dropout is identity at inference; mean over time + fc_out
    return mean_pool_fc(x.reshape(B, S, D), params["fc_w"], params["fc_b"])   # (B, 1)


# --------------------------- demo --------------------------------------------------

if __name__ == "__main__":
    input_size, num_heads, num_layers, hidden_dim = 4, 4, 2, 32
    B, S = 2, 8

    # Resolve hardware knobs eagerly (outside any jit trace).
    _ = _vmem_capacity_bytes()
    _ = _buffered_single_ok()

    key = jax.random.PRNGKey(0)
    pkey, xkey = jax.random.split(key)
    params = init_params(pkey, input_size, num_heads, num_layers, hidden_dim, ffn_dim=2048)
    src = jax.random.normal(xkey, (B, S, input_size), jnp.float32)

    fwd = jax.jit(functools.partial(transformer_forward, num_heads=num_heads))
    out = jax.block_until_ready(fwd(params, src))
    assert out.shape == (B, 1) and out.dtype == jnp.float32
    print("KERNEL_OK")
</pallas_src>

<mosaic_0001>
module attributes {stable_mosaic.version = 11 : i64} {
  func.func @k(%arg0: i32, %arg1: memref<8x128xf32, #tpu.memory_space<vmem>>, %arg2: memref<8x128xf32, #tpu.memory_space<vmem>>, %arg3: memref<8x128xf32, #tpu.memory_space<vmem>>) attributes {dimension_semantics = [#tpu.dimension_semantics<arbitrary>], iteration_bounds = array<i64: 4>, scalar_prefetch = 0 : i64, scratch_operands = 0 : i64, tpu.core_type = #tpu.core_type<tc>, window_params = [{transform_indices = @transform_0, window_bounds = array<i64: 8, 128>}, {pipeline_mode = #tpu.pipeline_mode<synchronous>, transform_indices = @transform_1, window_bounds = array<i64: 8, 128>}, {transform_indices = @transform_2, window_bounds = array<i64: 8, 128>}]} {
    %c0 = arith.constant 0 : index
    %c0_0 = arith.constant 0 : index
    %0 = vector.load %arg1[%c0, %c0_0] : memref<8x128xf32, #tpu.memory_space<vmem>>, vector<8x128xf32>
    %c0_1 = arith.constant 0 : index
    %c0_2 = arith.constant 0 : index
    %1 = vector.load %arg2[%c0_1, %c0_2] : memref<8x128xf32, #tpu.memory_space<vmem>>, vector<8x128xf32>
    %2 = arith.addf %0, %1 : vector<8x128xf32>
    %c0_3 = arith.constant 0 : index
    %c0_4 = arith.constant 0 : index
    %3 = vector.load %arg3[%c0_3, %c0_4] : memref<8x128xf32, #tpu.memory_space<vmem>>, vector<8x128xf32>
    tpu.vector_store %arg3[%c0_3, %c0_4], %2 {strides = array<i32>} : memref<8x128xf32, #tpu.memory_space<vmem>>, vector<8x128xf32>,
    return
  }
  func.func @transform_0(%arg0: i32) -> (i32, i32) {
    %c0_i32 = arith.constant 0 : i32
    %c0_i32_0 = arith.constant 0 : i32
    return %arg0, %c0_i32 : i32, i32
  }
  func.func @transform_1(%arg0: i32) -> (i32, i32) {
    %c0_i32 = arith.constant 0 : i32
    %c0_i32_0 = arith.constant 0 : i32
    %c0_i32_1 = arith.constant 0 : i32
    return %c0_i32, %c0_i32_0 : i32, i32
  }
  func.func @transform_2(%arg0: i32) -> (i32, i32) {
    %c0_i32 = arith.constant 0 : i32
    %c0_i32_0 = arith.constant 0 : i32
    return %arg0, %c0_i32 : i32, i32
  }
}

module attributes {stable_mosaic.version = 11 : i64} {
  func.func @_linear_kernel(%arg0: i32, %arg1: memref<16x4xf32, #tpu.memory_space<vmem>>, %arg2: memref<4x32xbf16, #tpu.memory_space<vmem>>, %arg3: memref<1x32xf32, #tpu.memory_space<vmem>>, %arg4: memref<16x32xbf16, #tpu.memory_space<vmem>>) attributes {dimension_semantics = [#tpu.dimension_semantics<parallel>], iteration_bounds = array<i64: 1>, scalar_prefetch = 0 : i64, scratch_operands = 0 : i64, tpu.core_type = #tpu.core_type<tc>, window_params = [{transform_indices = @transform_0, window_bounds = array<i64: 16, 4>}, {pipeline_mode = #tpu.pipeline_mode<synchronous>, transform_indices = @transform_1, window_bounds = array<i64: 4, 32>}, {pipeline_mode = #tpu.pipeline_mode<synchronous>, transform_indices = @transform_2, window_bounds = array<i64: 1, 32>}, {transform_indices = @transform_3, window_bounds = array<i64: 16, 32>}]} {
    %c0 = arith.constant 0 : index
    %c0_0 = arith.constant 0 : index
    %0 = vector.load %arg1[%c0, %c0_0] : memref<16x4xf32, #tpu.memory_space<vmem>>, vector<16x4xf32>
    %1 = arith.truncf %0 : vector<16x4xf32> to vector<16x4xbf16>
    %c0_1 = arith.constant 0 : index
    %c0_2 = arith.constant 0 : index
    %2 = vector.load %arg2[%c0_1, %c0_2] : memref<4x32xbf16, #tpu.memory_space<vmem>>, vector<4x32xbf16>
    %cst = arith.constant dense<0.000000e+00> : vector<16x32xf32>
    %3 = tpu.matmul %1, %2, %cst {dimension_numbers = #tpu.dot_dimension_numbers<[1], [0], [0], [1], [0, 0, 1, 1], [], []>} : vector<16x4xbf16>, vector<4x32xbf16>, vector<16x32xf32> -> vector<16x32xf32>
    %c0_3 = arith.constant 0 : index
    %c0_4 = arith.constant 0 : index
    %4 = vector.load %arg3[%c0_3, %c0_4] : memref<1x32xf32, #tpu.memory_space<vmem>>, vector<1x32xf32>
    %5 = vector.broadcast %4 : vector<1x32xf32> to vector<16x32xf32>
    %6 = arith.addf %3, %5 : vector<16x32xf32>
    %7 = arith.truncf %6 : vector<16x32xf32> to vector<16x32xbf16>
    %c0_5 = arith.constant 0 : index
    %c0_6 = arith.constant 0 : index
    %8 = vector.load %arg4[%c0_5, %c0_6] : memref<16x32xbf16, #tpu.memory_space<vmem>>, vector<16x32xbf16>
    tpu.vector_store %arg4[%c0_5, %c0_6], %7 {strides = array<i32>} : memref<16x32xbf16, #tpu.memory_space<vmem>>, vector<16x32xbf16>,
    return
  }
  func.func @transform_0(%arg0: i32) -> (i32, i32) {
    %c0_i32 = arith.constant 0 : i32
    %c0_i32_0 = arith.constant 0 : i32
    return %arg0, %c0_i32 : i32, i32
  }
  func.func @transform_1(%arg0: i32) -> (i32, i32) {
    %c0_i32 = arith.constant 0 : i32
    %c0_i32_0 = arith.constant 0 : i32
    %c0_i32_1 = arith.constant 0 : i32
    return %c0_i32, %c0_i32_0 : i32, i32
  }
  func.func @transform_2(%arg0: i32) -> (i32, i32) {
    %c0_i32 = arith.constant 0 : i32
    %c0_i32_0 = arith.constant 0 : i32
    %c0_i32_1 = arith.constant 0 : i32
    return %c0_i32, %c0_i32_0 : i32, i32
  }
  func.func @transform_3(%arg0: i32) -> (i32, i32) {
    %c0_i32 = arith.constant 0 : i32
    %c0_i32_0 = arith.constant 0 : i32
    return %arg0, %c0_i32 : i32, i32
  }
}

module attributes {stable_mosaic.version = 11 : i64} {
  func.func @_attn_block_kernel(%arg0: i32, %arg1: i32, %arg2: memref<1x8x32xbf16, #tpu.memory_space<vmem>>, %arg3: memref<1x8x32xbf16, #tpu.memory_space<vmem>>, %arg4: memref<32x32xbf16, #tpu.memory_space<vmem>>, %arg5: memref<32x32xbf16, #tpu.memory_space<vmem>>, %arg6: memref<32x32xbf16, #tpu.memory_space<vmem>>, %arg7: memref<1x32xf32, #tpu.memory_space<vmem>>, %arg8: memref<1x32xf32, #tpu.memory_space<vmem>>, %arg9: memref<1x32xf32, #tpu.memory_space<vmem>>, %arg10: memref<32x32xbf16, #tpu.memory_space<vmem>>, %arg11: memref<1x32xf32, #tpu.memory_space<vmem>>, %arg12: memref<1x32xf32, #tpu.memory_space<vmem>>, %arg13: memref<1x32xf32, #tpu.memory_space<vmem>>, %arg14: memref<1x8x32xbf16, #tpu.memory_space<vmem>>) attributes {dimension_semantics = [#tpu.dimension_semantics<parallel>, #tpu.dimension_semantics<parallel>], iteration_bounds = array<i64: 2, 1>, scalar_prefetch = 0 : i64, scratch_operands = 0 : i64, tpu.core_type = #tpu.core_type<tc>, window_params = [{transform_indices = @transform_0, window_bounds = array<i64: 1, 8, 32>}, {transform_indices = @transform_1, window_bounds = array<i64: 1, 8, 32>}, {pipeline_mode = #tpu.pipeline_mode<synchronous>, transform_indices = @transform_2, window_bounds = array<i64: 32, 32>}, {pipeline_mode = #tpu.pipeline_mode<synchronous>, transform_indices = @transform_3, window_bounds = array<i64: 32, 32>}, {pipeline_mode = #tpu.pipeline_mode<synchronous>, transform_indices = @transform_4, window_bounds = array<i64: 32, 32>}, {pipeline_mode = #tpu.pipeline_mode<synchronous>, transform_indices = @transform_5, window_bounds = array<i64: 1, 32>}, {pipeline_mode = #tpu.pipeline_mode<synchronous>, transform_indices = @transform_6, window_bounds = array<i64: 1, 32>}, {pipeline_mode = #tpu.pipeline_mode<synchronous>, transform_indices = @transform_7, window_bounds = array<i64: 1, 32>}, {pipeline_mode = #tpu.pipeline_mode<synchronous>, transform_indices = @transform_8, window_bounds = array<i64: 32, 32>}, {pipeline_mode = #tpu.pipeline_mode<synchronous>, transform_indices = @transform_9, window_bounds = array<i64: 1, 32>}, {pipeline_mode = #tpu.pipeline_mode<synchronous>, transform_indices = @transform_10, window_bounds = array<i64: 1, 32>}, {pipeline_mode = #tpu.pipeline_mode<synchronous>, transform_indices = @transform_11, window_bounds = array<i64: 1, 32>}, {transform_indices = @transform_12, window_bounds = array<i64: 1, 8, 32>}]} {
    %c0 = arith.constant 0 : index
    %c0_0 = arith.constant 0 : index
    %c0_1 = arith.constant 0 : index
    %0 = vector.load %arg2[%c0, %c0_0, %c0_1] : memref<1x8x32xbf16, #tpu.memory_space<vmem>>, vector<1x8x32xbf16>
    %1 = vector.shape_cast %0 : vector<1x8x32xbf16> to vector<8x32xbf16>
    %c0_2 = arith.constant 0 : index
    %c0_3 = arith.constant 0 : index
    %c0_4 = arith.constant 0 : index
    %2 = vector.load %arg3[%c0_2, %c0_3, %c0_4] : memref<1x8x32xbf16, #tpu.memory_space<vmem>>, vector<1x8x32xbf16>
    %3 = vector.shape_cast %2 : vector<1x8x32xbf16> to vector<8x32xbf16>
    %c0_5 = arith.constant 0 : index
    %c0_6 = arith.constant 0 : index
    %4 = vector.load %arg4[%c0_5, %c0_6] : memref<32x32xbf16, #tpu.memory_space<vmem>>, vector<32x32xbf16>
    %cst = arith.constant dense<0.000000e+00> : vector<8x32xf32>
    %5 = tpu.matmul %1, %4, %cst {dimension_numbers = #tpu.dot_dimension_numbers<[1], [0], [0], [1], [0, 0, 1, 1], [], []>} : vector<8x32xbf16>, vector<32x32xbf16>, vector<8x32xf32> -> vector<8x32xf32>
    %c0_7 = arith.constant 0 : index
    %c0_8 = arith.constant 0 : index
    %6 = vector.load %arg7[%c0_7, %c0_8] : memref<1x32xf32, #tpu.memory_space<vmem>>, vector<1x32xf32>
    %7 = vector.broadcast %6 : vector<1x32xf32> to vector<8x32xf32>
    %8 = arith.addf %5, %7 : vector<8x32xf32>
    %c0_9 = arith.constant 0 : index
    %c0_10 = arith.constant 0 : index
    %9 = vector.load %arg5[%c0_9, %c0_10] : memref<32x32xbf16, #tpu.memory_space<vmem>>, vector<32x32xbf16>
    %cst_11 = arith.constant dense<0.000000e+00> : vector<8x32xf32>
    %10 = tpu.matmul %3, %9, %cst_11 {dimension_numbers = #tpu.dot_dimension_numbers<[1], [0], [0], [1], [0, 0, 1, 1], [], []>} : vector<8x32xbf16>, vector<32x32xbf16>, vector<8x32xf32> -> vector<8x32xf32>
    %c0_12 = arith.constant 0 : index
    %c0_13 = arith.constant 0 : index
    %11 = vector.load %arg8[%c0_12, %c0_13] : memref<1x32xf32, #tpu.memory_space<vmem>>, vector<1x32xf32>
    %12 = vector.broadcast %11 : vector<1x32xf32> to vector<8x32xf32>
    %13 = arith.addf %10, %12 : vector<8x32xf32>
    %c0_14 = arith.constant 0 : index
    %c0_15 = arith.constant 0 : index
    %14 = vector.load %arg6[%c0_14, %c0_15] : memref<32x32xbf16, #tpu.memory_space<vmem>>, vector<32x32xbf16>
    %cst_16 = arith.constant dense<0.000000e+00> : vector<8x32xf32>
    %15 = tpu.matmul %3, %14, %cst_16 {dimension_numbers = #tpu.dot_dimension_numbers<[1], [0], [0], [1], [0, 0, 1, 1], [], []>} : vector<8x32xbf16>, vector<32x32xbf16>, vector<8x32xf32> -> vector<8x32xf32>
    %c0_17 = arith.constant 0 : index
    %c0_18 = arith.constant 0 : index
    %16 = vector.load %arg9[%c0_17, %c0_18] : memref<1x32xf32, #tpu.memory_space<vmem>>, vector<1x32xf32>
    %17 = vector.broadcast %16 : vector<1x32xf32> to vector<8x32xf32>
    %18 = arith.addf %15, %17 : vector<8x32xf32>
    %cst_19 = arith.constant 0.353553385 : f32
    %19 = vector.broadcast %cst_19 : f32 to vector<8x32xf32>
    %20 = arith.mulf %8, %19 : vector<8x32xf32>
    %21 = arith.truncf %20 : vector<8x32xf32> to vector<8x32xbf16>
    %22 = arith.truncf %13 : vector<8x32xf32> to vector<8x32xbf16>
    %23 = arith.truncf %18 : vector<8x32xf32> to vector<8x32xbf16>
    %24 = vector.extract_strided_slice %21 {offsets = [0, 0], sizes = [8, 8], strides = [1, 1]} : vector<8x32xbf16> to vector<8x8xbf16>
    %25 = vector.extract_strided_slice %22 {offsets = [0, 0], sizes = [8, 8], strides = [1, 1]} : vector<8x32xbf16> to vector<8x8xbf16>
    %26 = vector.extract_strided_slice %23 {offsets = [0, 0], sizes = [8, 8], strides = [1, 1]} : vector<8x32xbf16> to vector<8x8xbf16>
    %cst_20 = arith.constant dense<0.000000e+00> : vector<8x8xf32>
    %27 = tpu.matmul %24, %25, %cst_20 {dimension_numbers = #tpu.dot_dimension_numbers<[1], [1], [0], [0], [0, 0, 1, 0], [], []>} : vector<8x8xbf16>, vector<8x8xbf16>, vector<8x8xf32> -> vector<8x8xf32>
    %cst_21 = arith.constant dense<0xFF800000> : vector<8xf32>
    %28 = vector.multi_reduction <maximumf>, %27, %cst_21 [1] : vector<8x8xf32> to vector<8xf32>
    %29 = vector.shape_cast %28 : vector<8xf32> to vector<8x1xf32>
    %30 = vector.broadcast %29 : vector<8x1xf32> to vector<8x8xf32>
    %31 = arith.subf %27, %30 : vector<8x8xf32>
    %32 = math.exp %31 : vector<8x8xf32>
    %cst_22 = arith.constant dense<0.000000e+00> : vector<8xf32>
    %33 = vector.multi_reduction <add>, %32, %cst_22 [1] : vector<8x8xf32> to vector<8xf32>
    %34 = vector.shape_cast %33 : vector<8xf32> to vector<8x1xf32>
    %35 = tpu.reciprocal %34 {approx = true} : vector<8x1xf32> -> vector<8x1xf32>
    %36 = vector.broadcast %35 : vector<8x1xf32> to vector<8x8xf32>
    %37 = arith.mulf %32, %36 : vector<8x8xf32>
    %38 = arith.truncf %37 : vector<8x8xf32> to vector<8x8xbf16>
    %cst_23 = arith.constant dense<0.000000e+00> : vector<8x8xf32>
    %39 = tpu.matmul %38, %26, %cst_23 {dimension_numbers = #tpu.dot_dimension_numbers<[1], [0], [0], [1], [0, 0, 1, 1], [], []>} : vector<8x8xbf16>, vector<8x8xbf16>, vector<8x8xf32> -> vector<8x8xf32>
    %40 = arith.truncf %39 : vector<8x8xf32> to vector<8x8xbf16>
    %41 = vector.extract_strided_slice %21 {offsets = [0, 8], sizes = [8, 8], strides = [1, 1]} : vector<8x32xbf16> to vector<8x8xbf16>
    %42 = vector.extract_strided_slice %22 {offsets = [0, 8], sizes = [8, 8], strides = [1, 1]} : vector<8x32xbf16> to vector<8x8xbf16>
    %43 = vector.extract_strided_slice %23 {offsets = [0, 8], sizes = [8, 8], strides = [1, 1]} : vector<8x32xbf16> to vector<8x8xbf16>
    %cst_24 = arith.constant dense<0.000000e+00> : vector<8x8xf32>
    %44 = tpu.matmul %41, %42, %cst_24 {dimension_numbers = #tpu.dot_dimension_numbers<[1], [1], [0], [0], [0, 0, 1, 0], [], []>} : vector<8x8xbf16>, vector<8x8xbf16>, vector<8x8xf32> -> vector<8x8xf32>
    %cst_25 = arith.constant dense<0xFF800000> : vector<8xf32>
    %45 = vector.multi_reduction <maximumf>, %44, %cst_25 [1] : vector<8x8xf32> to vector<8xf32>
    %46 = vector.shape_cast %45 : vector<8xf32> to vector<8x1xf32>
    %47 = vector.broadcast %46 : vector<8x1xf32> to vector<8x8xf32>
    %48 = arith.subf %44, %47 : vector<8x8xf32>
    %49 = math.exp %48 : vector<8x8xf32>
    %cst_26 = arith.constant dense<0.000000e+00> : vector<8xf32>
    %50 = vector.multi_reduction <add>, %49, %cst_26 [1] : vector<8x8xf32> to vector<8xf32>
    %51 = vector.shape_cast %50 : vector<8xf32> to vector<8x1xf32>
    %52 = tpu.reciprocal %51 {approx = true} : vector<8x1xf32> -> vector<8x1xf32>
    %53 = vector.broadcast %52 : vector<8x1xf32> to vector<8x8xf32>
    %54 = arith.mulf %49, %53 : vector<8x8xf32>
    %55 = arith.truncf %54 : vector<8x8xf32> to vector<8x8xbf16>
    %cst_27 = arith.constant dense<0.000000e+00> : vector<8x8xf32>
    %56 = tpu.matmul %55, %43, %cst_27 {dimension_numbers = #tpu.dot_dimension_numbers<[1], [0], [0], [1], [0, 0, 1, 1], [], []>} : vector<8x8xbf16>, vector<8x8xbf16>, vector<8x8xf32> -> vector<8x8xf32>
    %57 = arith.truncf %56 : vector<8x8xf32> to vector<8x8xbf16>
    %58 = vector.extract_strided_slice %21 {offsets = [0, 16], sizes = [8, 8], strides = [1, 1]} : vector<8x32xbf16> to vector<8x8xbf16>
    %59 = vector.extract_strided_slice %22 {offsets = [0, 16], sizes = [8, 8], strides = [1, 1]} : vector<8x32xbf16> to vector<8x8xbf16>
    %60 = vector.extract_strided_slice %23 {offsets = [0, 16], sizes = [8, 8], strides = [1, 1]} : vector<8x32xbf16> to vector<8x8xbf16>
    %cst_28 = arith.constant dense<0.000000e+00> : vector<8x8xf32>
    %61 = tpu.matmul %58, %59, %cst_28 {dimension_numbers = #tpu.dot_dimension_numbers<[1], [1], [0], [0], [0, 0, 1, 0], [], []>} : vector<8x8xbf16>, vector<8x8xbf16>, vector<8x8xf32> -> vector<8x8xf32>
    %cst_29 = arith.constant dense<0xFF800000> : vector<8xf32>
    %62 = vector.multi_reduction <maximumf>, %61, %cst_29 [1] : vector<8x8xf32> to vector<8xf32>
    %63 = vector.shape_cast %62 : vector<8xf32> to vector<8x1xf32>
    %64 = vector.broadcast %63 : vector<8x1xf32> to vector<8x8xf32>
    %65 = arith.subf %61, %64 : vector<8x8xf32>
    %66 = math.exp %65 : vector<8x8xf32>
    %cst_30 = arith.constant dense<0.000000e+00> : vector<8xf32>
    %67 = vector.multi_reduction <add>, %66, %cst_30 [1] : vector<8x8xf32> to vector<8xf32>
    %68 = vector.shape_cast %67 : vector<8xf32> to vector<8x1xf32>
    %69 = tpu.reciprocal %68 {approx = true} : vector<8x1xf32> -> vector<8x1xf32>
    %70 = vector.broadcast %69 : vector<8x1xf32> to vector<8x8xf32>
    %71 = arith.mulf %66, %70 : vector<8x8xf32>
    %72 = arith.truncf %71 : vector<8x8xf32> to vector<8x8xbf16>
    %cst_31 = arith.constant dense<0.000000e+00> : vector<8x8xf32>
    %73 = tpu.matmul %72, %60, %cst_31 {dimension_numbers = #tpu.dot_dimension_numbers<[1], [0], [0], [1], [0, 0, 1, 1], [], []>} : vector<8x8xbf16>, vector<8x8xbf16>, vector<8x8xf32> -> vector<8x8xf32>
    %74 = arith.truncf %73 : vector<8x8xf32> to vector<8x8xbf16>
    %75 = vector.extract_strided_slice %21 {offsets = [0, 24], sizes = [8, 8], strides = [1, 1]} : vector<8x32xbf16> to vector<8x8xbf16>
    %76 = vector.extract_strided_slice %22 {offsets = [0, 24], sizes = [8, 8], strides = [1, 1]} : vector<8x32xbf16> to vector<8x8xbf16>
    %77 = vector.extract_strided_slice %23 {offsets = [0, 24], sizes = [8, 8], strides = [1, 1]} : vector<8x32xbf16> to vector<8x8xbf16>
    %cst_32 = arith.constant dense<0.000000e+00> : vector<8x8xf32>
    %78 = tpu.matmul %75, %76, %cst_32 {dimension_numbers = #tpu.dot_dimension_numbers<[1], [1], [0], [0], [0, 0, 1, 0], [], []>} : vector<8x8xbf16>, vector<8x8xbf16>, vector<8x8xf32> -> vector<8x8xf32>
    %cst_33 = arith.constant dense<0xFF800000> : vector<8xf32>
    %79 = vector.multi_reduction <maximumf>, %78, %cst_33 [1] : vector<8x8xf32> to vector<8xf32>
    %80 = vector.shape_cast %79 : vector<8xf32> to vector<8x1xf32>
    %81 = vector.broadcast %80 : vector<8x1xf32> to vector<8x8xf32>
    %82 = arith.subf %78, %81 : vector<8x8xf32>
    %83 = math.exp %82 : vector<8x8xf32>
    %cst_34 = arith.constant dense<0.000000e+00> : vector<8xf32>
    %84 = vector.multi_reduction <add>, %83, %cst_34 [1] : vector<8x8xf32> to vector<8xf32>
    %85 = vector.shape_cast %84 : vector<8xf32> to vector<8x1xf32>
    %86 = tpu.reciprocal %85 {approx = true} : vector<8x1xf32> -> vector<8x1xf32>
    %87 = vector.broadcast %86 : vector<8x1xf32> to vector<8x8xf32>
    %88 = arith.mulf %83, %87 : vector<8x8xf32>
    %89 = arith.truncf %88 : vector<8x8xf32> to vector<8x8xbf16>
    %cst_35 = arith.constant dense<0.000000e+00> : vector<8x8xf32>
    %90 = tpu.matmul %89, %77, %cst_35 {dimension_numbers = #tpu.dot_dimension_numbers<[1], [0], [0], [1], [0, 0, 1, 1], [], []>} : vector<8x8xbf16>, vector<8x8xbf16>, vector<8x8xf32> -> vector<8x8xf32>
    %91 = arith.truncf %90 : vector<8x8xf32> to vector<8x8xbf16>
    %92 = tpu.concatenate %40, %57, %74, %91 in 1 : vector<8x8xbf16>, vector<8x8xbf16>, vector<8x8xbf16>, vector<8x8xbf16> -> vector<8x32xbf16>
    %c0_36 = arith.constant 0 : index
    %c0_37 = arith.constant 0 : index
    %93 = vector.load %arg10[%c0_36, %c0_37] : memref<32x32xbf16, #tpu.memory_space<vmem>>, vector<32x32xbf16>
    %cst_38 = arith.constant dense<0.000000e+00> : vector<8x32xf32>
    %94 = tpu.matmul %92, %93, %cst_38 {dimension_numbers = #tpu.dot_dimension_numbers<[1], [0], [0], [1], [0, 0, 1, 1], [], []>} : vector<8x32xbf16>, vector<32x32xbf16>, vector<8x32xf32> -> vector<8x32xf32>
    %c0_39 = arith.constant 0 : index
    %c0_40 = arith.constant 0 : index
    %95 = vector.load %arg11[%c0_39, %c0_40] : memref<1x32xf32, #tpu.memory_space<vmem>>, vector<1x32xf32>
    %96 = vector.broadcast %95 : vector<1x32xf32> to vector<8x32xf32>
    %97 = arith.addf %94, %96 : vector<8x32xf32>
    %98 = arith.extf %1 : vector<8x32xbf16> to vector<8x32xf32>
    %99 = arith.addf %98, %97 : vector<8x32xf32>
    %c0_41 = arith.constant 0 : index
    %c0_42 = arith.constant 0 : index
    %100 = vector.load %arg12[%c0_41, %c0_42] : memref<1x32xf32, #tpu.memory_space<vmem>>, vector<1x32xf32>
    %c0_43 = arith.constant 0 : index
    %c0_44 = arith.constant 0 : index
    %101 = vector.load %arg13[%c0_43, %c0_44] : memref<1x32xf32, #tpu.memory_space<vmem>>, vector<1x32xf32>
    %cst_45 = arith.constant dense<0.000000e+00> : vector<8xf32>
    %102 = vector.multi_reduction <add>, %99, %cst_45 [1] : vector<8x32xf32> to vector<8xf32>
    %103 = vector.shape_cast %102 : vector<8xf32> to vector<8x1xf32>
    %cst_46 = arith.constant 3.200000e+01 : f32
    %104 = vector.broadcast %cst_46 : f32 to vector<8x1xf32>
    %105 = arith.divf %103, %104 : vector<8x1xf32>
    %106 = vector.broadcast %105 : vector<8x1xf32> to vector<8x32xf32>
    %107 = arith.subf %99, %106 : vector<8x32xf32>
    %108 = arith.mulf %107, %107 : vector<8x32xf32>
    %cst_47 = arith.constant dense<0.000000e+00> : vector<8xf32>
    %109 = vector.multi_reduction <add>, %108, %cst_47 [1] : vector<8x32xf32> to vector<8xf32>
    %110 = vector.shape_cast %109 : vector<8xf32> to vector<8x1xf32>
    %cst_48 = arith.constant 3.200000e+01 : f32
    %111 = vector.broadcast %cst_48 : f32 to vector<8x1xf32>
    %112 = arith.divf %110, %111 : vector<8x1xf32>
    %cst_49 = arith.constant 9.99999974E-6 : f32
    %113 = vector.broadcast %cst_49 : f32 to vector<8x1xf32>
    %114 = arith.addf %112, %113 : vector<8x1xf32>
    %115 = math.rsqrt %114 : vector<8x1xf32>
    %116 = vector.broadcast %115 : vector<8x1xf32> to vector<8x32xf32>
    %117 = arith.mulf %107, %116 : vector<8x32xf32>
    %118 = vector.broadcast %100 : vector<1x32xf32> to vector<8x32xf32>
    %119 = arith.mulf %117, %118 : vector<8x32xf32>
    %120 = vector.broadcast %101 : vector<1x32xf32> to vector<8x32xf32>
    %121 = arith.addf %119, %120 : vector<8x32xf32>
    %122 = arith.truncf %121 : vector<8x32xf32> to vector<8x32xbf16>
    %c0_50 = arith.constant 0 : index
    %c0_51 = arith.constant 0 : index
    %c0_52 = arith.constant 0 : index
    %123 = vector.load %arg14[%c0_50, %c0_51, %c0_52] : memref<1x8x32xbf16, #tpu.memory_space<vmem>>, vector<1x8x32xbf16>
    %124 = vector.shape_cast %123 : vector<1x8x32xbf16> to vector<8x32xbf16>
    %125 = vector.shape_cast %122 : vector<8x32xbf16> to vector<1x8x32xbf16>
    tpu.vector_store %arg14[%c0_50, %c0_51, %c0_52], %125 {strides = array<i32>} : memref<1x8x32xbf16, #tpu.memory_space<vmem>>, vector<1x8x32xbf16>,
    return
  }
  func.func @transform_0(%arg0: i32, %arg1: i32) -> (i32, i32, i32) {
    %c0_i32 = arith.constant 0 : i32
    %c0_i32_0 = arith.constant 0 : i32
    return %arg0, %arg1, %c0_i32 : i32, i32, i32
  }
  func.func @transform_1(%arg0: i32, %arg1: i32) -> (i32, i32, i32) {
    %c0_i32 = arith.constant 0 : i32
    %c0_i32_0 = arith.constant 0 : i32
    %c0_i32_1 = arith.constant 0 : i32
    return %arg0, %c0_i32, %c0_i32_0 : i32, i32, i32
  }
  func.func @transform_2(%arg0: i32, %arg1: i32) -> (i32, i32) {
    %c0_i32 = arith.constant 0 : i32
    %c0_i32_0 = arith.constant 0 : i32
    %c0_i32_1 = arith.constant 0 : i32
    return %c0_i32, %c0_i32_0 : i32, i32
  }
  func.func @transform_3(%arg0: i32, %arg1: i32) -> (i32, i32) {
    %c0_i32 = arith.constant 0 : i32
    %c0_i32_0 = arith.constant 0 : i32
    %c0_i32_1 = arith.constant 0 : i32
    return %c0_i32, %c0_i32_0 : i32, i32
  }
  func.func @transform_4(%arg0: i32, %arg1: i32) -> (i32, i32) {
    %c0_i32 = arith.constant 0 : i32
    %c0_i32_0 = arith.constant 0 : i32
    %c0_i32_1 = arith.constant 0 : i32
    return %c0_i32, %c0_i32_0 : i32, i32
  }
  func.func @transform_5(%arg0: i32, %arg1: i32) -> (i32, i32) {
    %c0_i32 = arith.constant 0 : i32
    %c0_i32_0 = arith.constant 0 : i32
    %c0_i32_1 = arith.constant 0 : i32
    return %c0_i32, %c0_i32_0 : i32, i32
  }
  func.func @transform_6(%arg0: i32, %arg1: i32) -> (i32, i32) {
    %c0_i32 = arith.constant 0 : i32
    %c0_i32_0 = arith.constant 0 : i32
    %c0_i32_1 = arith.constant 0 : i32
    return %c0_i32, %c0_i32_0 : i32, i32
  }
  func.func @transform_7(%arg0: i32, %arg1: i32) -> (i32, i32) {
    %c0_i32 = arith.constant 0 : i32
    %c0_i32_0 = arith.constant 0 : i32
    %c0_i32_1 = arith.constant 0 : i32
    return %c0_i32, %c0_i32_0 : i32, i32
  }
  func.func @transform_8(%arg0: i32, %arg1: i32) -> (i32, i32) {
    %c0_i32 = arith.constant 0 : i32
    %c0_i32_0 = arith.constant 0 : i32
    %c0_i32_1 = arith.constant 0 : i32
    return %c0_i32, %c0_i32_0 : i32, i32
  }
  func.func @transform_9(%arg0: i32, %arg1: i32) -> (i32, i32) {
    %c0_i32 = arith.constant 0 : i32
    %c0_i32_0 = arith.constant 0 : i32
    %c0_i32_1 = arith.constant 0 : i32
    return %c0_i32, %c0_i32_0 : i32, i32
  }
  func.func @transform_10(%arg0: i32, %arg1: i32) -> (i32, i32) {
    %c0_i32 = arith.constant 0 : i32
    %c0_i32_0 = arith.constant 0 : i32
    %c0_i32_1 = arith.constant 0 : i32
    return %c0_i32, %c0_i32_0 : i32, i32
  }
  func.func @transform_11(%arg0: i32, %arg1: i32) -> (i32, i32) {
    %c0_i32 = arith.constant 0 : i32
    %c0_i32_0 = arith.constant 0 : i32
    %c0_i32_1 = arith.constant 0 : i32
    return %c0_i32, %c0_i32_0 : i32, i32
  }
  func.func @transform_12(%arg0: i32, %arg1: i32) -> (i32, i32, i32) {
    %c0_i32 = arith.constant 0 : i32
    %c0_i32_0 = arith.constant 0 : i32
    return %arg0, %arg1, %c0_i32 : i32, i32, i32
  }
}

module attributes {stable_mosaic.version = 11 : i64} {
  func.func @_ffn_block_kernel(%arg0: i32, %arg1: memref<16x32xbf16, #tpu.memory_space<vmem>>, %arg2: memref<32x2048xbf16, #tpu.memory_space<vmem>>, %arg3: memref<1x2048xf32, #tpu.memory_space<vmem>>, %arg4: memref<2048x32xbf16, #tpu.memory_space<vmem>>, %arg5: memref<1x32xf32, #tpu.memory_space<vmem>>, %arg6: memref<1x32xf32, #tpu.memory_space<vmem>>, %arg7: memref<1x32xf32, #tpu.memory_space<vmem>>, %arg8: memref<16x32xbf16, #tpu.memory_space<vmem>>) attributes {dimension_semantics = [#tpu.dimension_semantics<parallel>], iteration_bounds = array<i64: 1>, scalar_prefetch = 0 : i64, scratch_operands = 0 : i64, tpu.core_type = #tpu.core_type<tc>, window_params = [{transform_indices = @transform_0, window_bounds = array<i64: 16, 32>}, {pipeline_mode = #tpu.pipeline_mode<synchronous>, transform_indices = @transform_1, window_bounds = array<i64: 32, 2048>}, {pipeline_mode = #tpu.pipeline_mode<synchronous>, transform_indices = @transform_2, window_bounds = array<i64: 1, 2048>}, {pipeline_mode = #tpu.pipeline_mode<synchronous>, transform_indices = @transform_3, window_bounds = array<i64: 2048, 32>}, {pipeline_mode = #tpu.pipeline_mode<synchronous>, transform_indices = @transform_4, window_bounds = array<i64: 1, 32>}, {pipeline_mode = #tpu.pipeline_mode<synchronous>, transform_indices = @transform_5, window_bounds = array<i64: 1, 32>}, {pipeline_mode = #tpu.pipeline_mode<synchronous>, transform_indices = @transform_6, window_bounds = array<i64: 1, 32>}, {transform_indices = @transform_7, window_bounds = array<i64: 16, 32>}]} {
    %c0 = arith.constant 0 : index
    %c0_0 = arith.constant 0 : index
    %0 = vector.load %arg1[%c0, %c0_0] : memref<16x32xbf16, #tpu.memory_space<vmem>>, vector<16x32xbf16>
    %c0_1 = arith.constant 0 : index
    %c0_2 = arith.constant 0 : index
    %1 = vector.load %arg2[%c0_1, %c0_2] : memref<32x2048xbf16, #tpu.memory_space<vmem>>, vector<32x2048xbf16>
    %cst = arith.constant dense<0.000000e+00> : vector<16x2048xf32>
    %2 = tpu.matmul %0, %1, %cst {dimension_numbers = #tpu.dot_dimension_numbers<[1], [0], [0], [1], [0, 0, 1, 1], [], []>} : vector<16x32xbf16>, vector<32x2048xbf16>, vector<16x2048xf32> -> vector<16x2048xf32>
    %c0_3 = arith.constant 0 : index
    %c0_4 = arith.constant 0 : index
    %3 = vector.load %arg3[%c0_3, %c0_4] : memref<1x2048xf32, #tpu.memory_space<vmem>>, vector<1x2048xf32>
    %4 = vector.broadcast %3 : vector<1x2048xf32> to vector<16x2048xf32>
    %5 = arith.addf %2, %4 : vector<16x2048xf32>
    %cst_5 = arith.constant 0.000000e+00 : f32
    %6 = vector.broadcast %cst_5 : f32 to vector<16x2048xf32>
    %7 = arith.maximumf %5, %6 : vector<16x2048xf32>
    %8 = arith.truncf %7 : vector<16x2048xf32> to vector<16x2048xbf16>
    %c0_6 = arith.constant 0 : index
    %c0_7 = arith.constant 0 : index
    %9 = vector.load %arg4[%c0_6, %c0_7] : memref<2048x32xbf16, #tpu.memory_space<vmem>>, vector<2048x32xbf16>
    %cst_8 = arith.constant dense<0.000000e+00> : vector<16x32xf32>
    %10 = tpu.matmul %8, %9, %cst_8 {dimension_numbers = #tpu.dot_dimension_numbers<[1], [0], [0], [1], [0, 0, 1, 1], [], []>} : vector<16x2048xbf16>, vector<2048x32xbf16>, vector<16x32xf32> -> vector<16x32xf32>
    %c0_9 = arith.constant 0 : index
    %c0_10 = arith.constant 0 : index
    %11 = vector.load %arg5[%c0_9, %c0_10] : memref<1x32xf32, #tpu.memory_space<vmem>>, vector<1x32xf32>
    %12 = vector.broadcast %11 : vector<1x32xf32> to vector<16x32xf32>
    %13 = arith.addf %10, %12 : vector<16x32xf32>
    %14 = arith.extf %0 : vector<16x32xbf16> to vector<16x32xf32>
    %15 = arith.addf %14, %13 : vector<16x32xf32>
    %c0_11 = arith.constant 0 : index
    %c0_12 = arith.constant 0 : index
    %16 = vector.load %arg6[%c0_11, %c0_12] : memref<1x32xf32, #tpu.memory_space<vmem>>, vector<1x32xf32>
    %c0_13 = arith.constant 0 : index
    %c0_14 = arith.constant 0 : index
    %17 = vector.load %arg7[%c0_13, %c0_14] : memref<1x32xf32, #tpu.memory_space<vmem>>, vector<1x32xf32>
    %cst_15 = arith.constant dense<0.000000e+00> : vector<16xf32>
    %18 = vector.multi_reduction <add>, %15, %cst_15 [1] : vector<16x32xf32> to vector<16xf32>
    %19 = vector.shape_cast %18 : vector<16xf32> to vector<16x1xf32>
    %cst_16 = arith.constant 3.200000e+01 : f32
    %20 = vector.broadcast %cst_16 : f32 to vector<16x1xf32>
    %21 = arith.divf %19, %20 : vector<16x1xf32>
    %22 = vector.broadcast %21 : vector<16x1xf32> to vector<16x32xf32>
    %23 = arith.subf %15, %22 : vector<16x32xf32>
    %24 = arith.mulf %23, %23 : vector<16x32xf32>
    %cst_17 = arith.constant dense<0.000000e+00> : vector<16xf32>
    %25 = vector.multi_reduction <add>, %24, %cst_17 [1] : vector<16x32xf32> to vector<16xf32>
    %26 = vector.shape_cast %25 : vector<16xf32> to vector<16x1xf32>
    %cst_18 = arith.constant 3.200000e+01 : f32
    %27 = vector.broadcast %cst_18 : f32 to vector<16x1xf32>
    %28 = arith.divf %26, %27 : vector<16x1xf32>
    %cst_19 = arith.constant 9.99999974E-6 : f32
    %29 = vector.broadcast %cst_19 : f32 to vector<16x1xf32>
    %30 = arith.addf %28, %29 : vector<16x1xf32>
    %31 = math.rsqrt %30 : vector<16x1xf32>
    %32 = vector.broadcast %31 : vector<16x1xf32> to vector<16x32xf32>
    %33 = arith.mulf %23, %32 : vector<16x32xf32>
    %34 = vector.broadcast %16 : vector<1x32xf32> to vector<16x32xf32>
    %35 = arith.mulf %33, %34 : vector<16x32xf32>
    %36 = vector.broadcast %17 : vector<1x32xf32> to vector<16x32xf32>
    %37 = arith.addf %35, %36 : vector<16x32xf32>
    %38 = arith.truncf %37 : vector<16x32xf32> to vector<16x32xbf16>
    %c0_20 = arith.constant 0 : index
    %c0_21 = arith.constant 0 : index
    %39 = vector.load %arg8[%c0_20, %c0_21] : memref<16x32xbf16, #tpu.memory_space<vmem>>, vector<16x32xbf16>
    tpu.vector_store %arg8[%c0_20, %c0_21], %38 {strides = array<i32>} : memref<16x32xbf16, #tpu.memory_space<vmem>>, vector<16x32xbf16>,
    return
  }
  func.func @transform_0(%arg0: i32) -> (i32, i32) {
    %c0_i32 = arith.constant 0 : i32
    %c0_i32_0 = arith.constant 0 : i32
    return %arg0, %c0_i32 : i32, i32
  }
  func.func @transform_1(%arg0: i32) -> (i32, i32) {
    %c0_i32 = arith.constant 0 : i32
    %c0_i32_0 = arith.constant 0 : i32
    %c0_i32_1 = arith.constant 0 : i32
    return %c0_i32, %c0_i32_0 : i32, i32
  }
  func.func @transform_2(%arg0: i32) -> (i32, i32) {
    %c0_i32 = arith.constant 0 : i32
    %c0_i32_0 = arith.constant 0 : i32
    %c0_i32_1 = arith.constant 0 : i32
    return %c0_i32, %c0_i32_0 : i32, i32
  }
  func.func @transform_3(%arg0: i32) -> (i32, i32) {
    %c0_i32 = arith.constant 0 : i32
    %c0_i32_0 = arith.constant 0 : i32
    %c0_i32_1 = arith.constant 0 : i32
    return %c0_i32, %c0_i32_0 : i32, i32
  }
  func.func @transform_4(%arg0: i32) -> (i32, i32) {
    %c0_i32 = arith.constant 0 : i32
    %c0_i32_0 = arith.constant 0 : i32
    %c0_i32_1 = arith.constant 0 : i32
    return %c0_i32, %c0_i32_0 : i32, i32
  }
  func.func @transform_5(%arg0: i32) -> (i32, i32) {
    %c0_i32 = arith.constant 0 : i32
    %c0_i32_0 = arith.constant 0 : i32
    %c0_i32_1 = arith.constant 0 : i32
    return %c0_i32, %c0_i32_0 : i32, i32
  }
  func.func @transform_6(%arg0: i32) -> (i32, i32) {
    %c0_i32 = arith.constant 0 : i32
    %c0_i32_0 = arith.constant 0 : i32
    %c0_i32_1 = arith.constant 0 : i32
    return %c0_i32, %c0_i32_0 : i32, i32
  }
  func.func @transform_7(%arg0: i32) -> (i32, i32) {
    %c0_i32 = arith.constant 0 : i32
    %c0_i32_0 = arith.constant 0 : i32
    return %arg0, %c0_i32 : i32, i32
  }
}

module attributes {stable_mosaic.version = 11 : i64} {
  func.func @_pool_fc_kernel(%arg0: i32, %arg1: memref<2x8x32xbf16, #tpu.memory_space<vmem>>, %arg2: memref<1x32xbf16, #tpu.memory_space<vmem>>, %arg3: memref<1x1xf32, #tpu.memory_space<vmem>>, %arg4: memref<2x1xf32, #tpu.memory_space<vmem>>) attributes {dimension_semantics = [#tpu.dimension_semantics<parallel>], iteration_bounds = array<i64: 1>, scalar_prefetch = 0 : i64, scratch_operands = 0 : i64, tpu.core_type = #tpu.core_type<tc>, window_params = [{transform_indices = @transform_0, window_bounds = array<i64: 2, 8, 32>}, {pipeline_mode = #tpu.pipeline_mode<synchronous>, transform_indices = @transform_1, window_bounds = array<i64: 1, 32>}, {pipeline_mode = #tpu.pipeline_mode<synchronous>, transform_indices = @transform_2, window_bounds = array<i64: 1, 1>}, {transform_indices = @transform_3, window_bounds = array<i64: 2, 1>}]} {
    %c0 = arith.constant 0 : index
    %c0_0 = arith.constant 0 : index
    %c0_1 = arith.constant 0 : index
    %0 = vector.load %arg1[%c0, %c0_0, %c0_1] : memref<2x8x32xbf16, #tpu.memory_space<vmem>>, vector<2x8x32xbf16>
    %1 = arith.extf %0 : vector<2x8x32xbf16> to vector<2x8x32xf32>
    %cst = arith.constant dense<0.000000e+00> : vector<2x32xf32>
    %2 = vector.multi_reduction <add>, %1, %cst [1] : vector<2x8x32xf32> to vector<2x32xf32>
    %cst_2 = arith.constant 8.000000e+00 : f32
    %3 = vector.broadcast %cst_2 : f32 to vector<2x32xf32>
    %4 = arith.divf %2, %3 : vector<2x32xf32>
    %c0_3 = arith.constant 0 : index
    %c0_4 = arith.constant 0 : index
    %5 = vector.load %arg2[%c0_3, %c0_4] : memref<1x32xbf16, #tpu.memory_space<vmem>>, vector<1x32xbf16>
    %6 = arith.extf %5 : vector<1x32xbf16> to vector<1x32xf32>
    %7 = vector.broadcast %6 : vector<1x32xf32> to vector<2x32xf32>
    %8 = arith.mulf %4, %7 : vector<2x32xf32>
    %cst_5 = arith.constant dense<0.000000e+00> : vector<2xf32>
    %9 = vector.multi_reduction <add>, %8, %cst_5 [1] : vector<2x32xf32> to vector<2xf32>
    %10 = vector.shape_cast %9 : vector<2xf32> to vector<2x1xf32>
    %c0_6 = arith.constant 0 : index
    %c0_7 = arith.constant 0 : index
    %11 = vector.load %arg3[%c0_6, %c0_7] : memref<1x1xf32, #tpu.memory_space<vmem>>, vector<1x1xf32>
    %12 = vector.broadcast %11 : vector<1x1xf32> to vector<2x1xf32>
    %13 = arith.addf %10, %12 : vector<2x1xf32>
    %c0_8 = arith.constant 0 : index
    %c0_9 = arith.constant 0 : index
    %14 = vector.load %arg4[%c0_8, %c0_9] : memref<2x1xf32, #tpu.memory_space<vmem>>, vector<2x1xf32>
    tpu.vector_store %arg4[%c0_8, %c0_9], %13 {strides = array<i32>} : memref<2x1xf32, #tpu.memory_space<vmem>>, vector<2x1xf32>,
    return
  }
  func.func @transform_0(%arg0: i32) -> (i32, i32, i32) {
    %c0_i32 = arith.constant 0 : i32
    %c0_i32_0 = arith.constant 0 : i32
    %c0_i32_1 = arith.constant 0 : i32
    return %arg0, %c0_i32, %c0_i32_0 : i32, i32, i32
  }
  func.func @transform_1(%arg0: i32) -> (i32, i32) {
    %c0_i32 = arith.constant 0 : i32
    %c0_i32_0 = arith.constant 0 : i32
    %c0_i32_1 = arith.constant 0 : i32
    return %c0_i32, %c0_i32_0 : i32, i32
  }
  func.func @transform_2(%arg0: i32) -> (i32, i32) {
    %c0_i32 = arith.constant 0 : i32
    %c0_i32_0 = arith.constant 0 : i32
    %c0_i32_1 = arith.constant 0 : i32
    return %c0_i32, %c0_i32_0 : i32, i32
  }
  func.func @transform_3(%arg0: i32) -> (i32, i32) {
    %c0_i32 = arith.constant 0 : i32
    %c0_i32_0 = arith.constant 0 : i32
    return %arg0, %c0_i32 : i32, i32
  }
}

</mosaic_0001>

<llo_original>
// kernel: tpu_custom_call.1
$region0: #{tpu_custom_call.1}
  #allocation0 [shape = 'u32[]', space=smem, size = 0x4, offset = 0x4, fixed_abs, tag = 'smem constant byte address 0x4 - core index']
  #allocation1 [shape = 'u32[144,128]{1,0:T(1,128)}', space=vmem, size = 0x12000, scoped, tag = 'internal scratch']
  %s0 = inlined_call_operand.hbm [shape: f32[32,128], index: 0, kind: input, shape index: {}]
  %s1 = inlined_call_operand.hbm [shape: f32[8,128], index: 1, kind: input, shape index: {}]
  %s2 = inlined_call_operand.hbm [shape: f32[32,128], index: 2, kind: output, shape index: {}]
  %s3 = sld [smem:[#allocation0]]
  $region49: #{tpu_custom_call.1} parent=0
    _
  %s5 = ssub.s32 1, %s3
  %s6 = scalar_select 0, %s5, %s3
  $region1: #{tpu_custom_call.1} parent=0
    #allocation2 [shape = 'u8[8192]{0}', space=vmem, size = 0x2000, scoped, tag = 'input window, operand 0']
    #allocation3 [shape = 's32[2]{0}', space=sflag, size = 0x8, scoped, tag = 'scoped memory for tpu_custom_call.1']
    #allocation4 [shape = 's32[2]{0}', space=sflag, size = 0x8, scoped, tag = 'scoped memory for tpu_custom_call.1']
    #allocation5 [shape = 'u8[4096]{0}', space=vmem, size = 0x1000, scoped, tag = 'input window, operand 1, single buffered']
    #allocation6 [shape = 's32[1]{0}', space=sflag, size = 0x4, scoped, tag = 'scoped memory for tpu_custom_call.1']
    #allocation7 [shape = 'u8[8192]{0}', space=vmem, size = 0x2000, scoped, tag = 'output window, operand 0']
    %7 = vsyncpa [#allocation3], 0
    %s8 = scalar_lea.sflag [#allocation3], 1
    %9 = vsyncpa %s8, 0
    %10 = vsyncpa [#allocation6], 0
    %11 = vsyncpa [#allocation4], 0
    %s12 = scalar_lea.sflag [#allocation4], 1
    %13 = vsyncpa %s12, 0
    loop: start=0, step=1, limit=6
    $region2: #{tpu_custom_call.1} parent=1 // loop_pre_header
      _
    $region3: #{tpu_custom_call.1} parent=1 // loop_header
      %s15 = sphi 0, %s19
      %p16 = scmp.ge.s32.totalorder %s15, 6
      %s25 = sphi 0, %s27
      %s28 = sphi 0, %s25
      %s29 = sphi 0, %s28
      %s45 = sphi 0, %s29
      %s49 = sphi 0, %s49
      %s51 = sphi 0, %s49
      %s52 = sphi 0, %s51
      %s66 = sphi 0, %s52
      %s72 = sphi 0, %s74
      %s75 = sphi 0, %s72
      %s76 = sphi 0, %s75
      %s92 = sphi 0, %s76
    $region4: #{tpu_custom_call.1} parent=1 // loop_header_branch
      %18 = sbr.rel (%p16) target = $region8
    $region5: #{tpu_custom_call.1} parent=1 // loop_body
      %s20 = ssub.s32 %s15, 1
      %s21 = ssub.s32 %s15, 2
      %s22 = sadd.s32 %s15, 1
      %s23 = ssub.s32 %s15, %s22
      %p24 = scmp.eq.s32.totalorder %s23, 0
      %s26 = sadd.s32 %s25, 1
      %s27 = scalar_select %p24, %s25, %s26
      %p30 = pneg %p24
      %p31 = scmp.eq.s32.totalorder %s15, 3
      %p32 = por %p30, %p31
      %p33 = scmp.ne.s32.totalorder %s25, %s28
      %p34 = scmp.eq.s32.totalorder %s15, 0
      %p35 = por %p33, %p34
      %p36 = scmp.ne.s32.totalorder %s25, %s28
      %p37 = scmp.eq.s32.totalorder %s20, 3
      %p38 = por %p36, %p37
      %p39 = scmp.ne.s32.totalorder %s28, %s29
      %p40 = scmp.eq.s32.totalorder %s20, 0
      %p41 = por %p39, %p40
      %p42 = scmp.ne.s32.totalorder %s28, %s29
      %p43 = scmp.eq.s32.totalorder %s21, 3
      %p44 = por %p42, %p43
      %p46 = scmp.ne.s32.totalorder %s29, %s45
      %p47 = scmp.eq.s32.totalorder %s21, 0
      %p48 = por %p46, %p47
      %s50 = sadd.s32 %s49, 1
      %p53 = scmp.eq.s32.totalorder %s15, 3
      %p54 = scmp.ne.s32.totalorder %s49, %s51
      %p55 = scmp.eq.s32.totalorder %s15, 0
      %p56 = por %p54, %p55
      %p57 = scmp.ne.s32.totalorder %s49, %s51
      %p58 = scmp.eq.s32.totalorder %s20, 3
      %p59 = por %p57, %p58
      %p60 = scmp.ne.s32.totalorder %s51, %s52
      %p61 = scmp.eq.s32.totalorder %s20, 0
      %p62 = por %p60, %p61
      %p63 = scmp.ne.s32.totalorder %s51, %s52
      %p64 = scmp.eq.s32.totalorder %s21, 3
      %p65 = por %p63, %p64
      %p67 = scmp.ne.s32.totalorder %s52, %s66
      %p68 = scmp.eq.s32.totalorder %s21, 0
      %p69 = por %p67, %p68
      %s70 = ssub.s32 %s15, %s22
      %p71 = scmp.eq.s32.totalorder %s70, 0
      %s73 = sadd.s32 %s72, 1
      %s74 = scalar_select %p71, %s72, %s73
      %p77 = pneg %p71
      %p78 = scmp.eq.s32.totalorder %s15, 3
      %p79 = por %p77, %p78
      %p80 = scmp.ne.s32.totalorder %s72, %s75
      %p81 = scmp.eq.s32.totalorder %s15, 0
      %p82 = por %p80, %p81
      %p83 = scmp.ne.s32.totalorder %s72, %s75
      %p84 = scmp.eq.s32.totalorder %s20, 3
      %p85 = por %p83, %p84
      %p86 = scmp.ne.s32.totalorder %s75, %s76
      %p87 = scmp.eq.s32.totalorder %s20, 0
      %p88 = por %p86, %p87
      %p89 = scmp.ne.s32.totalorder %s75, %s76
      %p90 = scmp.eq.s32.totalorder %s21, 3
      %p91 = por %p89, %p90
      %p93 = scmp.ne.s32.totalorder %s76, %s92
      %p94 = scmp.eq.s32.totalorder %s21, 0
      %p95 = por %p93, %p94
      %p96 = scmp.le.s32.totalorder 1, %s15
      %p97 = scmp.lt.s32.totalorder %s15, 5
      %p98 = pnand %p96, %p97
      %p99 = pneg %p98
      // Predicated region
      $region9: #{tpu_custom_call.1} parent=5 // pred_check
        _
      $region10: #{tpu_custom_call.1} parent=5 // pred_check_branch
        %101 = sbr.rel (%p98) target = $region12
      $region11: #{tpu_custom_call.1} parent=5 // pred_region
        %s102 = ssub.s32 %s15, 1
        // Predicated region
        $region13: #{tpu_custom_call.1} parent=11 // pred_check
          %p103 = pneg %p62
        $region14: #{tpu_custom_call.1} parent=11 // pred_check_branch
          %105 = sbr.rel (%p103) target = $region16
        $region15: #{tpu_custom_call.1} parent=11 // pred_region
          %s107 = ssub.s32 128, 128
          %108 = vsyncadd [#allocation6], %s107
          %s110 = sshll.u32 [#allocation5], 4
          %s111 = int_to_ptr.vmem [resolvable:$true] %s110
          %113 = dma.hbm_to_vmem [thread:$0]  %s1, 128, %s111, [#allocation6]
        $region16: #{tpu_custom_call.1} parent=11 // pred_fallthru
          _
      $region12: #{tpu_custom_call.1} parent=5 // pred_fallthru
        _
      %p114 = scmp.lt.s32.totalorder %s15, 4
      // Predicated region
      $region17: #{tpu_custom_call.1} parent=5 // pred_check
        %p115 = pneg %p114
      $region18: #{tpu_custom_call.1} parent=5 // pred_check_branch
        %117 = sbr.rel (%p115) target = $region20
      $region19: #{tpu_custom_call.1} parent=5 // pred_region
        // Predicated region
        $region21: #{tpu_custom_call.1} parent=19 // pred_check
          %p118 = pneg %p35
        $region22: #{tpu_custom_call.1} parent=19 // pred_check_branch
          %120 = sbr.rel (%p118) target = $region24
        $region23: #{tpu_custom_call.1} parent=19 // pred_region
          %s121 = sand.u32 %s25, 1
          %s122 = scalar_lea.sflag [#allocation3], %s121
          %s123 = sand.u32 %s25, 1
          %s124 = smul.addr %s123, 8
          %s125 = scalar_lea.vmem [#allocation2], %s124
          %s127 = ssub.s32 128, 128
          %128 = vsyncadd %s122, %s127
          %s129 = smul.addr %s15, 128
          %s130 = scalar_lea.hbm %s0, %s129
          %s132 = sshll.u32 %s125, 4
          %s133 = int_to_ptr.vmem [resolvable:$true] %s132
          %135 = dma.hbm_to_vmem [thread:$0]  %s130, 128, %s133, %s122
        $region24: #{tpu_custom_call.1} parent=19 // pred_fallthru
          _
      $region20: #{tpu_custom_call.1} parent=5 // pred_fallthru
        _
      %p136 = scmp.le.s32.totalorder 1, %s15
      %p137 = scmp.lt.s32.totalorder %s15, 5
      %p138 = pnand %p136, %p137
      %p139 = pneg %p138
      // Predicated region
      $region25: #{tpu_custom_call.1} parent=5 // pred_check
        _
      $region26: #{tpu_custom_call.1} parent=5 // pred_check_branch
        %141 = sbr.rel (%p138) target = $region28
      $region27: #{tpu_custom_call.1} parent=5 // pred_region
        %s142 = ssub.s32 %s15, 1
        %s143 = sand.u32 %s28, 1
        %s144 = scalar_lea.sflag [#allocation3], %s143
        %s145 = sand.u32 %s28, 1
        %s146 = smul.addr %s145, 8
        %s147 = scalar_lea.vmem [#allocation2], %s146
        // Predicated region
        $region29: #{tpu_custom_call.1} parent=27 // pred_check
          %p148 = pneg %p41
        $region30: #{tpu_custom_call.1} parent=27 // pred_check_branch
          %150 = sbr.rel (%p148) target = $region32
        $region31: #{tpu_custom_call.1} parent=27 // pred_region
          %151 = dma.done %s144, 128
        $region32: #{tpu_custom_call.1} parent=27 // pred_fallthru
          _
        // Predicated region
        $region33: #{tpu_custom_call.1} parent=27 // pred_check
          %p152 = pneg %p62
        $region34: #{tpu_custom_call.1} parent=27 // pred_check_branch
          %154 = sbr.rel (%p152) target = $region36
        $region35: #{tpu_custom_call.1} parent=27 // pred_region
          %155 = dma.done [#allocation6], 128
        $region36: #{tpu_custom_call.1} parent=27 // pred_fallthru
          _
        %s156 = sand.u32 %s28, 1
        %s157 = scalar_lea.sflag [#allocation3], %s156
        %s158 = sand.u32 %s28, 1
        %s159 = smul.addr %s158, 8
        %s160 = scalar_lea.vmem [#allocation2], %s159
        %p161 = pneg %p41
        %p162 = pneg %p38
        %p163 = pneg %p62
        %p164 = pneg %p59
        %p165 = pneg %p88
        %p166 = pneg %p85
        %s167 = sand.u32 %s75, 1
        %s168 = scalar_lea.sflag [#allocation4], %s167
        %s169 = sand.u32 %s75, 1
        %s170 = smul.addr %s169, 8
        %s171 = scalar_lea.vmem [#allocation7], %s170
        %v172 = vld [vmem:[%s147] sm:$0xff]
        %v173 = vld [vmem:[#allocation5] sm:$0xff]
        %v174 = vadd.f32 %v172, %v173
        %175 = vst [vmem:[%s171] sm:$0xff] %v174
        %s176 = sand.u32 %s75, 1
        %s177 = scalar_lea.sflag [#allocation4], %s176
        %s178 = sand.u32 %s75, 1
        %s179 = smul.addr %s178, 8
        %s180 = scalar_lea.vmem [#allocation7], %s179
        // Predicated region
        $region37: #{tpu_custom_call.1} parent=27 // pred_check
          %p181 = pneg %p85
        $region38: #{tpu_custom_call.1} parent=27 // pred_check_branch
          %183 = sbr.rel (%p181) target = $region40
        $region39: #{tpu_custom_call.1} parent=27 // pred_region
          %s185 = ssub.s32 128, 128
          %186 = vsyncadd %s177, %s185
          %s187 = smul.addr %s20, 128
          %s188 = scalar_lea.hbm %s2, %s187
          %s190 = sshll.u32 %s180, 4
          %s191 = int_to_ptr.vmem [resolvable:$true] %s190
          %193 = dma.vmem_to_hbm [thread:$0]  %s191, 128, %s188, %s177
        $region40: #{tpu_custom_call.1} parent=27 // pred_fallthru
          _
      $region28: #{tpu_custom_call.1} parent=5 // pred_fallthru
        _
      %p194 = scmp.le.s32.totalorder 2, %s15
      // Predicated region
      $region41: #{tpu_custom_call.1} parent=5 // pred_check
        %p195 = pneg %p194
      $region42: #{tpu_custom_call.1} parent=5 // pred_check_branch
        %197 = sbr.rel (%p195) target = $region44
      $region43: #{tpu_custom_call.1} parent=5 // pred_region
        %s198 = ssub.s32 %s15, 2
        // Predicated region
        $region45: #{tpu_custom_call.1} parent=43 // pred_check
          %p199 = pneg %p91
        $region46: #{tpu_custom_call.1} parent=43 // pred_check_branch
          %201 = sbr.rel (%p199) target = $region48
        $region47: #{tpu_custom_call.1} parent=43 // pred_region
          %s202 = sand.u32 %s76, 1
          %s203 = scalar_lea.sflag [#allocation4], %s202
          %s204 = sand.u32 %s76, 1
          %s205 = smul.addr %s204, 8
          %s206 = scalar_lea.vmem [#allocation7], %s205
          %207 = dma.done %s203, 128
        $region48: #{tpu_custom_call.1} parent=43 // pred_fallthru
          _
      $region44: #{tpu_custom_call.1} parent=5 // pred_fallthru
        _
    $region6: #{tpu_custom_call.1} parent=1 // loop_footer
      %s19 = sadd.s32 1, %s15
    $region7: #{tpu_custom_call.1} parent=1 // loop_footer_branch
      %14 = sbr.rel target = $region3
    $region8: #{tpu_custom_call.1} parent=1 // loop_exit
      _
    %208 = vsyncpa [#allocation3], 1
    %s209 = scalar_lea.sflag [#allocation3], 1
    %210 = vsyncpa %s209, 1
    %211 = vsyncpa [#allocation6], 1
    %212 = vsyncpa [#allocation4], 1
    %s213 = scalar_lea.sflag [#allocation4], 1
    %214 = vsyncpa %s213, 1

// kernel: transformer_forward.6
$region0: #{transformer_forward.6}
  #allocation0 [shape = 'u32[]', space=smem, size = 0x4, offset = 0x4, fixed_abs, tag = 'smem constant byte address 0x4 - core index']
  #allocation1 [shape = 'u32[144,128]{1,0:T(1,128)}', space=vmem, size = 0x12000, scoped, tag = 'internal scratch']
  %s0 = inlined_call_operand.vmem [shape: f32[16,4], index: 0, kind: input, shape index: {}]
  %s1 = inlined_call_operand.vmem [shape: bf16[4,32], index: 1, kind: input, shape index: {}]
  %s2 = inlined_call_operand.vmem [shape: f32[1,32], index: 2, kind: input, shape index: {}]
  %s3 = inlined_call_operand.vmem [shape: bf16[16,32], index: 3, kind: output, shape index: {}]
  %s4 = sld [smem:[#allocation0]]
  $region22: #{transformer_forward.6} parent=0
    _
  %s6 = ssub.s32 1, %s4
  %s7 = scalar_select 0, %s6, %s4
  // Predicated region
  $region2: #{transformer_forward.6} parent=0 // pred_check
    _
  $region3: #{transformer_forward.6} parent=0 // pred_check_branch
    %9 = sbr.rel (0) target = $region5
  $region4: #{transformer_forward.6} parent=0 // pred_region
    _
  $region5: #{transformer_forward.6} parent=0 // pred_fallthru
    _
  // Predicated region
  $region6: #{transformer_forward.6} parent=0 // pred_check
    _
  $region7: #{transformer_forward.6} parent=0 // pred_check_branch
    %11 = sbr.rel (0) target = $region9
  $region8: #{transformer_forward.6} parent=0 // pred_region
    _
  $region9: #{transformer_forward.6} parent=0 // pred_fallthru
    _
  // Predicated region
  $region10: #{transformer_forward.6} parent=0 // pred_check
    _
  $region11: #{transformer_forward.6} parent=0 // pred_check_branch
    %13 = sbr.rel (0) target = $region13
  $region12: #{transformer_forward.6} parent=0 // pred_region
    _
  $region13: #{transformer_forward.6} parent=0 // pred_fallthru
    _
  %v15 = vld [vmem:[%s0] sm:$0xff]
  %v16 = vld [vmem:[%s0 + $0x8] sm:$0xff]
  %v17 = vpack.c.bf16 %v16, %v15
  %v18 = vld [vmem:[%s1] sm:$0x3]
  %v19 = vld [vmem:[%s2] sm:$0x1]
  %v21 = vlaneseq
  %v22 = vshrl.u32 %v21, 7
  %v23 = vsub.s32 0, %v22
  %v24 = vrot.slane %v19, %v23
  %vm26 = vcmask 31744
  %v28 = vsel %vm26, %v17, 0
  %vm30 = vcmask 1041408
  %v32 = vsel %vm30, %v18, 0
  %34 = vmatprep.subr.bf16.mxu0 0
  %35 = vmatpush1.bf16.msra.mxu0 %v32
  %36 = vmatprep.subr.bf16.mxu0 0
  %37 = vmatpush1.bf16.msra.mxu0 0
  %38 = vmatprep.subr.bf16.mxu0 0
  %39 = vmatpush1.bf16.msra.mxu0 0
  %40 = vmatprep.subr.bf16.mxu0 0
  %41 = vmatpush1.bf16.msra.mxu0 0
  %42 = vmatprep.subr.bf16.mxu0 0
  %43 = vmatpush1.bf16.msra.mxu0 0
  %44 = vmatprep.subr.bf16.mxu0 0
  %45 = vmatpush1.bf16.msra.mxu0 0
  %46 = vmatprep.subr.bf16.mxu0 0
  %47 = vmatpush1.bf16.msra.mxu0 0
  %48 = vmatprep.subr.bf16.mxu0 0
  %49 = vmatpush1.bf16.msra.mxu0 0
  %50 = vmatprep.subr.bf16.mxu0 0
  %51 = vmatpush1.bf16.msra.mxu0 0
  %52 = vmatprep.subr.bf16.mxu0 0
  %53 = vmatpush1.bf16.msra.mxu0 0
  %54 = vmatprep.subr.bf16.mxu0 0
  %55 = vmatpush1.bf16.msra.mxu0 0
  %56 = vmatprep.subr.bf16.mxu0 0
  %57 = vmatpush1.bf16.msra.mxu0 0
  %58 = vmatprep.subr.bf16.mxu0 0
  %59 = vmatpush1.bf16.msra.mxu0 0
  %60 = vmatprep.subr.bf16.mxu0 0
  %61 = vmatpush1.bf16.msra.mxu0 0
  %62 = vmatprep.subr.bf16.mxu0 0
  %63 = vmatpush1.bf16.msra.mxu0 0
  %64 = vmatprep.subr.bf16.mxu0 0
  %65 = vmatpush1.bf16.msra.mxu0 0
  %66 = vmatprep.mubr.bf16.mxu0 0
  %67 = vmatmul.mubr.bf16.gmra.mrb[0].mxu0 %v28
  %v68 = vpop.f32.mrb[0].mxu0
  %v69 = vadd.f32 %v24, %v68
  %v70 = vpop.f32.mrb[0].mxu0
  %v71 = vpop.f32.mrb[0].mxu0
  %v72 = vadd.f32 %v24, %v71
  %v73 = vpop.f32.mrb[0].mxu0
  %74 = vdwg.mxu0
  %v75 = vpack.c.bf16 %v72, %v69
  %v77 = vunpack.c.l.b16 %v75
  %v78 = vunpack.c.h.b16 %v75
  %v79 = vpack.c.b16 %v77, %v77
  %v80 = vpack.c.b16 %v78, %v78
  %vm83 = vcmask 257024
  %84 = vst.msk [vmem:[%s3] sm:$0xf] %vm83, %v79
  %85 = vst.msk [vmem:[%s3 + $0x4] sm:$0xf] %vm83, %v80
  // Predicated region
  $region14: #{transformer_forward.6} parent=0 // pred_check
    _
  $region15: #{transformer_forward.6} parent=0 // pred_check_branch
    %87 = sbr.rel (0) target = $region17
  $region16: #{transformer_forward.6} parent=0 // pred_region
    _
  $region17: #{transformer_forward.6} parent=0 // pred_fallthru
    _
  // Predicated region
  $region18: #{transformer_forward.6} parent=0 // pred_check
    _
  $region19: #{transformer_forward.6} parent=0 // pred_check_branch
    %89 = sbr.rel (0) target = $region21
  $region20: #{transformer_forward.6} parent=0 // pred_region
    _
  $region21: #{transformer_forward.6} parent=0 // pred_fallthru
    _

// kernel: transformer_forward.11
$region0: #{transformer_forward.11}
  #allocation0 [shape = 'u32[]', space=smem, size = 0x4, offset = 0x4, fixed_abs, tag = 'smem constant byte address 0x4 - core index']
  #allocation1 [shape = 'u32[144,128]{1,0:T(1,128)}', space=vmem, size = 0x12000, scoped, tag = 'internal scratch']
  #allocation2 [shape = 'f32[1,1]{1,0:T(1,128)S(1)}', space=vmem, size = 0x200, scoped, tag = 'scoped memory for transformer_forward.11']
  %s0 = inlined_call_operand.vmem [shape: bf16[2,8,32], index: 0, kind: input, shape index: {}]
  %s1 = inlined_call_operand.vmem [shape: bf16[1,32], index: 1, kind: input, shape index: {}]
  %s2 = inlined_call_operand.<no memory space> [shape: f32[1,1], index: 2, kind: input, shape index: {}]
  %s3 = inlined_call_operand.vmem [shape: f32[2,1], index: 3, kind: output, shape index: {}]
  %s4 = sld [smem:[#allocation0]]
  $region22: #{transformer_forward.11} parent=0
    _
  %s6 = ssub.s32 1, %s4
  %s7 = scalar_select 0, %s6, %s4
  %v8 = vstv %s2
  %9 = vst [vmem:[#allocation2] sm:$0x1] %v8
  // Predicated region
  $region2: #{transformer_forward.11} parent=0 // pred_check
    _
  $region3: #{transformer_forward.11} parent=0 // pred_check_branch
    %11 = sbr.rel (0) target = $region5
  $region4: #{transformer_forward.11} parent=0 // pred_region
    _
  $region5: #{transformer_forward.11} parent=0 // pred_fallthru
    _
  // Predicated region
  $region6: #{transformer_forward.11} parent=0 // pred_check
    _
  $region7: #{transformer_forward.11} parent=0 // pred_check_branch
    %13 = sbr.rel (0) target = $region9
  $region8: #{transformer_forward.11} parent=0 // pred_region
    _
  $region9: #{transformer_forward.11} parent=0 // pred_fallthru
    _
  // Predicated region
  $region10: #{transformer_forward.11} parent=0 // pred_check
    _
  $region11: #{transformer_forward.11} parent=0 // pred_check_branch
    %15 = sbr.rel (0) target = $region13
  $region12: #{transformer_forward.11} parent=0 // pred_region
    _
  $region13: #{transformer_forward.11} parent=0 // pred_fallthru
    _
  %v16 = vld [vmem:[%s0] sm:$0xf]
  %v17 = vld [vmem:[%s0 + $0x4] sm:$0xf]
  %v18 = vunpack.c.l.bf16 %v16
  %v19 = vunpack.c.l.bf16 %v17
  %vm20 = vcmask 261120
  %v21 = vsel %vm20, %v18, 0.0
  %v22 = vrot.slane %v21, 4
  %v23 = vadd.f32 %v21, %v22
  %v24 = vrot.slane %v23, 2
  %v25 = vadd.f32 %v23, %v24
  %v26 = vrot.slane %v25, 1
  %v27 = vadd.f32 %v25, %v26
  %v28 = vsel %vm20, %v19, 0.0
  %v29 = vrot.slane %v28, 4
  %v30 = vadd.f32 %v28, %v29
  %v31 = vrot.slane %v30, 2
  %v32 = vadd.f32 %v30, %v31
  %v33 = vrot.slane %v32, 1
  %v34 = vadd.f32 %v32, %v33
  %v35 = vrcp.pop 8.0
  %v36 = vmul.f32 %v27, %v35
  %v37 = vmul.f32 %v34, %v35
  %v38 = vld [vmem:[%s1] sm:$0x1]
  %v39 = vunpack.c.l.bf16 %v38
  %v40 = vlaneseq
  %v41 = vshrl.u32 %v40, 7
  %v42 = vsub.s32 0, %v41
  %v43 = vrot.slane %v39, %v42
  %v44 = vmul.f32 %v36, %v43
  %v45 = vmul.f32 %v37, %v43
  %v48 = vrot.slane %v45, 7
  %vm49 = vcmask 1041409
  %v50 = vsel %vm49, %v48, %v44
  %vm52 = vcmask 254976
  %v53 = vsel %vm52, %v50, 0.0
  %54 = vadd.xlane.f32.xlu0 %v53
  %v55 = vpop.xlane.xlu0 %54
  %v56 = vld [vmem:[#allocation2] sm:$0x1]
  %v58 = vlaneseq
  %v59 = vshrl.u32 %v58, 7
  %v60 = vsub.s32 0, %v59
  %v61 = vrot.slane %v56, %v60
  %v63 = vadd.f32 %v55, %v61
  %vm64 = vcmask 1024
  %65 = vst.msk [vmem:[%s3] sm:$0x3] %vm64, %v63
  // Predicated region
  $region14: #{transformer_forward.11} parent=0 // pred_check
    _
  $region15: #{transformer_forward.11} parent=0 // pred_check_branch
    %67 = sbr.rel (0) target = $region17
  $region16: #{transformer_forward.11} parent=0 // pred_region
    _
  $region17: #{transformer_forward.11} parent=0 // pred_fallthru
    _
  // Predicated region
  $region18: #{transformer_forward.11} parent=0 // pred_check
    _
  $region19: #{transformer_forward.11} parent=0 // pred_check_branch
    %69 = sbr.rel (0) target = $region21
  $region20: #{transformer_forward.11} parent=0 // pred_region
    _
  $region21: #{transformer_forward.11} parent=0 // pred_fallthru
    _

// kernel: transformer_forward.7
$region0: #{transformer_forward.7}
  #allocation0 [shape = 'u32[]', space=smem, size = 0x4, offset = 0x4, fixed_abs, tag = 'smem constant byte address 0x4 - core index']
  #allocation1 [shape = 'u32[144,128]{1,0:T(1,128)}', space=vmem, size = 0x12000, scoped, tag = 'internal scratch']
  %s0 = inlined_call_operand.vmem [shape: bf16[2,8,32], index: 0, kind: input, shape index: {}, may-alias: {0,1}]
  %s1 = inlined_call_operand.vmem [shape: bf16[2,8,32], index: 1, kind: input, shape index: {}, may-alias: {0,1}]
  %s2 = inlined_call_operand.vmem [shape: bf16[32,32], index: 2, kind: input, shape index: {}]
  %s3 = inlined_call_operand.vmem [shape: bf16[32,32], index: 3, kind: input, shape index: {}]
  %s4 = inlined_call_operand.vmem [shape: bf16[32,32], index: 4, kind: input, shape index: {}]
  %s5 = inlined_call_operand.vmem [shape: f32[1,32], index: 5, kind: input, shape index: {}]
  %s6 = inlined_call_operand.vmem [shape: f32[1,32], index: 6, kind: input, shape index: {}]
  %s7 = inlined_call_operand.vmem [shape: f32[1,32], index: 7, kind: input, shape index: {}]
  %s8 = inlined_call_operand.vmem [shape: bf16[32,32], index: 8, kind: input, shape index: {}]
  %s9 = inlined_call_operand.vmem [shape: f32[1,32], index: 9, kind: input, shape index: {}]
  %s10 = inlined_call_operand.vmem [shape: f32[1,32], index: 10, kind: input, shape index: {}]
  %s11 = inlined_call_operand.vmem [shape: f32[1,32], index: 11, kind: input, shape index: {}]
  %s12 = inlined_call_operand.vmem [shape: bf16[2,8,32], index: 12, kind: output, shape index: {}]
  %s13 = sld [smem:[#allocation0]]
  $region81: #{transformer_forward.7} parent=0
    _
  %s15 = ssub.s32 1, %s13
  %s16 = scalar_select 0, %s15, %s13
  loop: start=0, step=1, limit=4
  $region2: #{transformer_forward.7} parent=0 // loop_pre_header
    _
  $region3: #{transformer_forward.7} parent=0 // loop_header
    %s18 = sphi 0, %s22
    %p19 = scmp.ge.s32.totalorder %s18, 4
    %s25 = sphi 0, %s37
    %s26 = sphi 0, %s33
    %s27 = sphi 0, %s25
    %s28 = sphi 0, %s26
    %s29 = sphi 0, %s27
    %s30 = sphi 0, %s28
    %s42 = sphi 0, %s44
    %s45 = sphi 0, %s42
    %s46 = sphi 0, %s45
    %s62 = sphi 0, %s46
    %s68 = sphi 0, %s70
    %s71 = sphi 0, %s68
    %s72 = sphi 0, %s71
    %s88 = sphi 0, %s72
    %s92 = sphi 0, %s92
    %s94 = sphi 0, %s92
    %s95 = sphi 0, %s94
    %s109 = sphi 0, %s95
    %s113 = sphi 0, %s113
    %s115 = sphi 0, %s113
    %s116 = sphi 0, %s115
    %s130 = sphi 0, %s116
    %s134 = sphi 0, %s134
    %s136 = sphi 0, %s134
    %s137 = sphi 0, %s136
    %s151 = sphi 0, %s137
    %s155 = sphi 0, %s155
    %s157 = sphi 0, %s155
    %s158 = sphi 0, %s157
    %s172 = sphi 0, %s158
    %s176 = sphi 0, %s176
    %s178 = sphi 0, %s176
    %s179 = sphi 0, %s178
    %s193 = sphi 0, %s179
    %s197 = sphi 0, %s197
    %s199 = sphi 0, %s197
    %s200 = sphi 0, %s199
    %s214 = sphi 0, %s200
    %s218 = sphi 0, %s218
    %s220 = sphi 0, %s218
    %s221 = sphi 0, %s220
    %s235 = sphi 0, %s221
    %s239 = sphi 0, %s239
    %s241 = sphi 0, %s239
    %s242 = sphi 0, %s241
    %s256 = sphi 0, %s242
    %s260 = sphi 0, %s260
    %s262 = sphi 0, %s260
    %s263 = sphi 0, %s262
    %s277 = sphi 0, %s263
    %s281 = sphi 0, %s281
    %s283 = sphi 0, %s281
    %s284 = sphi 0, %s283
    %s298 = sphi 0, %s284
    %s306 = sphi 0, %s308
    %s309 = sphi 0, %s306
    %s310 = sphi 0, %s309
    %s326 = sphi 0, %s310
  $region4: #{transformer_forward.7} parent=0 // loop_header_branch
    %21 = sbr.rel (%p19) target = $region8
  $region5: #{transformer_forward.7} parent=0 // loop_body
    %s23 = ssub.s32 %s18, 1
    %s24 = ssub.s32 %s18, 2
    %s31 = sadd.s32 1, %s26
    %p32 = scmp.ge.s32.totalorder %s31, 1
    %s33 = scalar_select %p32, 0, %s31
    %s34 = sadd.s32 1, %s25
    %s35 = scalar_select %p32, %s34, %s25
    %p36 = scmp.ge.s32.totalorder %s35, 2
    %s37 = scalar_select %p36, 0, %s35
    %s38 = ssub.s32 %s25, %s37
    %s39 = ssub.s32 %s26, %s33
    %s40 = sor.u32 %s38, %s39
    %p41 = scmp.eq.s32.totalorder %s40, 0
    %s43 = sadd.s32 %s42, 1
    %s44 = scalar_select %p41, %s42, %s43
    %p47 = pneg %p41
    %p48 = scmp.eq.s32.totalorder %s18, 1
    %p49 = por %p47, %p48
    %p50 = scmp.ne.s32.totalorder %s42, %s45
    %p51 = scmp.eq.s32.totalorder %s18, 0
    %p52 = por %p50, %p51
    %p53 = scmp.ne.s32.totalorder %s42, %s45
    %p54 = scmp.eq.s32.totalorder %s23, 1
    %p55 = por %p53, %p54
    %p56 = scmp.ne.s32.totalorder %s45, %s46
    %p57 = scmp.eq.s32.totalorder %s23, 0
    %p58 = por %p56, %p57
    %p59 = scmp.ne.s32.totalorder %s45, %s46
    %p60 = scmp.eq.s32.totalorder %s24, 1
    %p61 = por %p59, %p60
    %p63 = scmp.ne.s32.totalorder %s46, %s62
    %p64 = scmp.eq.s32.totalorder %s24, 0
    %p65 = por %p63, %p64
    %s66 = ssub.s32 %s25, %s37
    %p67 = scmp.eq.s32.totalorder %s66, 0
    %s69 = sadd.s32 %s68, 1
    %s70 = scalar_select %p67, %s68, %s69
    %p73 = pneg %p67
    %p74 = scmp.eq.s32.totalorder %s18, 1
    %p75 = por %p73, %p74
    %p76 = scmp.ne.s32.totalorder %s68, %s71
    %p77 = scmp.eq.s32.totalorder %s18, 0
    %p78 = por %p76, %p77
    %p79 = scmp.ne.s32.totalorder %s68, %s71
    %p80 = scmp.eq.s32.totalorder %s23, 1
    %p81 = por %p79, %p80
    %p82 = scmp.ne.s32.totalorder %s71, %s72
    %p83 = scmp.eq.s32.totalorder %s23, 0
    %p84 = por %p82, %p83
    %p85 = scmp.ne.s32.totalorder %s71, %s72
    %p86 = scmp.eq.s32.totalorder %s24, 1
    %p87 = por %p85, %p86
    %p89 = scmp.ne.s32.totalorder %s72, %s88
    %p90 = scmp.eq.s32.totalorder %s24, 0
    %p91 = por %p89, %p90
    %s93 = sadd.s32 %s92, 1
    %p96 = scmp.eq.s32.totalorder %s18, 1
    %p97 = scmp.ne.s32.totalorder %s92, %s94
    %p98 = scmp.eq.s32.totalorder %s18, 0
    %p99 = por %p97, %p98
    %p100 = scmp.ne.s32.totalorder %s92, %s94
    %p101 = scmp.eq.s32.totalorder %s23, 1
    %p102 = por %p100, %p101
    %p103 = scmp.ne.s32.totalorder %s94, %s95
    %p104 = scmp.eq.s32.totalorder %s23, 0
    %p105 = por %p103, %p104
    %p106 = scmp.ne.s32.totalorder %s94, %s95
    %p107 = scmp.eq.s32.totalorder %s24, 1
    %p108 = por %p106, %p107
    %p110 = scmp.ne.s32.totalorder %s95, %s109
    %p111 = scmp.eq.s32.totalorder %s24, 0
    %p112 = por %p110, %p111
    %s114 = sadd.s32 %s113, 1
    %p117 = scmp.eq.s32.totalorder %s18, 1
    %p118 = scmp.ne.s32.totalorder %s113, %s115
    %p119 = scmp.eq.s32.totalorder %s18, 0
    %p120 = por %p118, %p119
    %p121 = scmp.ne.s32.totalorder %s113, %s115
    %p122 = scmp.eq.s32.totalorder %s23, 1
    %p123 = por %p121, %p122
    %p124 = scmp.ne.s32.totalorder %s115, %s116
    %p125 = scmp.eq.s32.totalorder %s23, 0
    %p126 = por %p124, %p125
    %p127 = scmp.ne.s32.totalorder %s115, %s116
    %p128 = scmp.eq.s32.totalorder %s24, 1
    %p129 = por %p127, %p128
    %p131 = scmp.ne.s32.totalorder %s116, %s130
    %p132 = scmp.eq.s32.totalorder %s24, 0
    %p133 = por %p131, %p132
    %s135 = sadd.s32 %s134, 1
    %p138 = scmp.eq.s32.totalorder %s18, 1
    %p139 = scmp.ne.s32.totalorder %s134, %s136
    %p140 = scmp.eq.s32.totalorder %s18, 0
    %p141 = por %p139, %p140
    %p142 = scmp.ne.s32.totalorder %s134, %s136
    %p143 = scmp.eq.s32.totalorder %s23, 1
    %p144 = por %p142, %p143
    %p145 = scmp.ne.s32.totalorder %s136, %s137
    %p146 = scmp.eq.s32.totalorder %s23, 0
    %p147 = por %p145, %p146
    %p148 = scmp.ne.s32.totalorder %s136, %s137
    %p149 = scmp.eq.s32.totalorder %s24, 1
    %p150 = por %p148, %p149
    %p152 = scmp.ne.s32.totalorder %s137, %s151
    %p153 = scmp.eq.s32.totalorder %s24, 0
    %p154 = por %p152, %p153
    %s156 = sadd.s32 %s155, 1
    %p159 = scmp.eq.s32.totalorder %s18, 1
    %p160 = scmp.ne.s32.totalorder %s155, %s157
    %p161 = scmp.eq.s32.totalorder %s18, 0
    %p162 = por %p160, %p161
    %p163 = scmp.ne.s32.totalorder %s155, %s157
    %p164 = scmp.eq.s32.totalorder %s23, 1
    %p165 = por %p163, %p164
    %p166 = scmp.ne.s32.totalorder %s157, %s158
    %p167 = scmp.eq.s32.totalorder %s23, 0
    %p168 = por %p166, %p167
    %p169 = scmp.ne.s32.totalorder %s157, %s158
    %p170 = scmp.eq.s32.totalorder %s24, 1
    %p171 = por %p169, %p170
    %p173 = scmp.ne.s32.totalorder %s158, %s172
    %p174 = scmp.eq.s32.totalorder %s24, 0
    %p175 = por %p173, %p174
    %s177 = sadd.s32 %s176, 1
    %p180 = scmp.eq.s32.totalorder %s18, 1
    %p181 = scmp.ne.s32.totalorder %s176, %s178
    %p182 = scmp.eq.s32.totalorder %s18, 0
    %p183 = por %p181, %p182
    %p184 = scmp.ne.s32.totalorder %s176, %s178
    %p185 = scmp.eq.s32.totalorder %s23, 1
    %p186 = por %p184, %p185
    %p187 = scmp.ne.s32.totalorder %s178, %s179
    %p188 = scmp.eq.s32.totalorder %s23, 0
    %p189 = por %p187, %p188
    %p190 = scmp.ne.s32.totalorder %s178, %s179
    %p191 = scmp.eq.s32.totalorder %s24, 1
    %p192 = por %p190, %p191
    %p194 = scmp.ne.s32.totalorder %s179, %s193
    %p195 = scmp.eq.s32.totalorder %s24, 0
    %p196 = por %p194, %p195
    %s198 = sadd.s32 %s197, 1
    %p201 = scmp.eq.s32.totalorder %s18, 1
    %p202 = scmp.ne.s32.totalorder %s197, %s199
    %p203 = scmp.eq.s32.totalorder %s18, 0
    %p204 = por %p202, %p203
    %p205 = scmp.ne.s32.totalorder %s197, %s199
    %p206 = scmp.eq.s32.totalorder %s23, 1
    %p207 = por %p205, %p206
    %p208 = scmp.ne.s32.totalorder %s199, %s200
    %p209 = scmp.eq.s32.totalorder %s23, 0
    %p210 = por %p208, %p209
    %p211 = scmp.ne.s32.totalorder %s199, %s200
    %p212 = scmp.eq.s32.totalorder %s24, 1
    %p213 = por %p211, %p212
    %p215 = scmp.ne.s32.totalorder %s200, %s214
    %p216 = scmp.eq.s32.totalorder %s24, 0
    %p217 = por %p215, %p216
    %s219 = sadd.s32 %s218, 1
    %p222 = scmp.eq.s32.totalorder %s18, 1
    %p223 = scmp.ne.s32.totalorder %s218, %s220
    %p224 = scmp.eq.s32.totalorder %s18, 0
    %p225 = por %p223, %p224
    %p226 = scmp.ne.s32.totalorder %s218, %s220
    %p227 = scmp.eq.s32.totalorder %s23, 1
    %p228 = por %p226, %p227
    %p229 = scmp.ne.s32.totalorder %s220, %s221
    %p230 = scmp.eq.s32.totalorder %s23, 0
    %p231 = por %p229, %p230
    %p232 = scmp.ne.s32.totalorder %s220, %s221
    %p233 = scmp.eq.s32.totalorder %s24, 1
    %p234 = por %p232, %p233
    %p236 = scmp.ne.s32.totalorder %s221, %s235
    %p237 = scmp.eq.s32.totalorder %s24, 0
    %p238 = por %p236, %p237
    %s240 = sadd.s32 %s239, 1
    %p243 = scmp.eq.s32.totalorder %s18, 1
    %p244 = scmp.ne.s32.totalorder %s239, %s241
    %p245 = scmp.eq.s32.totalorder %s18, 0
    %p246 = por %p244, %p245
    %p247 = scmp.ne.s32.totalorder %s239, %s241
    %p248 = scmp.eq.s32.totalorder %s23, 1
    %p249 = por %p247, %p248
    %p250 = scmp.ne.s32.totalorder %s241, %s242
    %p251 = scmp.eq.s32.totalorder %s23, 0
    %p252 = por %p250, %p251
    %p253 = scmp.ne.s32.totalorder %s241, %s242
    %p254 = scmp.eq.s32.totalorder %s24, 1
    %p255 = por %p253, %p254
    %p257 = scmp.ne.s32.totalorder %s242, %s256
    %p258 = scmp.eq.s32.totalorder %s24, 0
    %p259 = por %p257, %p258
    %s261 = sadd.s32 %s260, 1
    %p264 = scmp.eq.s32.totalorder %s18, 1
    %p265 = scmp.ne.s32.totalorder %s260, %s262
    %p266 = scmp.eq.s32.totalorder %s18, 0
    %p267 = por %p265, %p266
    %p268 = scmp.ne.s32.totalorder %s260, %s262
    %p269 = scmp.eq.s32.totalorder %s23, 1
    %p270 = por %p268, %p269
    %p271 = scmp.ne.s32.totalorder %s262, %s263
    %p272 = scmp.eq.s32.totalorder %s23, 0
    %p273 = por %p271, %p272
    %p274 = scmp.ne.s32.totalorder %s262, %s263
    %p275 = scmp.eq.s32.totalorder %s24, 1
    %p276 = por %p274, %p275
    %p278 = scmp.ne.s32.totalorder %s263, %s277
    %p279 = scmp.eq.s32.totalorder %s24, 0
    %p280 = por %p278, %p279
    %s282 = sadd.s32 %s281, 1
    %p285 = scmp.eq.s32.totalorder %s18, 1
    %p286 = scmp.ne.s32.totalorder %s281, %s283
    %p287 = scmp.eq.s32.totalorder %s18, 0
    %p288 = por %p286, %p287
    %p289 = scmp.ne.s32.totalorder %s281, %s283
    %p290 = scmp.eq.s32.totalorder %s23, 1
    %p291 = por %p289, %p290
    %p292 = scmp.ne.s32.totalorder %s283, %s284
    %p293 = scmp.eq.s32.totalorder %s23, 0
    %p294 = por %p292, %p293
    %p295 = scmp.ne.s32.totalorder %s283, %s284
    %p296 = scmp.eq.s32.totalorder %s24, 1
    %p297 = por %p295, %p296
    %p299 = scmp.ne.s32.totalorder %s284, %s298
    %p300 = scmp.eq.s32.totalorder %s24, 0
    %p301 = por %p299, %p300
    %s302 = ssub.s32 %s25, %s37
    %s303 = ssub.s32 %s26, %s33
    %s304 = sor.u32 %s302, %s303
    %p305 = scmp.eq.s32.totalorder %s304, 0
    %s307 = sadd.s32 %s306, 1
    %s308 = scalar_select %p305, %s306, %s307
    %p311 = pneg %p305
    %p312 = scmp.eq.s32.totalorder %s18, 1
    %p313 = por %p311, %p312
    %p314 = scmp.ne.s32.totalorder %s306, %s309
    %p315 = scmp.eq.s32.totalorder %s18, 0
    %p316 = por %p314, %p315
    %p317 = scmp.ne.s32.totalorder %s306, %s309
    %p318 = scmp.eq.s32.totalorder %s23, 1
    %p319 = por %p317, %p318
    %p320 = scmp.ne.s32.totalorder %s309, %s310
    %p321 = scmp.eq.s32.totalorder %s23, 0
    %p322 = por %p320, %p321
    %p323 = scmp.ne.s32.totalorder %s309, %s310
    %p324 = scmp.eq.s32.totalorder %s24, 1
    %p325 = por %p323, %p324
    %p327 = scmp.ne.s32.totalorder %s310, %s326
    %p328 = scmp.eq.s32.totalorder %s24, 0
    %p329 = por %p327, %p328
    %p330 = scmp.le.s32.totalorder 1, %s18
    %p331 = scmp.lt.s32.totalorder %s18, 3
    %p332 = pnand %p330, %p331
    %p333 = pneg %p332
    // Predicated region
    $region9: #{transformer_forward.7} parent=5 // pred_check
      _
    $region10: #{transformer_forward.7} parent=5 // pred_check_branch
      %335 = sbr.rel (%p332) target = $region12
    $region11: #{transformer_forward.7} parent=5 // pred_region
      %s336 = ssub.s32 %s18, 1
      // Predicated region
      $region13: #{transformer_forward.7} parent=11 // pred_check
        %p337 = pneg %p105
      $region14: #{transformer_forward.7} parent=11 // pred_check_branch
        %339 = sbr.rel (%p337) target = $region16
      $region15: #{transformer_forward.7} parent=11 // pred_region
        _
      $region16: #{transformer_forward.7} parent=11 // pred_fallthru
        _
      // Predicated region
      $region17: #{transformer_forward.7} parent=11 // pred_check
        %p340 = pneg %p126
      $region18: #{transformer_forward.7} parent=11 // pred_check_branch
        %342 = sbr.rel (%p340) target = $region20
      $region19: #{transformer_forward.7} parent=11 // pred_region
        _
      $region20: #{transformer_forward.7} parent=11 // pred_fallthru
        _
      // Predicated region
      $region21: #{transformer_forward.7} parent=11 // pred_check
        %p343 = pneg %p147
      $region22: #{transformer_forward.7} parent=11 // pred_check_branch
        %345 = sbr.rel (%p343) target = $region24
      $region23: #{transformer_forward.7} parent=11 // pred_region
        _
      $region24: #{transformer_forward.7} parent=11 // pred_fallthru
        _
      // Predicated region
      $region25: #{transformer_forward.7} parent=11 // pred_check
        %p346 = pneg %p168
      $region26: #{transformer_forward.7} parent=11 // pred_check_branch
        %348 = sbr.rel (%p346) target = $region28
      $region27: #{transformer_forward.7} parent=11 // pred_region
        _
      $region28: #{transformer_forward.7} parent=11 // pred_fallthru
        _
      // Predicated region
      $region29: #{transformer_forward.7} parent=11 // pred_check
        %p349 = pneg %p189
      $region30: #{transformer_forward.7} parent=11 // pred_check_branch
        %351 = sbr.rel (%p349) target = $region32
      $region31: #{transformer_forward.7} parent=11 // pred_region
        _
      $region32: #{transformer_forward.7} parent=11 // pred_fallthru
        _
      // Predicated region
      $region33: #{transformer_forward.7} parent=11 // pred_check
        %p352 = pneg %p210
      $region34: #{transformer_forward.7} parent=11 // pred_check_branch
        %354 = sbr.rel (%p352) target = $region36
      $region35: #{transformer_forward.7} parent=11 // pred_region
        _
      $region36: #{transformer_forward.7} parent=11 // pred_fallthru
        _
      // Predicated region
      $region37: #{transformer_forward.7} parent=11 // pred_check
        %p355 = pneg %p231
      $region38: #{transformer_forward.7} parent=11 // pred_check_branch
        %357 = sbr.rel (%p355) target = $region40
      $region39: #{transformer_forward.7} parent=11 // pred_region
        _
      $region40: #{transformer_forward.7} parent=11 // pred_fallthru
        _
      // Predicated region
      $region41: #{transformer_forward.7} parent=11 // pred_check
        %p358 = pneg %p252
      $region42: #{transformer_forward.7} parent=11 // pred_check_branch
        %360 = sbr.rel (%p358) target = $region44
      $region43: #{transformer_forward.7} parent=11 // pred_region
        _
      $region44: #{transformer_forward.7} parent=11 // pred_fallthru
        _
      // Predicated region
      $region45: #{transformer_forward.7} parent=11 // pred_check
        %p361 = pneg %p273
      $region46: #{transformer_forward.7} parent=11 // pred_check_branch
        %363 = sbr.rel (%p361) target = $region48
      $region47: #{transformer_forward.7} parent=11 // pred_region
        _
      $region48: #{transformer_forward.7} parent=11 // pred_fallthru
        _
      // Predicated region
      $region49: #{transformer_forward.7} parent=11 // pred_check
        %p364 = pneg %p294
      $region50: #{transformer_forward.7} parent=11 // pred_check_branch
        %366 = sbr.rel (%p364) target = $region52
      $region51: #{transformer_forward.7} parent=11 // pred_region
        _
      $region52: #{transformer_forward.7} parent=11 // pred_fallthru
        _
    $region12: #{transformer_forward.7} parent=5 // pred_fallthru
      _
    %p367 = scmp.lt.s32.totalorder %s18, 2
    // Predicated region
    $region53: #{transformer_forward.7} parent=5 // pred_check
      %p368 = pneg %p367
    $region54: #{transformer_forward.7} parent=5 // pred_check_branch
      %370 = sbr.rel (%p368) target = $region56
    $region55: #{transformer_forward.7} parent=5 // pred_region
      // Predicated region
      $region57: #{transformer_forward.7} parent=55 // pred_check
        %p371 = pneg %p52
      $region58: #{transformer_forward.7} parent=55 // pred_check_branch
        %373 = sbr.rel (%p371) target = $region60
      $region59: #{transformer_forward.7} parent=55 // pred_region
        %p374 = scmp.lt.s32.totalorder %s25, 1
        %s375 = scalar_select %p374, %s25, 1
        %p376 = scmp.lt.s32.totalorder %s26, 0
        %s377 = scalar_select %p376, %s26, 0
        %s378 = sadd.s32 %s377, %s375
        %s379 = smul.addr %s378, 4
        %s380 = scalar_lea.vmem %s0, %s379
      $region60: #{transformer_forward.7} parent=55 // pred_fallthru
        _
      // Predicated region
      $region61: #{transformer_forward.7} parent=55 // pred_check
        %p381 = pneg %p78
      $region62: #{transformer_forward.7} parent=55 // pred_check_branch
        %383 = sbr.rel (%p381) target = $region64
      $region63: #{transformer_forward.7} parent=55 // pred_region
        %p384 = scmp.lt.s32.totalorder %s25, 1
        %s385 = scalar_select %p384, %s25, 1
        %s386 = smul.addr %s385, 4
        %s387 = scalar_lea.vmem %s1, %s386
      $region64: #{transformer_forward.7} parent=55 // pred_fallthru
        _
    $region56: #{transformer_forward.7} parent=5 // pred_fallthru
      _
    %p388 = scmp.le.s32.totalorder 1, %s18
    %p389 = scmp.lt.s32.totalorder %s18, 3
    %p390 = pnand %p388, %p389
    %p391 = pneg %p390
    // Predicated region
    $region65: #{transformer_forward.7} parent=5 // pred_check
      _
    $region66: #{transformer_forward.7} parent=5 // pred_check_branch
      %393 = sbr.rel (%p390) target = $region68
    $region67: #{transformer_forward.7} parent=5 // pred_region
      %s394 = ssub.s32 %s18, 1
      %p395 = scmp.lt.s32.totalorder %s27, 1
      %s396 = scalar_select %p395, %s27, 1
      %p397 = scmp.lt.s32.totalorder %s28, 0
      %s398 = scalar_select %p397, %s28, 0
      %s399 = sadd.s32 %s398, %s396
      %s400 = smul.addr %s399, 4
      %s401 = scalar_lea.vmem %s0, %s400
      %p402 = pneg %p58
      %p403 = pneg %p55
      %p404 = scmp.lt.s32.totalorder %s27, 1
      %s405 = scalar_select %p404, %s27, 1
      %s406 = smul.addr %s405, 4
      %s407 = scalar_lea.vmem %s1, %s406
      %p408 = pneg %p84
      %p409 = pneg %p81
      %p410 = pneg %p105
      %p411 = pneg %p102
      %p412 = pneg %p126
      %p413 = pneg %p123
      %p414 = pneg %p147
      %p415 = pneg %p144
      %p416 = pneg %p168
      %p417 = pneg %p165
      %p418 = pneg %p189
      %p419 = pneg %p186
      %p420 = pneg %p210
      %p421 = pneg %p207
      %p422 = pneg %p231
      %p423 = pneg %p228
      %p424 = pneg %p252
      %p425 = pneg %p249
      %p426 = pneg %p273
      %p427 = pneg %p270
      %p428 = pneg %p294
      %p429 = pneg %p291
      %p430 = pneg %p322
      %p431 = pneg %p319
      %p432 = scmp.lt.s32.totalorder %s27, 1
      %s433 = scalar_select %p432, %s27, 1
      %p434 = scmp.lt.s32.totalorder %s28, 0
      %s435 = scalar_select %p434, %s28, 0
      %s436 = sadd.s32 %s435, %s433
      %s437 = smul.addr %s436, 4
      %s438 = scalar_lea.vmem %s12, %s437
      %p439 = scmp.lt.s32.totalorder %s27, 1
      %s440 = scalar_select %p439, %s27, 1
      %p441 = scmp.lt.s32.totalorder %s28, 0
      %s442 = scalar_select %p441, %s28, 0
      %s443 = sadd.s32 %s442, %s440
      %s444 = smul.addr %s443, 4
      %s445 = scalar_lea.vmem %s0, %s444
      %p446 = scmp.lt.s32.totalorder %s27, 1
      %s447 = scalar_select %p446, %s27, 1
      %s448 = smul.addr %s447, 4
      %s449 = scalar_lea.vmem %s1, %s448
      %p450 = scmp.lt.s32.totalorder %s27, 1
      %s451 = scalar_select %p450, %s27, 1
      %p452 = scmp.lt.s32.totalorder %s28, 0
      %s453 = scalar_select %p452, %s28, 0
      %s454 = sadd.s32 %s453, %s451
      %s455 = smul.addr %s454, 4
      %s456 = scalar_lea.vmem %s12, %s455
      %v458 = vld [vmem:[%s445] sm:$0xf]
      %v459 = vld [vmem:[%s449] sm:$0xf]
      %v460 = vld [vmem:[%s2] sm:$0xf]
      %v461 = vld [vmem:[%s2 + $0x4] sm:$0xf]
      %v462 = vld [vmem:[%s2 + $0x8] sm:$0xf]
      %v463 = vld [vmem:[%s2 + $0xc] sm:$0xf]
      %v464 = vld [vmem:[%s5] sm:$0x1]
      %v466 = vlaneseq
      %v467 = vshrl.u32 %v466, 7
      %v468 = vsub.s32 0, %v467
      %v469 = vrot.slane %v464, %v468
      %v475 = vunpack.c.l.b16 %v460
      %v476 = vunpack.c.l.b16 %v461
      %v477 = vunpack.c.l.b16 %v462
      %v478 = vunpack.c.l.b16 %v463
      %v479 = vpack.c.b16 %v476, %v475
      %v480 = vpack.c.b16 %v478, %v477
      %vm483 = vcmask 261120
      %v485 = vsel %vm483, %v458, 0
      %487 = vmatprep.subr.bf16.mxu0 0
      %488 = vmatpush1.bf16.msra.mxu0 %v479
      %489 = vmatprep.subr.bf16.mxu0 0
      %490 = vmatpush1.bf16.msra.mxu0 %v480
      %491 = vmatprep.subr.bf16.mxu0 0
      %492 = vmatpush1.bf16.msra.mxu0 0
      %493 = vmatprep.subr.bf16.mxu0 0
      %494 = vmatpush1.bf16.msra.mxu0 0
      %495 = vmatprep.subr.bf16.mxu0 0
      %496 = vmatpush1.bf16.msra.mxu0 0
      %497 = vmatprep.subr.bf16.mxu0 0
      %498 = vmatpush1.bf16.msra.mxu0 0
      %499 = vmatprep.subr.bf16.mxu0 0
      %500 = vmatpush1.bf16.msra.mxu0 0
      %501 = vmatprep.subr.bf16.mxu0 0
      %502 = vmatpush1.bf16.msra.mxu0 0
      %503 = vmatprep.subr.bf16.mxu0 0
      %504 = vmatpush1.bf16.msra.mxu0 0
      %505 = vmatprep.subr.bf16.mxu0 0
      %506 = vmatpush1.bf16.msra.mxu0 0
      %507 = vmatprep.subr.bf16.mxu0 0
      %508 = vmatpush1.bf16.msra.mxu0 0
      %509 = vmatprep.subr.bf16.mxu0 0
      %510 = vmatpush1.bf16.msra.mxu0 0
      %511 = vmatprep.subr.bf16.mxu0 0
      %512 = vmatpush1.bf16.msra.mxu0 0
      %513 = vmatprep.subr.bf16.mxu0 0
      %514 = vmatpush1.bf16.msra.mxu0 0
      %515 = vmatprep.subr.bf16.mxu0 0
      %516 = vmatpush1.bf16.msra.mxu0 0
      %517 = vmatprep.subr.bf16.mxu0 0
      %518 = vmatpush1.bf16.msra.mxu0 0
      %519 = vmatprep.mubr.bf16.mxu0 0
      %520 = vmatmul.mubr.bf16.gmra.mrb[0].mxu0 %v485
      %v521 = vpop.f32.mrb[0].mxu0
      %v522 = vadd.f32 %v469, %v521
      %v523 = vpop.f32.mrb[0].mxu0
      %v524 = vpop.f32.mrb[0].mxu0
      %v525 = vpop.f32.mrb[0].mxu0
      %526 = vdwg.mxu0
      %v527 = vld [vmem:[%s3] sm:$0xf]
      %v528 = vld [vmem:[%s3 + $0x4] sm:$0xf]
      %v529 = vld [vmem:[%s3 + $0x8] sm:$0xf]
      %v530 = vld [vmem:[%s3 + $0xc] sm:$0xf]
      %v531 = vld [vmem:[%s6] sm:$0x1]
      %v533 = vlaneseq
      %v534 = vshrl.u32 %v533, 7
      %v535 = vsub.s32 0, %v534
      %v536 = vrot.slane %v531, %v535
      %v542 = vunpack.c.l.b16 %v527
      %v543 = vunpack.c.l.b16 %v528
      %v544 = vunpack.c.l.b16 %v529
      %v545 = vunpack.c.l.b16 %v530
      %v546 = vpack.c.b16 %v543, %v542
      %v547 = vpack.c.b16 %v545, %v544
      %v551 = vsel %vm483, %v459, 0
      %553 = vmatprep.subr.bf16.mxu0 0
      %554 = vmatpush1.bf16.msra.mxu0 %v546
      %555 = vmatprep.subr.bf16.mxu0 0
      %556 = vmatpush1.bf16.msra.mxu0 %v547
      %557 = vmatprep.subr.bf16.mxu0 0
      %558 = vmatpush1.bf16.msra.mxu0 0
      %559 = vmatprep.subr.bf16.mxu0 0
      %560 = vmatpush1.bf16.msra.mxu0 0
      %561 = vmatprep.subr.bf16.mxu0 0
      %562 = vmatpush1.bf16.msra.mxu0 0
      %563 = vmatprep.subr.bf16.mxu0 0
      %564 = vmatpush1.bf16.msra.mxu0 0
      %565 = vmatprep.subr.bf16.mxu0 0
      %566 = vmatpush1.bf16.msra.mxu0 0
      %567 = vmatprep.subr.bf16.mxu0 0
      %568 = vmatpush1.bf16.msra.mxu0 0
      %569 = vmatprep.subr.bf16.mxu0 0
      %570 = vmatpush1.bf16.msra.mxu0 0
      %571 = vmatprep.subr.bf16.mxu0 0
      %572 = vmatpush1.bf16.msra.mxu0 0
      %573 = vmatprep.subr.bf16.mxu0 0
      %574 = vmatpush1.bf16.msra.mxu0 0
      %575 = vmatprep.subr.bf16.mxu0 0
      %576 = vmatpush1.bf16.msra.mxu0 0
      %577 = vmatprep.subr.bf16.mxu0 0
      %578 = vmatpush1.bf16.msra.mxu0 0
      %579 = vmatprep.subr.bf16.mxu0 0
      %580 = vmatpush1.bf16.msra.mxu0 0
      %581 = vmatprep.subr.bf16.mxu0 0
      %582 = vmatpush1.bf16.msra.mxu0 0
      %583 = vmatprep.subr.bf16.mxu0 0
      %584 = vmatpush1.bf16.msra.mxu0 0
      %585 = vmatprep.mubr.bf16.mxu0 0
      %586 = vmatmul.mubr.bf16.gmra.mrb[0].mxu0 %v551
      %v587 = vpop.f32.mrb[0].mxu0
      %v588 = vadd.f32 %v536, %v587
      %v589 = vpop.f32.mrb[0].mxu0
      %v590 = vpop.f32.mrb[0].mxu0
      %v591 = vpop.f32.mrb[0].mxu0
      %592 = vdwg.mxu0
      %v593 = vld [vmem:[%s4] sm:$0xf]
      %v594 = vld [vmem:[%s4 + $0x4] sm:$0xf]
      %v595 = vld [vmem:[%s4 + $0x8] sm:$0xf]
      %v596 = vld [vmem:[%s4 + $0xc] sm:$0xf]
      %v597 = vld [vmem:[%s7] sm:$0x1]
      %v599 = vlaneseq
      %v600 = vshrl.u32 %v599, 7
      %v601 = vsub.s32 0, %v600
      %v602 = vrot.slane %v597, %v601
      %v608 = vunpack.c.l.b16 %v593
      %v609 = vunpack.c.l.b16 %v594
      %v610 = vunpack.c.l.b16 %v595
      %v611 = vunpack.c.l.b16 %v596
      %v612 = vpack.c.b16 %v609, %v608
      %v613 = vpack.c.b16 %v611, %v610
      %616 = vmatprep.subr.bf16.mxu0 0
      %617 = vmatpush1.bf16.msra.mxu0 %v612
      %618 = vmatprep.subr.bf16.mxu0 0
      %619 = vmatpush1.bf16.msra.mxu0 %v613
      %620 = vmatprep.subr.bf16.mxu0 0
      %621 = vmatpush1.bf16.msra.mxu0 0
      %622 = vmatprep.subr.bf16.mxu0 0
      %623 = vmatpush1.bf16.msra.mxu0 0
      %624 = vmatprep.subr.bf16.mxu0 0
      %625 = vmatpush1.bf16.msra.mxu0 0
      %626 = vmatprep.subr.bf16.mxu0 0
      %627 = vmatpush1.bf16.msra.mxu0 0
      %628 = vmatprep.subr.bf16.mxu0 0
      %629 = vmatpush1.bf16.msra.mxu0 0
      %630 = vmatprep.subr.bf16.mxu0 0
      %631 = vmatpush1.bf16.msra.mxu0 0
      %632 = vmatprep.subr.bf16.mxu0 0
      %633 = vmatpush1.bf16.msra.mxu0 0
      %634 = vmatprep.subr.bf16.mxu0 0
      %635 = vmatpush1.bf16.msra.mxu0 0
      %636 = vmatprep.subr.bf16.mxu0 0
      %637 = vmatpush1.bf16.msra.mxu0 0
      %638 = vmatprep.subr.bf16.mxu0 0
      %639 = vmatpush1.bf16.msra.mxu0 0
      %640 = vmatprep.subr.bf16.mxu0 0
      %641 = vmatpush1.bf16.msra.mxu0 0
      %642 = vmatprep.subr.bf16.mxu0 0
      %643 = vmatpush1.bf16.msra.mxu0 0
      %644 = vmatprep.subr.bf16.mxu0 0
      %645 = vmatpush1.bf16.msra.mxu0 0
      %646 = vmatprep.subr.bf16.mxu0 0
      %647 = vmatpush1.bf16.msra.mxu0 0
      %648 = vmatprep.mubr.bf16.mxu0 0
      %649 = vmatmul.mubr.bf16.gmra.mrb[0].mxu0 %v551
      %v650 = vpop.f32.mrb[0].mxu0
      %v651 = vadd.f32 %v602, %v650
      %v652 = vpop.f32.mrb[0].mxu0
      %v653 = vpop.f32.mrb[0].mxu0
      %v654 = vpop.f32.mrb[0].mxu0
      %655 = vdwg.mxu0
      %v656 = vmul.f32 %v522, 0.35355338
      %v657 = vpack.c.bf16 %v656, %v656
      %v658 = vpack.c.bf16 %v588, %v588
      %v659 = vpack.c.bf16 %v651, %v651
      %vm660 = vcmask 64512
      %v662 = vsel %vm660, %v657, 0
      %v665 = vsel %vm660, %v658, 0
      %667 = vmatprep.subr.bf16.mxu0 0
      %668 = vmatpush1.bf16.xpose.msra.mxu0 %v665
      %669 = vmatprep.subr.bf16.mxu0 0
      %670 = vmatpush1.bf16.xpose.msra.mxu0 0
      %671 = vmatprep.subr.bf16.mxu0 0
      %672 = vmatpush1.bf16.xpose.msra.mxu0 0
      %673 = vmatprep.subr.bf16.mxu0 0
      %674 = vmatpush1.bf16.xpose.msra.mxu0 0
      %675 = vmatprep.subr.bf16.mxu0 0
      %676 = vmatpush1.bf16.xpose.msra.mxu0 0
      %677 = vmatprep.subr.bf16.mxu0 0
      %678 = vmatpush1.bf16.xpose.msra.mxu0 0
      %679 = vmatprep.subr.bf16.mxu0 0
      %680 = vmatpush1.bf16.xpose.msra.mxu0 0
      %681 = vmatprep.subr.bf16.mxu0 0
      %682 = vmatpush1.bf16.xpose.msra.mxu0 0
      %683 = vmatprep.subr.bf16.mxu0 0
      %684 = vmatpush1.bf16.xpose.msra.mxu0 0
      %685 = vmatprep.subr.bf16.mxu0 0
      %686 = vmatpush1.bf16.xpose.msra.mxu0 0
      %687 = vmatprep.subr.bf16.mxu0 0
      %688 = vmatpush1.bf16.xpose.msra.mxu0 0
      %689 = vmatprep.subr.bf16.mxu0 0
      %690 = vmatpush1.bf16.xpose.msra.mxu0 0
      %691 = vmatprep.subr.bf16.mxu0 0
      %692 = vmatpush1.bf16.xpose.msra.mxu0 0
      %693 = vmatprep.subr.bf16.mxu0 0
      %694 = vmatpush1.bf16.xpose.msra.mxu0 0
      %695 = vmatprep.subr.bf16.mxu0 0
      %696 = vmatpush1.bf16.xpose.msra.mxu0 0
      %697 = vmatprep.subr.bf16.mxu0 0
      %698 = vmatpush1.bf16.xpose.msra.mxu0 0
      %699 = vmatprep.mubr.bf16.mxu0 0
      %700 = vmatmul.mubr.bf16.gmra.mrb[0].mxu0 %v662
      %v701 = vpop.f32.mrb[0].mxu0
      %v702 = vadd.f32 0.0, %v701
      %v703 = vpop.f32.mrb[0].mxu0
      %v704 = vpop.f32.mrb[0].mxu0
      %v705 = vpop.f32.mrb[0].mxu0
      %706 = vdwg.mxu0
      %v707 = vsel %vm660, %v702, -inf
      %708 = vmax.xlane.f32.xlu0 %v707
      %v709 = vpop.xlane.xlu0 %708
      %v710 = vsub.f32 %v702, %v709
      %v711 = vmul.f32 %v710, 1.442695
      %v712 = vpow.pop %v711
      %v713 = vsel %vm660, %v712, 0.0
      %714 = vadd.xlane.f32.xlu0 %v713
      %v715 = vpop.xlane.xlu0 %714
      %v716 = vrcp.pop %v715
      %v717 = vmul.f32 %v712, %v716
      %v718 = vpack.c.bf16 %v717, %v717
      %v720 = vsel %vm660, %v718, 0
      %vm722 = vcmask 1043456
      %v724 = vsel %vm722, %v659, 0
      %726 = vmatprep.subr.bf16.mxu0 0
      %727 = vmatpush1.bf16.msra.mxu0 %v724
      %728 = vmatprep.subr.bf16.mxu0 0
      %729 = vmatpush1.bf16.msra.mxu0 0
      %730 = vmatprep.subr.bf16.mxu0 0
      %731 = vmatpush1.bf16.msra.mxu0 0
      %732 = vmatprep.subr.bf16.mxu0 0
      %733 = vmatpush1.bf16.msra.mxu0 0
      %734 = vmatprep.subr.bf16.mxu0 0
      %735 = vmatpush1.bf16.msra.mxu0 0
      %736 = vmatprep.subr.bf16.mxu0 0
      %737 = vmatpush1.bf16.msra.mxu0 0
      %738 = vmatprep.subr.bf16.mxu0 0
      %739 = vmatpush1.bf16.msra.mxu0 0
      %740 = vmatprep.subr.bf16.mxu0 0
      %741 = vmatpush1.bf16.msra.mxu0 0
      %742 = vmatprep.subr.bf16.mxu0 0
      %743 = vmatpush1.bf16.msra.mxu0 0
      %744 = vmatprep.subr.bf16.mxu0 0
      %745 = vmatpush1.bf16.msra.mxu0 0
      %746 = vmatprep.subr.bf16.mxu0 0
      %747 = vmatpush1.bf16.msra.mxu0 0
      %748 = vmatprep.subr.bf16.mxu0 0
      %749 = vmatpush1.bf16.msra.mxu0 0
      %750 = vmatprep.subr.bf16.mxu0 0
      %751 = vmatpush1.bf16.msra.mxu0 0
      %752 = vmatprep.subr.bf16.mxu0 0
      %753 = vmatpush1.bf16.msra.mxu0 0
      %754 = vmatprep.subr.bf16.mxu0 0
      %755 = vmatpush1.bf16.msra.mxu0 0
      %756 = vmatprep.subr.bf16.mxu0 0
      %757 = vmatpush1.bf16.msra.mxu0 0
      %758 = vmatprep.mubr.bf16.mxu0 0
      %759 = vmatmul.mubr.bf16.gmra.mrb[0].mxu0 %v720
      %v760 = vpop.f32.mrb[0].mxu0
      %v761 = vadd.f32 0.0, %v760
      %v762 = vpop.f32.mrb[0].mxu0
      %v763 = vpop.f32.mrb[0].mxu0
      %v764 = vpop.f32.mrb[0].mxu0
      %765 = vdwg.mxu0
      %v766 = vpack.c.bf16 %v761, %v761
      %768 = vrot.lane.b32.xlu0 %v657, 120
      %v769 = vpop.permute.xlu0 %768
      %771 = vrot.lane.b32.xlu0 %v658, 120
      %v772 = vpop.permute.xlu0 %771
      %v774 = vsel %vm660, %v769, 0
      %v777 = vsel %vm660, %v772, 0
      %779 = vmatprep.subr.bf16.mxu0 0
      %780 = vmatpush1.bf16.xpose.msra.mxu0 %v777
      %781 = vmatprep.subr.bf16.mxu0 0
      %782 = vmatpush1.bf16.xpose.msra.mxu0 0
      %783 = vmatprep.subr.bf16.mxu0 0
      %784 = vmatpush1.bf16.xpose.msra.mxu0 0
      %785 = vmatprep.subr.bf16.mxu0 0
      %786 = vmatpush1.bf16.xpose.msra.mxu0 0
      %787 = vmatprep.subr.bf16.mxu0 0
      %788 = vmatpush1.bf16.xpose.msra.mxu0 0
      %789 = vmatprep.subr.bf16.mxu0 0
      %790 = vmatpush1.bf16.xpose.msra.mxu0 0
      %791 = vmatprep.subr.bf16.mxu0 0
      %792 = vmatpush1.bf16.xpose.msra.mxu0 0
      %793 = vmatprep.subr.bf16.mxu0 0
      %794 = vmatpush1.bf16.xpose.msra.mxu0 0
      %795 = vmatprep.subr.bf16.mxu0 0
      %796 = vmatpush1.bf16.xpose.msra.mxu0 0
      %797 = vmatprep.subr.bf16.mxu0 0
      %798 = vmatpush1.bf16.xpose.msra.mxu0 0
      %799 = vmatprep.subr.bf16.mxu0 0
      %800 = vmatpush1.bf16.xpose.msra.mxu0 0
      %801 = vmatprep.subr.bf16.mxu0 0
      %802 = vmatpush1.bf16.xpose.msra.mxu0 0
      %803 = vmatprep.subr.bf16.mxu0 0
      %804 = vmatpush1.bf16.xpose.msra.mxu0 0
      %805 = vmatprep.subr.bf16.mxu0 0
      %806 = vmatpush1.bf16.xpose.msra.mxu0 0
      %807 = vmatprep.subr.bf16.mxu0 0
      %808 = vmatpush1.bf16.xpose.msra.mxu0 0
      %809 = vmatprep.subr.bf16.mxu0 0
      %810 = vmatpush1.bf16.xpose.msra.mxu0 0
      %811 = vmatprep.mubr.bf16.mxu0 0
      %812 = vmatmul.mubr.bf16.gmra.mrb[0].mxu0 %v774
      %v813 = vpop.f32.mrb[0].mxu0
      %v814 = vadd.f32 0.0, %v813
      %v815 = vpop.f32.mrb[0].mxu0
      %v816 = vpop.f32.mrb[0].mxu0
      %v817 = vpop.f32.mrb[0].mxu0
      %818 = vdwg.mxu0
      %v819 = vsel %vm660, %v814, -inf
      %820 = vmax.xlane.f32.xlu0 %v819
      %v821 = vpop.xlane.xlu0 %820
      %v822 = vsub.f32 %v814, %v821
      %v823 = vmul.f32 %v822, 1.442695
      %v824 = vpow.pop %v823
      %v825 = vsel %vm660, %v824, 0.0
      %826 = vadd.xlane.f32.xlu0 %v825
      %v827 = vpop.xlane.xlu0 %826
      %v828 = vrcp.pop %v827
      %v829 = vmul.f32 %v824, %v828
      %v830 = vpack.c.bf16 %v829, %v829
      %832 = vrot.lane.b32.xlu0 %v659, 120
      %v833 = vpop.permute.xlu0 %832
      %v835 = vsel %vm660, %v830, 0
      %v838 = vsel %vm722, %v833, 0
      %840 = vmatprep.subr.bf16.mxu0 0
      %841 = vmatpush1.bf16.msra.mxu0 %v838
      %842 = vmatprep.subr.bf16.mxu0 0
      %843 = vmatpush1.bf16.msra.mxu0 0
      %844 = vmatprep.subr.bf16.mxu0 0
      %845 = vmatpush1.bf16.msra.mxu0 0
      %846 = vmatprep.subr.bf16.mxu0 0
      %847 = vmatpush1.bf16.msra.mxu0 0
      %848 = vmatprep.subr.bf16.mxu0 0
      %849 = vmatpush1.bf16.msra.mxu0 0
      %850 = vmatprep.subr.bf16.mxu0 0
      %851 = vmatpush1.bf16.msra.mxu0 0
      %852 = vmatprep.subr.bf16.mxu0 0
      %853 = vmatpush1.bf16.msra.mxu0 0
      %854 = vmatprep.subr.bf16.mxu0 0
      %855 = vmatpush1.bf16.msra.mxu0 0
      %856 = vmatprep.subr.bf16.mxu0 0
      %857 = vmatpush1.bf16.msra.mxu0 0
      %858 = vmatprep.subr.bf16.mxu0 0
      %859 = vmatpush1.bf16.msra.mxu0 0
      %860 = vmatprep.subr.bf16.mxu0 0
      %861 = vmatpush1.bf16.msra.mxu0 0
      %862 = vmatprep.subr.bf16.mxu0 0
      %863 = vmatpush1.bf16.msra.mxu0 0
      %864 = vmatprep.subr.bf16.mxu0 0
      %865 = vmatpush1.bf16.msra.mxu0 0
      %866 = vmatprep.subr.bf16.mxu0 0
      %867 = vmatpush1.bf16.msra.mxu0 0
      %868 = vmatprep.subr.bf16.mxu0 0
      %869 = vmatpush1.bf16.msra.mxu0 0
      %870 = vmatprep.subr.bf16.mxu0 0
      %871 = vmatpush1.bf16.msra.mxu0 0
      %872 = vmatprep.mubr.bf16.mxu0 0
      %873 = vmatmul.mubr.bf16.gmra.mrb[0].mxu0 %v835
      %v874 = vpop.f32.mrb[0].mxu0
      %v875 = vadd.f32 0.0, %v874
      %v876 = vpop.f32.mrb[0].mxu0
      %v877 = vpop.f32.mrb[0].mxu0
      %v878 = vpop.f32.mrb[0].mxu0
      %879 = vdwg.mxu0
      %v880 = vpack.c.bf16 %v875, %v875
      %881 = vrot.lane.b32.xlu0 %v657, 112
      %v882 = vpop.permute.xlu0 %881
      %883 = vrot.lane.b32.xlu0 %v658, 112
      %v884 = vpop.permute.xlu0 %883
      %v886 = vsel %vm660, %v882, 0
      %v889 = vsel %vm660, %v884, 0
      %891 = vmatprep.subr.bf16.mxu0 0
      %892 = vmatpush1.bf16.xpose.msra.mxu0 %v889
      %893 = vmatprep.subr.bf16.mxu0 0
      %894 = vmatpush1.bf16.xpose.msra.mxu0 0
      %895 = vmatprep.subr.bf16.mxu0 0
      %896 = vmatpush1.bf16.xpose.msra.mxu0 0
      %897 = vmatprep.subr.bf16.mxu0 0
      %898 = vmatpush1.bf16.xpose.msra.mxu0 0
      %899 = vmatprep.subr.bf16.mxu0 0
      %900 = vmatpush1.bf16.xpose.msra.mxu0 0
      %901 = vmatprep.subr.bf16.mxu0 0
      %902 = vmatpush1.bf16.xpose.msra.mxu0 0
      %903 = vmatprep.subr.bf16.mxu0 0
      %904 = vmatpush1.bf16.xpose.msra.mxu0 0
      %905 = vmatprep.subr.bf16.mxu0 0
      %906 = vmatpush1.bf16.xpose.msra.mxu0 0
      %907 = vmatprep.subr.bf16.mxu0 0
      %908 = vmatpush1.bf16.xpose.msra.mxu0 0
      %909 = vmatprep.subr.bf16.mxu0 0
      %910 = vmatpush1.bf16.xpose.msra.mxu0 0
      %911 = vmatprep.subr.bf16.mxu0 0
      %912 = vmatpush1.bf16.xpose.msra.mxu0 0
      %913 = vmatprep.subr.bf16.mxu0 0
      %914 = vmatpush1.bf16.xpose.msra.mxu0 0
      %915 = vmatprep.subr.bf16.mxu0 0
      %916 = vmatpush1.bf16.xpose.msra.mxu0 0
      %917 = vmatprep.subr.bf16.mxu0 0
      %918 = vmatpush1.bf16.xpose.msra.mxu0 0
      %919 = vmatprep.subr.bf16.mxu0 0
      %920 = vmatpush1.bf16.xpose.msra.mxu0 0
      %921 = vmatprep.subr.bf16.mxu0 0
      %922 = vmatpush1.bf16.xpose.msra.mxu0 0
      %923 = vmatprep.mubr.bf16.mxu0 0
      %924 = vmatmul.mubr.bf16.gmra.mrb[0].mxu0 %v886
      %v925 = vpop.f32.mrb[0].mxu0
      %v926 = vadd.f32 0.0, %v925
      %v927 = vpop.f32.mrb[0].mxu0
      %v928 = vpop.f32.mrb[0].mxu0
      %v929 = vpop.f32.mrb[0].mxu0
      %930 = vdwg.mxu0
      %v931 = vsel %vm660, %v926, -inf
      %932 = vmax.xlane.f32.xlu0 %v931
      %v933 = vpop.xlane.xlu0 %932
      %v934 = vsub.f32 %v926, %v933
      %v935 = vmul.f32 %v934, 1.442695
      %v936 = vpow.pop %v935
      %v937 = vsel %vm660, %v936, 0.0
      %938 = vadd.xlane.f32.xlu0 %v937
      %v939 = vpop.xlane.xlu0 %938
      %v940 = vrcp.pop %v939
      %v941 = vmul.f32 %v936, %v940
      %v942 = vpack.c.bf16 %v941, %v941
      %943 = vrot.lane.b32.xlu0 %v659, 112
      %v944 = vpop.permute.xlu0 %943
      %v946 = vsel %vm660, %v942, 0
      %v949 = vsel %vm722, %v944, 0
      %951 = vmatprep.subr.bf16.mxu0 0
      %952 = vmatpush1.bf16.msra.mxu0 %v949
      %953 = vmatprep.subr.bf16.mxu0 0
      %954 = vmatpush1.bf16.msra.mxu0 0
      %955 = vmatprep.subr.bf16.mxu0 0
      %956 = vmatpush1.bf16.msra.mxu0 0
      %957 = vmatprep.subr.bf16.mxu0 0
      %958 = vmatpush1.bf16.msra.mxu0 0
      %959 = vmatprep.subr.bf16.mxu0 0
      %960 = vmatpush1.bf16.msra.mxu0 0
      %961 = vmatprep.subr.bf16.mxu0 0
      %962 = vmatpush1.bf16.msra.mxu0 0
      %963 = vmatprep.subr.bf16.mxu0 0
      %964 = vmatpush1.bf16.msra.mxu0 0
      %965 = vmatprep.subr.bf16.mxu0 0
      %966 = vmatpush1.bf16.msra.mxu0 0
      %967 = vmatprep.subr.bf16.mxu0 0
      %968 = vmatpush1.bf16.msra.mxu0 0
      %969 = vmatprep.subr.bf16.mxu0 0
      %970 = vmatpush1.bf16.msra.mxu0 0
      %971 = vmatprep.subr.bf16.mxu0 0
      %972 = vmatpush1.bf16.msra.mxu0 0
      %973 = vmatprep.subr.bf16.mxu0 0
      %974 = vmatpush1.bf16.msra.mxu0 0
      %975 = vmatprep.subr.bf16.mxu0 0
      %976 = vmatpush1.bf16.msra.mxu0 0
      %977 = vmatprep.subr.bf16.mxu0 0
      %978 = vmatpush1.bf16.msra.mxu0 0
      %979 = vmatprep.subr.bf16.mxu0 0
      %980 = vmatpush1.bf16.msra.mxu0 0
      %981 = vmatprep.subr.bf16.mxu0 0
      %982 = vmatpush1.bf16.msra.mxu0 0
      %983 = vmatprep.mubr.bf16.mxu0 0
      %984 = vmatmul.mubr.bf16.gmra.mrb[0].mxu0 %v946
      %v985 = vpop.f32.mrb[0].mxu0
      %v986 = vadd.f32 0.0, %v985
      %v987 = vpop.f32.mrb[0].mxu0
      %v988 = vpop.f32.mrb[0].mxu0
      %v989 = vpop.f32.mrb[0].mxu0
      %990 = vdwg.mxu0
      %v991 = vpack.c.bf16 %v986, %v986
      %992 = vrot.lane.b32.xlu0 %v657, 104
      %v993 = vpop.permute.xlu0 %992
      %994 = vrot.lane.b32.xlu0 %v658, 104
      %v995 = vpop.permute.xlu0 %994
      %v997 = vsel %vm660, %v993, 0
      %v1000 = vsel %vm660, %v995, 0
      %1002 = vmatprep.subr.bf16.mxu0 0
      %1003 = vmatpush1.bf16.xpose.msra.mxu0 %v1000
      %1004 = vmatprep.subr.bf16.mxu0 0
      %1005 = vmatpush1.bf16.xpose.msra.mxu0 0
      %1006 = vmatprep.subr.bf16.mxu0 0
      %1007 = vmatpush1.bf16.xpose.msra.mxu0 0
      %1008 = vmatprep.subr.bf16.mxu0 0
      %1009 = vmatpush1.bf16.xpose.msra.mxu0 0
      %1010 = vmatprep.subr.bf16.mxu0 0
      %1011 = vmatpush1.bf16.xpose.msra.mxu0 0
      %1012 = vmatprep.subr.bf16.mxu0 0
      %1013 = vmatpush1.bf16.xpose.msra.mxu0 0
      %1014 = vmatprep.subr.bf16.mxu0 0
      %1015 = vmatpush1.bf16.xpose.msra.mxu0 0
      %1016 = vmatprep.subr.bf16.mxu0 0
      %1017 = vmatpush1.bf16.xpose.msra.mxu0 0
      %1018 = vmatprep.subr.bf16.mxu0 0
      %1019 = vmatpush1.bf16.xpose.msra.mxu0 0
      %1020 = vmatprep.subr.bf16.mxu0 0
      %1021 = vmatpush1.bf16.xpose.msra.mxu0 0
      %1022 = vmatprep.subr.bf16.mxu0 0
      %1023 = vmatpush1.bf16.xpose.msra.mxu0 0
      %1024 = vmatprep.subr.bf16.mxu0 0
      %1025 = vmatpush1.bf16.xpose.msra.mxu0 0
      %1026 = vmatprep.subr.bf16.mxu0 0
      %1027 = vmatpush1.bf16.xpose.msra.mxu0 0
      %1028 = vmatprep.subr.bf16.mxu0 0
      %1029 = vmatpush1.bf16.xpose.msra.mxu0 0
      %1030 = vmatprep.subr.bf16.mxu0 0
      %1031 = vmatpush1.bf16.xpose.msra.mxu0 0
      %1032 = vmatprep.subr.bf16.mxu0 0
      %1033 = vmatpush1.bf16.xpose.msra.mxu0 0
      %1034 = vmatprep.mubr.bf16.mxu0 0
      %1035 = vmatmul.mubr.bf16.gmra.mrb[0].mxu0 %v997
      %v1036 = vpop.f32.mrb[0].mxu0
      %v1037 = vadd.f32 0.0, %v1036
      %v1038 = vpop.f32.mrb[0].mxu0
      %v1039 = vpop.f32.mrb[0].mxu0
      %v1040 = vpop.f32.mrb[0].mxu0
      %1041 = vdwg.mxu0
      %v1042 = vsel %vm660, %v1037, -inf
      %1043 = vmax.xlane.f32.xlu0 %v1042
      %v1044 = vpop.xlane.xlu0 %1043
      %v1045 = vsub.f32 %v1037, %v1044
      %v1046 = vmul.f32 %v1045, 1.442695
      %v1047 = vpow.pop %v1046
      %v1048 = vsel %vm660, %v1047, 0.0
      %1049 = vadd.xlane.f32.xlu0 %v1048
      %v1050 = vpop.xlane.xlu0 %1049
      %v1051 = vrcp.pop %v1050
      %v1052 = vmul.f32 %v1047, %v1051
      %v1053 = vpack.c.bf16 %v1052, %v1052
      %1054 = vrot.lane.b32.xlu0 %v659, 104
      %v1055 = vpop.permute.xlu0 %1054
      %v1057 = vsel %vm660, %v1053, 0
      %v1060 = vsel %vm722, %v1055, 0
      %1062 = vmatprep.subr.bf16.mxu0 0
      %1063 = vmatpush1.bf16.msra.mxu0 %v1060
      %1064 = vmatprep.subr.bf16.mxu0 0
      %1065 = vmatpush1.bf16.msra.mxu0 0
      %1066 = vmatprep.subr.bf16.mxu0 0
      %1067 = vmatpush1.bf16.msra.mxu0 0
      %1068 = vmatprep.subr.bf16.mxu0 0
      %1069 = vmatpush1.bf16.msra.mxu0 0
      %1070 = vmatprep.subr.bf16.mxu0 0
      %1071 = vmatpush1.bf16.msra.mxu0 0
      %1072 = vmatprep.subr.bf16.mxu0 0
      %1073 = vmatpush1.bf16.msra.mxu0 0
      %1074 = vmatprep.subr.bf16.mxu0 0
      %1075 = vmatpush1.bf16.msra.mxu0 0
      %1076 = vmatprep.subr.bf16.mxu0 0
      %1077 = vmatpush1.bf16.msra.mxu0 0
      %1078 = vmatprep.subr.bf16.mxu0 0
      %1079 = vmatpush1.bf16.msra.mxu0 0
      %1080 = vmatprep.subr.bf16.mxu0 0
      %1081 = vmatpush1.bf16.msra.mxu0 0
      %1082 = vmatprep.subr.bf16.mxu0 0
      %1083 = vmatpush1.bf16.msra.mxu0 0
      %1084 = vmatprep.subr.bf16.mxu0 0
      %1085 = vmatpush1.bf16.msra.mxu0 0
      %1086 = vmatprep.subr.bf16.mxu0 0
      %1087 = vmatpush1.bf16.msra.mxu0 0
      %1088 = vmatprep.subr.bf16.mxu0 0
      %1089 = vmatpush1.bf16.msra.mxu0 0
      %1090 = vmatprep.subr.bf16.mxu0 0
      %1091 = vmatpush1.bf16.msra.mxu0 0
      %1092 = vmatprep.subr.bf16.mxu0 0
      %1093 = vmatpush1.bf16.msra.mxu0 0
      %1094 = vmatprep.mubr.bf16.mxu0 0
      %1095 = vmatmul.mubr.bf16.gmra.mrb[0].mxu0 %v1057
      %v1096 = vpop.f32.mrb[0].mxu0
      %v1097 = vadd.f32 0.0, %v1096
      %v1098 = vpop.f32.mrb[0].mxu0
      %v1099 = vpop.f32.mrb[0].mxu0
      %v1100 = vpop.f32.mrb[0].mxu0
      %1101 = vdwg.mxu0
      %v1102 = vpack.c.bf16 %v1097, %v1097
      %1104 = vrot.lane.b32.xlu0 %v880, 8
      %v1105 = vpop.permute.xlu0 %1104
      %1107 = vrot.lane.b32.xlu0 %v991, 16
      %v1108 = vpop.permute.xlu0 %1107
      %1110 = vrot.lane.b32.xlu0 %v1102, 24
      %v1111 = vpop.permute.xlu0 %1110
      %v1114 = vsel %vm660, %v766, %v1105
      %vm1115 = vcmask 130048
      %v1117 = vsel %vm1115, %v1114, %v1108
      %vm1118 = vcmask 195584
      %v1120 = vsel %vm1118, %v1117, %v1111
      %v1121 = vld [vmem:[%s8] sm:$0xf]
      %v1122 = vld [vmem:[%s8 + $0x4] sm:$0xf]
      %v1123 = vld [vmem:[%s8 + $0x8] sm:$0xf]
      %v1124 = vld [vmem:[%s8 + $0xc] sm:$0xf]
      %v1125 = vld [vmem:[%s9] sm:$0x1]
      %v1127 = vlaneseq
      %v1128 = vshrl.u32 %v1127, 7
      %v1129 = vsub.s32 0, %v1128
      %v1130 = vrot.slane %v1125, %v1129
      %v1136 = vunpack.c.l.b16 %v1121
      %v1137 = vunpack.c.l.b16 %v1122
      %v1138 = vunpack.c.l.b16 %v1123
      %v1139 = vunpack.c.l.b16 %v1124
      %v1140 = vpack.c.b16 %v1137, %v1136
      %v1141 = vpack.c.b16 %v1139, %v1138
      %v1144 = vsel %vm483, %v1120, 0
      %1146 = vmatprep.subr.bf16.mxu0 0
      %1147 = vmatpush1.bf16.msra.mxu0 %v1140
      %1148 = vmatprep.subr.bf16.mxu0 0
      %1149 = vmatpush1.bf16.msra.mxu0 %v1141
      %1150 = vmatprep.subr.bf16.mxu0 0
      %1151 = vmatpush1.bf16.msra.mxu0 0
      %1152 = vmatprep.subr.bf16.mxu0 0
      %1153 = vmatpush1.bf16.msra.mxu0 0
      %1154 = vmatprep.subr.bf16.mxu0 0
      %1155 = vmatpush1.bf16.msra.mxu0 0
      %1156 = vmatprep.subr.bf16.mxu0 0
      %1157 = vmatpush1.bf16.msra.mxu0 0
      %1158 = vmatprep.subr.bf16.mxu0 0
      %1159 = vmatpush1.bf16.msra.mxu0 0
      %1160 = vmatprep.subr.bf16.mxu0 0
      %1161 = vmatpush1.bf16.msra.mxu0 0
      %1162 = vmatprep.subr.bf16.mxu0 0
      %1163 = vmatpush1.bf16.msra.mxu0 0
      %1164 = vmatprep.subr.bf16.mxu0 0
      %1165 = vmatpush1.bf16.msra.mxu0 0
      %1166 = vmatprep.subr.bf16.mxu0 0
      %1167 = vmatpush1.bf16.msra.mxu0 0
      %1168 = vmatprep.subr.bf16.mxu0 0
      %1169 = vmatpush1.bf16.msra.mxu0 0
      %1170 = vmatprep.subr.bf16.mxu0 0
      %1171 = vmatpush1.bf16.msra.mxu0 0
      %1172 = vmatprep.subr.bf16.mxu0 0
      %1173 = vmatpush1.bf16.msra.mxu0 0
      %1174 = vmatprep.subr.bf16.mxu0 0
      %1175 = vmatpush1.bf16.msra.mxu0 0
      %1176 = vmatprep.subr.bf16.mxu0 0
      %1177 = vmatpush1.bf16.msra.mxu0 0
      %1178 = vmatprep.mubr.bf16.mxu0 0
      %1179 = vmatmul.mubr.bf16.gmra.mrb[0].mxu0 %v1144
      %v1180 = vpop.f32.mrb[0].mxu0
      %v1181 = vadd.f32 %v1130, %v1180
      %v1182 = vpop.f32.mrb[0].mxu0
      %v1183 = vpop.f32.mrb[0].mxu0
      %v1184 = vpop.f32.mrb[0].mxu0
      %1185 = vdwg.mxu0
      %v1186 = vunpack.c.l.bf16 %v458
      %v1187 = vadd.f32 %v1186, %v1181
      %v1188 = vld [vmem:[%s10] sm:$0x1]
      %v1189 = vld [vmem:[%s11] sm:$0x1]
      %v1190 = vsel %vm483, %v1187, 0.0
      %1191 = vadd.xlane.f32.xlu0 %v1190
      %v1192 = vpop.xlane.xlu0 %1191
      %v1193 = vrcp.pop 32.0
      %v1194 = vmul.f32 %v1192, %v1193
      %v1195 = vsub.f32 %v1187, %v1194
      %v1196 = vmul.f32 %v1195, %v1195
      %v1197 = vsel %vm483, %v1196, 0.0
      %1198 = vadd.xlane.f32.xlu0 %v1197
      %v1199 = vpop.xlane.xlu0 %1198
      %v1200 = vmul.f32 %v1199, %v1193
      %v1201 = vadd.f32 %v1200, 1e-05
      %v1202 = vrsqrt.pop %v1201
      %v1203 = vmul.f32 %v1195, %v1202
      %v1205 = vlaneseq
      %v1206 = vshrl.u32 %v1205, 7
      %v1207 = vsub.s32 0, %v1206
      %v1208 = vrot.slane %v1188, %v1207
      %v1210 = vmul.f32 %v1203, %v1208
      %v1212 = vlaneseq
      %v1213 = vshrl.u32 %v1212, 7
      %v1214 = vsub.s32 0, %v1213
      %v1215 = vrot.slane %v1189, %v1214
      %v1217 = vadd.f32 %v1210, %v1215
      %v1218 = vpack.c.bf16 %v1217, %v1217
      %vm1219 = vcmask 257024
      %1220 = vst.msk [vmem:[%s456] sm:$0xf] %vm1219, %v1218
      %p1221 = scmp.lt.s32.totalorder %s27, 1
      %s1222 = scalar_select %p1221, %s27, 1
      %p1223 = scmp.lt.s32.totalorder %s28, 0
      %s1224 = scalar_select %p1223, %s28, 0
      %s1225 = sadd.s32 %s1224, %s1222
      %s1226 = smul.addr %s1225, 4
      %s1227 = scalar_lea.vmem %s12, %s1226
      // Predicated region
      $region69: #{transformer_forward.7} parent=67 // pred_check
        %p1228 = pneg %p319
      $region70: #{transformer_forward.7} parent=67 // pred_check_branch
        %1230 = sbr.rel (%p1228) target = $region72
      $region71: #{transformer_forward.7} parent=67 // pred_region
        _
      $region72: #{transformer_forward.7} parent=67 // pred_fallthru
        _
    $region68: #{transformer_forward.7} parent=5 // pred_fallthru
      _
    %p1231 = scmp.le.s32.totalorder 2, %s18
    // Predicated region
    $region73: #{transformer_forward.7} parent=5 // pred_check
      %p1232 = pneg %p1231
    $region74: #{transformer_forward.7} parent=5 // pred_check_branch
      %1234 = sbr.rel (%p1232) target = $region76
    $region75: #{transformer_forward.7} parent=5 // pred_region
      %s1235 = ssub.s32 %s18, 2
      // Predicated region
      $region77: #{transformer_forward.7} parent=75 // pred_check
        %p1236 = pneg %p325
      $region78: #{transformer_forward.7} parent=75 // pred_check_branch
        %1238 = sbr.rel (%p1236) target = $region80
      $region79: #{transformer_forward.7} parent=75 // pred_region
        %p1239 = scmp.lt.s32.totalorder %s29, 1
        %s1240 = scalar_select %p1239, %s29, 1
        %p1241 = scmp.lt.s32.totalorder %s30, 0
        %s1242 = scalar_select %p1241, %s30, 0
        %s1243 = sadd.s32 %s1242, %s1240
        %s1244 = smul.addr %s1243, 4
        %s1245 = scalar_lea.vmem %s12, %s1244
      $region80: #{transformer_forward.7} parent=75 // pred_fallthru
        _
    $region76: #{transformer_forward.7} parent=5 // pred_fallthru
      _
  $region6: #{transformer_forward.7} parent=0 // loop_footer
    %s22 = sadd.s32 1, %s18
  $region7: #{transformer_forward.7} parent=0 // loop_footer_branch
    %17 = sbr.rel target = $region3
  $region8: #{transformer_forward.7} parent=0 // loop_exit
    _

// kernel: transformer_forward.8
$region0: #{transformer_forward.8}
  #allocation0 [shape = 'u32[]', space=smem, size = 0x4, offset = 0x4, fixed_abs, tag = 'smem constant byte address 0x4 - core index']
  #allocation1 [shape = 'u32[144,128]{1,0:T(1,128)}', space=vmem, size = 0x12000, scoped, tag = 'internal scratch']
  %s0 = inlined_call_operand.vmem [shape: bf16[16,32], index: 0, kind: input, shape index: {}]
  %s1 = inlined_call_operand.vmem [shape: bf16[32,2048], index: 1, kind: input, shape index: {}]
  %s2 = inlined_call_operand.vmem [shape: f32[1,2048], index: 2, kind: input, shape index: {}]
  %s3 = inlined_call_operand.vmem [shape: bf16[2048,32], index: 3, kind: input, shape index: {}]
  %s4 = inlined_call_operand.vmem [shape: f32[1,32], index: 4, kind: input, shape index: {}]
  %s5 = inlined_call_operand.vmem [shape: f32[1,32], index: 5, kind: input, shape index: {}]
  %s6 = inlined_call_operand.vmem [shape: f32[1,32], index: 6, kind: input, shape index: {}]
  %s7 = inlined_call_operand.vmem [shape: bf16[16,32], index: 7, kind: output, shape index: {}]
  %s8 = sld [smem:[#allocation0]]
  $region38: #{transformer_forward.8} parent=0
    _
  %s10 = ssub.s32 1, %s8
  %s11 = scalar_select 0, %s10, %s8
  // Predicated region
  $region2: #{transformer_forward.8} parent=0 // pred_check
    _
  $region3: #{transformer_forward.8} parent=0 // pred_check_branch
    %13 = sbr.rel (0) target = $region5
  $region4: #{transformer_forward.8} parent=0 // pred_region
    _
  $region5: #{transformer_forward.8} parent=0 // pred_fallthru
    _
  // Predicated region
  $region6: #{transformer_forward.8} parent=0 // pred_check
    _
  $region7: #{transformer_forward.8} parent=0 // pred_check_branch
    %15 = sbr.rel (0) target = $region9
  $region8: #{transformer_forward.8} parent=0 // pred_region
    _
  $region9: #{transformer_forward.8} parent=0 // pred_fallthru
    _
  // Predicated region
  $region10: #{transformer_forward.8} parent=0 // pred_check
    _
  $region11: #{transformer_forward.8} parent=0 // pred_check_branch
    %17 = sbr.rel (0) target = $region13
  $region12: #{transformer_forward.8} parent=0 // pred_region
    _
  $region13: #{transformer_forward.8} parent=0 // pred_fallthru
    _
  // Predicated region
  $region14: #{transformer_forward.8} parent=0 // pred_check
    _
  $region15: #{transformer_forward.8} parent=0 // pred_check_branch
    %19 = sbr.rel (0) target = $region17
  $region16: #{transformer_forward.8} parent=0 // pred_region
    _
  $region17: #{transformer_forward.8} parent=0 // pred_fallthru
    _
  // Predicated region
  $region18: #{transformer_forward.8} parent=0 // pred_check
    _
  $region19: #{transformer_forward.8} parent=0 // pred_check_branch
    %21 = sbr.rel (0) target = $region21
  $region20: #{transformer_forward.8} parent=0 // pred_region
    _
  $region21: #{transformer_forward.8} parent=0 // pred_fallthru
    _
  // Predicated region
  $region22: #{transformer_forward.8} parent=0 // pred_check
    _
  $region23: #{transformer_forward.8} parent=0 // pred_check_branch
    %23 = sbr.rel (0) target = $region25
  $region24: #{transformer_forward.8} parent=0 // pred_region
    _
  $region25: #{transformer_forward.8} parent=0 // pred_fallthru
    _
  // Predicated region
  $region26: #{transformer_forward.8} parent=0 // pred_check
    _
  $region27: #{transformer_forward.8} parent=0 // pred_check_branch
    %25 = sbr.rel (0) target = $region29
  $region28: #{transformer_forward.8} parent=0 // pred_region
    _
  $region29: #{transformer_forward.8} parent=0 // pred_fallthru
    _
  %v27 = vld [vmem:[%s0] sm:$0xf]
  %v28 = vld [vmem:[%s0 + $0x4] sm:$0xf]
  %v29 = vld [vmem:[%s1] sm:$0xff]
  %v30 = vld [vmem:[%s1 + $0x8] sm:$0xff]
  %v31 = vld [vmem:[%s1 + $0x10] sm:$0xff]
  %v32 = vld [vmem:[%s1 + $0x18] sm:$0xff]
  %v33 = vld [vmem:[%s1 + $0x20] sm:$0xff]
  %v34 = vld [vmem:[%s1 + $0x28] sm:$0xff]
  %v35 = vld [vmem:[%s1 + $0x30] sm:$0xff]
  %v36 = vld [vmem:[%s1 + $0x38] sm:$0xff]
  %v37 = vld [vmem:[%s1 + $0x40] sm:$0xff]
  %v38 = vld [vmem:[%s1 + $0x48] sm:$0xff]
  %v39 = vld [vmem:[%s1 + $0x50] sm:$0xff]
  %v40 = vld [vmem:[%s1 + $0x58] sm:$0xff]
  %v41 = vld [vmem:[%s1 + $0x60] sm:$0xff]
  %v42 = vld [vmem:[%s1 + $0x68] sm:$0xff]
  %v43 = vld [vmem:[%s1 + $0x70] sm:$0xff]
  %v44 = vld [vmem:[%s1 + $0x78] sm:$0xff]
  %v45 = vld [vmem:[%s1 + $0x80] sm:$0xff]
  %v46 = vld [vmem:[%s1 + $0x88] sm:$0xff]
  %v47 = vld [vmem:[%s1 + $0x90] sm:$0xff]
  %v48 = vld [vmem:[%s1 + $0x98] sm:$0xff]
  %v49 = vld [vmem:[%s1 + $0xa0] sm:$0xff]
  %v50 = vld [vmem:[%s1 + $0xa8] sm:$0xff]
  %v51 = vld [vmem:[%s1 + $0xb0] sm:$0xff]
  %v52 = vld [vmem:[%s1 + $0xb8] sm:$0xff]
  %v53 = vld [vmem:[%s1 + $0xc0] sm:$0xff]
  %v54 = vld [vmem:[%s1 + $0xc8] sm:$0xff]
  %v55 = vld [vmem:[%s1 + $0xd0] sm:$0xff]
  %v56 = vld [vmem:[%s1 + $0xd8] sm:$0xff]
  %v57 = vld [vmem:[%s1 + $0xe0] sm:$0xff]
  %v58 = vld [vmem:[%s1 + $0xe8] sm:$0xff]
  %v59 = vld [vmem:[%s1 + $0xf0] sm:$0xff]
  %v60 = vld [vmem:[%s1 + $0xf8] sm:$0xff]
  %v61 = vld [vmem:[%s2] sm:$0xff]
  %v62 = vld [vmem:[%s2 + $0x8] sm:$0xff]
  %v65 = vlaneseq
  %v66 = vshrl.u32 %v65, 7
  %v67 = vsub.s32 0, %v66
  %v68 = vrot.slane %v61, %v67
  %v69 = vlaneseq
  %v70 = vshrl.u32 %v69, 7
  %v71 = vsub.s32 1, %v70
  %v72 = vrot.slane %v61, %v71
  %v73 = vlaneseq
  %v74 = vshrl.u32 %v73, 7
  %v75 = vsub.s32 2, %v74
  %v76 = vrot.slane %v61, %v75
  %v77 = vlaneseq
  %v78 = vshrl.u32 %v77, 7
  %v79 = vsub.s32 3, %v78
  %v80 = vrot.slane %v61, %v79
  %v81 = vlaneseq
  %v82 = vshrl.u32 %v81, 7
  %v83 = vsub.s32 4, %v82
  %v84 = vrot.slane %v61, %v83
  %v85 = vlaneseq
  %v86 = vshrl.u32 %v85, 7
  %v87 = vsub.s32 5, %v86
  %v88 = vrot.slane %v61, %v87
  %v89 = vlaneseq
  %v90 = vshrl.u32 %v89, 7
  %v91 = vsub.s32 6, %v90
  %v92 = vrot.slane %v61, %v91
  %v93 = vlaneseq
  %v94 = vshrl.u32 %v93, 7
  %v95 = vsub.s32 7, %v94
  %v96 = vrot.slane %v61, %v95
  %v97 = vlaneseq
  %v98 = vshrl.u32 %v97, 7
  %v99 = vsub.s32 0, %v98
  %v100 = vrot.slane %v62, %v99
  %v101 = vlaneseq
  %v102 = vshrl.u32 %v101, 7
  %v103 = vsub.s32 1, %v102
  %v104 = vrot.slane %v62, %v103
  %v105 = vlaneseq
  %v106 = vshrl.u32 %v105, 7
  %v107 = vsub.s32 2, %v106
  %v108 = vrot.slane %v62, %v107
  %v109 = vlaneseq
  %v110 = vshrl.u32 %v109, 7
  %v111 = vsub.s32 3, %v110
  %v112 = vrot.slane %v62, %v111
  %v113 = vlaneseq
  %v114 = vshrl.u32 %v113, 7
  %v115 = vsub.s32 4, %v114
  %v116 = vrot.slane %v62, %v115
  %v117 = vlaneseq
  %v118 = vshrl.u32 %v117, 7
  %v119 = vsub.s32 5, %v118
  %v120 = vrot.slane %v62, %v119
  %v121 = vlaneseq
  %v122 = vshrl.u32 %v121, 7
  %v123 = vsub.s32 6, %v122
  %v124 = vrot.slane %v62, %v123
  %v125 = vlaneseq
  %v126 = vshrl.u32 %v125, 7
  %v127 = vsub.s32 7, %v126
  %v128 = vrot.slane %v62, %v127
  %v147 = vunpack.c.l.b16 %v27
  %v148 = vunpack.c.l.b16 %v28
  %v149 = vpack.c.b16 %v148, %v147
  %v182 = vunpack.c.l.b16 %v29
  %v183 = vunpack.c.h.b16 %v29
  %v184 = vunpack.c.l.b16 %v30
  %v185 = vunpack.c.h.b16 %v30
  %v186 = vunpack.c.l.b16 %v31
  %v187 = vunpack.c.h.b16 %v31
  %v188 = vunpack.c.l.b16 %v32
  %v189 = vunpack.c.h.b16 %v32
  %v190 = vunpack.c.l.b16 %v33
  %v191 = vunpack.c.h.b16 %v33
  %v192 = vunpack.c.l.b16 %v34
  %v193 = vunpack.c.h.b16 %v34
  %v194 = vunpack.c.l.b16 %v35
  %v195 = vunpack.c.h.b16 %v35
  %v196 = vunpack.c.l.b16 %v36
  %v197 = vunpack.c.h.b16 %v36
  %v198 = vunpack.c.l.b16 %v37
  %v199 = vunpack.c.h.b16 %v37
  %v200 = vunpack.c.l.b16 %v38
  %v201 = vunpack.c.h.b16 %v38
  %v202 = vunpack.c.l.b16 %v39
  %v203 = vunpack.c.h.b16 %v39
  %v204 = vunpack.c.l.b16 %v40
  %v205 = vunpack.c.h.b16 %v40
  %v206 = vunpack.c.l.b16 %v41
  %v207 = vunpack.c.h.b16 %v41
  %v208 = vunpack.c.l.b16 %v42
  %v209 = vunpack.c.h.b16 %v42
  %v210 = vunpack.c.l.b16 %v43
  %v211 = vunpack.c.h.b16 %v43
  %v212 = vunpack.c.l.b16 %v44
  %v213 = vunpack.c.h.b16 %v44
  %v214 = vunpack.c.l.b16 %v45
  %v215 = vunpack.c.h.b16 %v45
  %v216 = vunpack.c.l.b16 %v46
  %v217 = vunpack.c.h.b16 %v46
  %v218 = vunpack.c.l.b16 %v47
  %v219 = vunpack.c.h.b16 %v47
  %v220 = vunpack.c.l.b16 %v48
  %v221 = vunpack.c.h.b16 %v48
  %v222 = vunpack.c.l.b16 %v49
  %v223 = vunpack.c.h.b16 %v49
  %v224 = vunpack.c.l.b16 %v50
  %v225 = vunpack.c.h.b16 %v50
  %v226 = vunpack.c.l.b16 %v51
  %v227 = vunpack.c.h.b16 %v51
  %v228 = vunpack.c.l.b16 %v52
  %v229 = vunpack.c.h.b16 %v52
  %v230 = vunpack.c.l.b16 %v53
  %v231 = vunpack.c.h.b16 %v53
  %v232 = vunpack.c.l.b16 %v54
  %v233 = vunpack.c.h.b16 %v54
  %v234 = vunpack.c.l.b16 %v55
  %v235 = vunpack.c.h.b16 %v55
  %v236 = vunpack.c.l.b16 %v56
  %v237 = vunpack.c.h.b16 %v56
  %v238 = vunpack.c.l.b16 %v57
  %v239 = vunpack.c.h.b16 %v57
  %v240 = vunpack.c.l.b16 %v58
  %v241 = vunpack.c.h.b16 %v58
  %v242 = vunpack.c.l.b16 %v59
  %v243 = vunpack.c.h.b16 %v59
  %v244 = vunpack.c.l.b16 %v60
  %v245 = vunpack.c.h.b16 %v60
  %v246 = vpack.c.b16 %v198, %v182
  %v247 = vpack.c.b16 %v199, %v183
  %v248 = vpack.c.b16 %v200, %v184
  %v249 = vpack.c.b16 %v201, %v185
  %v250 = vpack.c.b16 %v202, %v186
  %v251 = vpack.c.b16 %v203, %v187
  %v252 = vpack.c.b16 %v204, %v188
  %v253 = vpack.c.b16 %v205, %v189
  %v254 = vpack.c.b16 %v206, %v190
  %v255 = vpack.c.b16 %v207, %v191
  %v256 = vpack.c.b16 %v208, %v192
  %v257 = vpack.c.b16 %v209, %v193
  %v258 = vpack.c.b16 %v210, %v194
  %v259 = vpack.c.b16 %v211, %v195
  %v260 = vpack.c.b16 %v212, %v196
  %v261 = vpack.c.b16 %v213, %v197
  %v262 = vpack.c.b16 %v230, %v214
  %v263 = vpack.c.b16 %v231, %v215
  %v264 = vpack.c.b16 %v232, %v216
  %v265 = vpack.c.b16 %v233, %v217
  %v266 = vpack.c.b16 %v234, %v218
  %v267 = vpack.c.b16 %v235, %v219
  %v268 = vpack.c.b16 %v236, %v220
  %v269 = vpack.c.b16 %v237, %v221
  %v270 = vpack.c.b16 %v238, %v222
  %v271 = vpack.c.b16 %v239, %v223
  %v272 = vpack.c.b16 %v240, %v224
  %v273 = vpack.c.b16 %v241, %v225
  %v274 = vpack.c.b16 %v242, %v226
  %v275 = vpack.c.b16 %v243, %v227
  %v276 = vpack.c.b16 %v244, %v228
  %v277 = vpack.c.b16 %v245, %v229
  %vm310 = vcmask 261120
  %v312 = vsel %vm310, %v149, 0
  %314 = vmatprep.subr.bf16.mxu0 %v247
  %315 = vmatpush1.bf16.msra.mxu0 %v246
  %316 = vmatprep.subr.bf16.mxu0 %v263
  %317 = vmatpush1.bf16.msra.mxu0 %v262
  %318 = vmatprep.subr.bf16.mxu0 0
  %319 = vmatpush1.bf16.msra.mxu0 0
  %320 = vmatprep.subr.bf16.mxu0 0
  %321 = vmatpush1.bf16.msra.mxu0 0
  %322 = vmatprep.subr.bf16.mxu0 0
  %323 = vmatpush1.bf16.msra.mxu0 0
  %324 = vmatprep.subr.bf16.mxu0 0
  %325 = vmatpush1.bf16.msra.mxu0 0
  %326 = vmatprep.subr.bf16.mxu0 0
  %327 = vmatpush1.bf16.msra.mxu0 0
  %328 = vmatprep.subr.bf16.mxu0 0
  %329 = vmatpush1.bf16.msra.mxu0 0
  %330 = vmatprep.subr.bf16.mxu0 0
  %331 = vmatpush1.bf16.msra.mxu0 0
  %332 = vmatprep.subr.bf16.mxu0 0
  %333 = vmatpush1.bf16.msra.mxu0 0
  %334 = vmatprep.subr.bf16.mxu0 0
  %335 = vmatpush1.bf16.msra.mxu0 0
  %336 = vmatprep.subr.bf16.mxu0 0
  %337 = vmatpush1.bf16.msra.mxu0 0
  %338 = vmatprep.subr.bf16.mxu0 0
  %339 = vmatpush1.bf16.msra.mxu0 0
  %340 = vmatprep.subr.bf16.mxu0 0
  %341 = vmatpush1.bf16.msra.mxu0 0
  %342 = vmatprep.subr.bf16.mxu0 0
  %343 = vmatpush1.bf16.msra.mxu0 0
  %344 = vmatprep.subr.bf16.mxu0 0
  %345 = vmatpush1.bf16.msra.mxu0 0
  %346 = vmatprep.mubr.bf16.mxu0 0
  %347 = vmatmul.mubr.bf16.gmra.mrb[0].mxu0 %v312
  %v348 = vpop.f32.mrb[0].mxu0
  %v349 = vadd.f32 %v68, %v348
  %v350 = vpop.f32.mrb[0].mxu0
  %v351 = vadd.f32 %v72, %v350
  %v352 = vpop.f32.mrb[0].mxu0
  %v353 = vadd.f32 %v68, %v352
  %v354 = vpop.f32.mrb[0].mxu0
  %v355 = vadd.f32 %v72, %v354
  %356 = vdwg.mxu0
  %357 = vmatprep.subr.bf16.mxu0 %v249
  %358 = vmatpush1.bf16.msra.mxu0 %v248
  %359 = vmatprep.subr.bf16.mxu0 %v265
  %360 = vmatpush1.bf16.msra.mxu0 %v264
  %361 = vmatprep.subr.bf16.mxu0 0
  %362 = vmatpush1.bf16.msra.mxu0 0
  %363 = vmatprep.subr.bf16.mxu0 0
  %364 = vmatpush1.bf16.msra.mxu0 0
  %365 = vmatprep.subr.bf16.mxu0 0
  %366 = vmatpush1.bf16.msra.mxu0 0
  %367 = vmatprep.subr.bf16.mxu0 0
  %368 = vmatpush1.bf16.msra.mxu0 0
  %369 = vmatprep.subr.bf16.mxu0 0
  %370 = vmatpush1.bf16.msra.mxu0 0
  %371 = vmatprep.subr.bf16.mxu0 0
  %372 = vmatpush1.bf16.msra.mxu0 0
  %373 = vmatprep.subr.bf16.mxu0 0
  %374 = vmatpush1.bf16.msra.mxu0 0
  %375 = vmatprep.subr.bf16.mxu0 0
  %376 = vmatpush1.bf16.msra.mxu0 0
  %377 = vmatprep.subr.bf16.mxu0 0
  %378 = vmatpush1.bf16.msra.mxu0 0
  %379 = vmatprep.subr.bf16.mxu0 0
  %380 = vmatpush1.bf16.msra.mxu0 0
  %381 = vmatprep.subr.bf16.mxu0 0
  %382 = vmatpush1.bf16.msra.mxu0 0
  %383 = vmatprep.subr.bf16.mxu0 0
  %384 = vmatpush1.bf16.msra.mxu0 0
  %385 = vmatprep.subr.bf16.mxu0 0
  %386 = vmatpush1.bf16.msra.mxu0 0
  %387 = vmatprep.subr.bf16.mxu0 0
  %388 = vmatpush1.bf16.msra.mxu0 0
  %389 = vmatprep.mubr.bf16.mxu0 0
  %390 = vmatmul.mubr.bf16.gmra.mrb[0].mxu0 %v312
  %v391 = vpop.f32.mrb[0].mxu0
  %v392 = vadd.f32 %v76, %v391
  %v393 = vpop.f32.mrb[0].mxu0
  %v394 = vadd.f32 %v80, %v393
  %v395 = vpop.f32.mrb[0].mxu0
  %v396 = vadd.f32 %v76, %v395
  %v397 = vpop.f32.mrb[0].mxu0
  %v398 = vadd.f32 %v80, %v397
  %399 = vdwg.mxu0
  %400 = vmatprep.subr.bf16.mxu0 %v251
  %401 = vmatpush1.bf16.msra.mxu0 %v250
  %402 = vmatprep.subr.bf16.mxu0 %v267
  %403 = vmatpush1.bf16.msra.mxu0 %v266
  %404 = vmatprep.subr.bf16.mxu0 0
  %405 = vmatpush1.bf16.msra.mxu0 0
  %406 = vmatprep.subr.bf16.mxu0 0
  %407 = vmatpush1.bf16.msra.mxu0 0
  %408 = vmatprep.subr.bf16.mxu0 0
  %409 = vmatpush1.bf16.msra.mxu0 0
  %410 = vmatprep.subr.bf16.mxu0 0
  %411 = vmatpush1.bf16.msra.mxu0 0
  %412 = vmatprep.subr.bf16.mxu0 0
  %413 = vmatpush1.bf16.msra.mxu0 0
  %414 = vmatprep.subr.bf16.mxu0 0
  %415 = vmatpush1.bf16.msra.mxu0 0
  %416 = vmatprep.subr.bf16.mxu0 0
  %417 = vmatpush1.bf16.msra.mxu0 0
  %418 = vmatprep.subr.bf16.mxu0 0
  %419 = vmatpush1.bf16.msra.mxu0 0
  %420 = vmatprep.subr.bf16.mxu0 0
  %421 = vmatpush1.bf16.msra.mxu0 0
  %422 = vmatprep.subr.bf16.mxu0 0
  %423 = vmatpush1.bf16.msra.mxu0 0
  %424 = vmatprep.subr.bf16.mxu0 0
  %425 = vmatpush1.bf16.msra.mxu0 0
  %426 = vmatprep.subr.bf16.mxu0 0
  %427 = vmatpush1.bf16.msra.mxu0 0
  %428 = vmatprep.subr.bf16.mxu0 0
  %429 = vmatpush1.bf16.msra.mxu0 0
  %430 = vmatprep.subr.bf16.mxu0 0
  %431 = vmatpush1.bf16.msra.mxu0 0
  %432 = vmatprep.mubr.bf16.mxu0 0
  %433 = vmatmul.mubr.bf16.gmra.mrb[0].mxu0 %v312
  %v434 = vpop.f32.mrb[0].mxu0
  %v435 = vadd.f32 %v84, %v434
  %v436 = vpop.f32.mrb[0].mxu0
  %v437 = vadd.f32 %v88, %v436
  %v438 = vpop.f32.mrb[0].mxu0
  %v439 = vadd.f32 %v84, %v438
  %v440 = vpop.f32.mrb[0].mxu0
  %v441 = vadd.f32 %v88, %v440
  %442 = vdwg.mxu0
  %443 = vmatprep.subr.bf16.mxu0 %v253
  %444 = vmatpush1.bf16.msra.mxu0 %v252
  %445 = vmatprep.subr.bf16.mxu0 %v269
  %446 = vmatpush1.bf16.msra.mxu0 %v268
  %447 = vmatprep.subr.bf16.mxu0 0
  %448 = vmatpush1.bf16.msra.mxu0 0
  %449 = vmatprep.subr.bf16.mxu0 0
  %450 = vmatpush1.bf16.msra.mxu0 0
  %451 = vmatprep.subr.bf16.mxu0 0
  %452 = vmatpush1.bf16.msra.mxu0 0
  %453 = vmatprep.subr.bf16.mxu0 0
  %454 = vmatpush1.bf16.msra.mxu0 0
  %455 = vmatprep.subr.bf16.mxu0 0
  %456 = vmatpush1.bf16.msra.mxu0 0
  %457 = vmatprep.subr.bf16.mxu0 0
  %458 = vmatpush1.bf16.msra.mxu0 0
  %459 = vmatprep.subr.bf16.mxu0 0
  %460 = vmatpush1.bf16.msra.mxu0 0
  %461 = vmatprep.subr.bf16.mxu0 0
  %462 = vmatpush1.bf16.msra.mxu0 0
  %463 = vmatprep.subr.bf16.mxu0 0
  %464 = vmatpush1.bf16.msra.mxu0 0
  %465 = vmatprep.subr.bf16.mxu0 0
  %466 = vmatpush1.bf16.msra.mxu0 0
  %467 = vmatprep.subr.bf16.mxu0 0
  %468 = vmatpush1.bf16.msra.mxu0 0
  %469 = vmatprep.subr.bf16.mxu0 0
  %470 = vmatpush1.bf16.msra.mxu0 0
  %471 = vmatprep.subr.bf16.mxu0 0
  %472 = vmatpush1.bf16.msra.mxu0 0
  %473 = vmatprep.subr.bf16.mxu0 0
  %474 = vmatpush1.bf16.msra.mxu0 0
  %475 = vmatprep.mubr.bf16.mxu0 0
  %476 = vmatmul.mubr.bf16.gmra.mrb[0].mxu0 %v312
  %v477 = vpop.f32.mrb[0].mxu0
  %v478 = vadd.f32 %v92, %v477
  %v479 = vpop.f32.mrb[0].mxu0
  %v480 = vadd.f32 %v96, %v479
  %v481 = vpop.f32.mrb[0].mxu0
  %v482 = vadd.f32 %v92, %v481
  %v483 = vpop.f32.mrb[0].mxu0
  %v484 = vadd.f32 %v96, %v483
  %485 = vdwg.mxu0
  %486 = vmatprep.subr.bf16.mxu0 %v255
  %487 = vmatpush1.bf16.msra.mxu0 %v254
  %488 = vmatprep.subr.bf16.mxu0 %v271
  %489 = vmatpush1.bf16.msra.mxu0 %v270
  %490 = vmatprep.subr.bf16.mxu0 0
  %491 = vmatpush1.bf16.msra.mxu0 0
  %492 = vmatprep.subr.bf16.mxu0 0
  %493 = vmatpush1.bf16.msra.mxu0 0
  %494 = vmatprep.subr.bf16.mxu0 0
  %495 = vmatpush1.bf16.msra.mxu0 0
  %496 = vmatprep.subr.bf16.mxu0 0
  %497 = vmatpush1.bf16.msra.mxu0 0
  %498 = vmatprep.subr.bf16.mxu0 0
  %499 = vmatpush1.bf16.msra.mxu0 0
  %500 = vmatprep.subr.bf16.mxu0 0
  %501 = vmatpush1.bf16.msra.mxu0 0
  %502 = vmatprep.subr.bf16.mxu0 0
  %503 = vmatpush1.bf16.msra.mxu0 0
  %504 = vmatprep.subr.bf16.mxu0 0
  %505 = vmatpush1.bf16.msra.mxu0 0
  %506 = vmatprep.subr.bf16.mxu0 0
  %507 = vmatpush1.bf16.msra.mxu0 0
  %508 = vmatprep.subr.bf16.mxu0 0
  %509 = vmatpush1.bf16.msra.mxu0 0
  %510 = vmatprep.subr.bf16.mxu0 0
  %511 = vmatpush1.bf16.msra.mxu0 0
  %512 = vmatprep.subr.bf16.mxu0 0
  %513 = vmatpush1.bf16.msra.mxu0 0
  %514 = vmatprep.subr.bf16.mxu0 0
  %515 = vmatpush1.bf16.msra.mxu0 0
  %516 = vmatprep.subr.bf16.mxu0 0
  %517 = vmatpush1.bf16.msra.mxu0 0
  %518 = vmatprep.mubr.bf16.mxu0 0
  %519 = vmatmul.mubr.bf16.gmra.mrb[0].mxu0 %v312
  %v520 = vpop.f32.mrb[0].mxu0
  %v521 = vadd.f32 %v100, %v520
  %v522 = vpop.f32.mrb[0].mxu0
  %v523 = vadd.f32 %v104, %v522
  %v524 = vpop.f32.mrb[0].mxu0
  %v525 = vadd.f32 %v100, %v524
  %v526 = vpop.f32.mrb[0].mxu0
  %v527 = vadd.f32 %v104, %v526
  %528 = vdwg.mxu0
  %529 = vmatprep.subr.bf16.mxu0 %v257
  %530 = vmatpush1.bf16.msra.mxu0 %v256
  %531 = vmatprep.subr.bf16.mxu0 %v273
  %532 = vmatpush1.bf16.msra.mxu0 %v272
  %533 = vmatprep.subr.bf16.mxu0 0
  %534 = vmatpush1.bf16.msra.mxu0 0
  %535 = vmatprep.subr.bf16.mxu0 0
  %536 = vmatpush1.bf16.msra.mxu0 0
  %537 = vmatprep.subr.bf16.mxu0 0
  %538 = vmatpush1.bf16.msra.mxu0 0
  %539 = vmatprep.subr.bf16.mxu0 0
  %540 = vmatpush1.bf16.msra.mxu0 0
  %541 = vmatprep.subr.bf16.mxu0 0
  %542 = vmatpush1.bf16.msra.mxu0 0
  %543 = vmatprep.subr.bf16.mxu0 0
  %544 = vmatpush1.bf16.msra.mxu0 0
  %545 = vmatprep.subr.bf16.mxu0 0
  %546 = vmatpush1.bf16.msra.mxu0 0
  %547 = vmatprep.subr.bf16.mxu0 0
  %548 = vmatpush1.bf16.msra.mxu0 0
  %549 = vmatprep.subr.bf16.mxu0 0
  %550 = vmatpush1.bf16.msra.mxu0 0
  %551 = vmatprep.subr.bf16.mxu0 0
  %552 = vmatpush1.bf16.msra.mxu0 0
  %553 = vmatprep.subr.bf16.mxu0 0
  %554 = vmatpush1.bf16.msra.mxu0 0
  %555 = vmatprep.subr.bf16.mxu0 0
  %556 = vmatpush1.bf16.msra.mxu0 0
  %557 = vmatprep.subr.bf16.mxu0 0
  %558 = vmatpush1.bf16.msra.mxu0 0
  %559 = vmatprep.subr.bf16.mxu0 0
  %560 = vmatpush1.bf16.msra.mxu0 0
  %561 = vmatprep.mubr.bf16.mxu0 0
  %562 = vmatmul.mubr.bf16.gmra.mrb[0].mxu0 %v312
  %v563 = vpop.f32.mrb[0].mxu0
  %v564 = vadd.f32 %v108, %v563
  %v565 = vpop.f32.mrb[0].mxu0
  %v566 = vadd.f32 %v112, %v565
  %v567 = vpop.f32.mrb[0].mxu0
  %v568 = vadd.f32 %v108, %v567
  %v569 = vpop.f32.mrb[0].mxu0
  %v570 = vadd.f32 %v112, %v569
  %571 = vdwg.mxu0
  %572 = vmatprep.subr.bf16.mxu0 %v259
  %573 = vmatpush1.bf16.msra.mxu0 %v258
  %574 = vmatprep.subr.bf16.mxu0 %v275
  %575 = vmatpush1.bf16.msra.mxu0 %v274
  %576 = vmatprep.subr.bf16.mxu0 0
  %577 = vmatpush1.bf16.msra.mxu0 0
  %578 = vmatprep.subr.bf16.mxu0 0
  %579 = vmatpush1.bf16.msra.mxu0 0
  %580 = vmatprep.subr.bf16.mxu0 0
  %581 = vmatpush1.bf16.msra.mxu0 0
  %582 = vmatprep.subr.bf16.mxu0 0
  %583 = vmatpush1.bf16.msra.mxu0 0
  %584 = vmatprep.subr.bf16.mxu0 0
  %585 = vmatpush1.bf16.msra.mxu0 0
  %586 = vmatprep.subr.bf16.mxu0 0
  %587 = vmatpush1.bf16.msra.mxu0 0
  %588 = vmatprep.subr.bf16.mxu0 0
  %589 = vmatpush1.bf16.msra.mxu0 0
  %590 = vmatprep.subr.bf16.mxu0 0
  %591 = vmatpush1.bf16.msra.mxu0 0
  %592 = vmatprep.subr.bf16.mxu0 0
  %593 = vmatpush1.bf16.msra.mxu0 0
  %594 = vmatprep.subr.bf16.mxu0 0
  %595 = vmatpush1.bf16.msra.mxu0 0
  %596 = vmatprep.subr.bf16.mxu0 0
  %597 = vmatpush1.bf16.msra.mxu0 0
  %598 = vmatprep.subr.bf16.mxu0 0
  %599 = vmatpush1.bf16.msra.mxu0 0
  %600 = vmatprep.subr.bf16.mxu0 0
  %601 = vmatpush1.bf16.msra.mxu0 0
  %602 = vmatprep.subr.bf16.mxu0 0
  %603 = vmatpush1.bf16.msra.mxu0 0
  %604 = vmatprep.mubr.bf16.mxu0 0
  %605 = vmatmul.mubr.bf16.gmra.mrb[0].mxu0 %v312
  %v606 = vpop.f32.mrb[0].mxu0
  %v607 = vadd.f32 %v116, %v606
  %v608 = vpop.f32.mrb[0].mxu0
  %v609 = vadd.f32 %v120, %v608
  %v610 = vpop.f32.mrb[0].mxu0
  %v611 = vadd.f32 %v116, %v610
  %v612 = vpop.f32.mrb[0].mxu0
  %v613 = vadd.f32 %v120, %v612
  %614 = vdwg.mxu0
  %615 = vmatprep.subr.bf16.mxu0 %v261
  %616 = vmatpush1.bf16.msra.mxu0 %v260
  %617 = vmatprep.subr.bf16.mxu0 %v277
  %618 = vmatpush1.bf16.msra.mxu0 %v276
  %619 = vmatprep.subr.bf16.mxu0 0
  %620 = vmatpush1.bf16.msra.mxu0 0
  %621 = vmatprep.subr.bf16.mxu0 0
  %622 = vmatpush1.bf16.msra.mxu0 0
  %623 = vmatprep.subr.bf16.mxu0 0
  %624 = vmatpush1.bf16.msra.mxu0 0
  %625 = vmatprep.subr.bf16.mxu0 0
  %626 = vmatpush1.bf16.msra.mxu0 0
  %627 = vmatprep.subr.bf16.mxu0 0
  %628 = vmatpush1.bf16.msra.mxu0 0
  %629 = vmatprep.subr.bf16.mxu0 0
  %630 = vmatpush1.bf16.msra.mxu0 0
  %631 = vmatprep.subr.bf16.mxu0 0
  %632 = vmatpush1.bf16.msra.mxu0 0
  %633 = vmatprep.subr.bf16.mxu0 0
  %634 = vmatpush1.bf16.msra.mxu0 0
  %635 = vmatprep.subr.bf16.mxu0 0
  %636 = vmatpush1.bf16.msra.mxu0 0
  %637 = vmatprep.subr.bf16.mxu0 0
  %638 = vmatpush1.bf16.msra.mxu0 0
  %639 = vmatprep.subr.bf16.mxu0 0
  %640 = vmatpush1.bf16.msra.mxu0 0
  %641 = vmatprep.subr.bf16.mxu0 0
  %642 = vmatpush1.bf16.msra.mxu0 0
  %643 = vmatprep.subr.bf16.mxu0 0
  %644 = vmatpush1.bf16.msra.mxu0 0
  %645 = vmatprep.subr.bf16.mxu0 0
  %646 = vmatpush1.bf16.msra.mxu0 0
  %647 = vmatprep.mubr.bf16.mxu0 0
  %648 = vmatmul.mubr.bf16.gmra.mrb[0].mxu0 %v312
  %v649 = vpop.f32.mrb[0].mxu0
  %v650 = vadd.f32 %v124, %v649
  %v651 = vpop.f32.mrb[0].mxu0
  %v652 = vadd.f32 %v128, %v651
  %v653 = vpop.f32.mrb[0].mxu0
  %v654 = vadd.f32 %v124, %v653
  %v655 = vpop.f32.mrb[0].mxu0
  %v656 = vadd.f32 %v128, %v655
  %657 = vdwg.mxu0
  %v658 = vmax.f32 %v349, 0.0
  %v659 = vmax.f32 %v351, 0.0
  %v660 = vmax.f32 %v392, 0.0
  %v661 = vmax.f32 %v394, 0.0
  %v662 = vmax.f32 %v435, 0.0
  %v663 = vmax.f32 %v437, 0.0
  %v664 = vmax.f32 %v478, 0.0
  %v665 = vmax.f32 %v480, 0.0
  %v666 = vmax.f32 %v521, 0.0
  %v667 = vmax.f32 %v523, 0.0
  %v668 = vmax.f32 %v564, 0.0
  %v669 = vmax.f32 %v566, 0.0
  %v670 = vmax.f32 %v607, 0.0
  %v671 = vmax.f32 %v609, 0.0
  %v672 = vmax.f32 %v650, 0.0
  %v673 = vmax.f32 %v652, 0.0
  %v674 = vmax.f32 %v353, 0.0
  %v675 = vmax.f32 %v355, 0.0
  %v676 = vmax.f32 %v396, 0.0
  %v677 = vmax.f32 %v398, 0.0
  %v678 = vmax.f32 %v439, 0.0
  %v679 = vmax.f32 %v441, 0.0
  %v680 = vmax.f32 %v482, 0.0
  %v681 = vmax.f32 %v484, 0.0
  %v682 = vmax.f32 %v525, 0.0
  %v683 = vmax.f32 %v527, 0.0
  %v684 = vmax.f32 %v568, 0.0
  %v685 = vmax.f32 %v570, 0.0
  %v686 = vmax.f32 %v611, 0.0
  %v687 = vmax.f32 %v613, 0.0
  %v688 = vmax.f32 %v654, 0.0
  %v689 = vmax.f32 %v656, 0.0
  %v690 = vpack.c.bf16 %v674, %v658
  %v691 = vpack.c.bf16 %v675, %v659
  %v692 = vpack.c.bf16 %v676, %v660
  %v693 = vpack.c.bf16 %v677, %v661
  %v694 = vpack.c.bf16 %v678, %v662
  %v695 = vpack.c.bf16 %v679, %v663
  %v696 = vpack.c.bf16 %v680, %v664
  %v697 = vpack.c.bf16 %v681, %v665
  %v698 = vpack.c.bf16 %v682, %v666
  %v699 = vpack.c.bf16 %v683, %v667
  %v700 = vpack.c.bf16 %v684, %v668
  %v701 = vpack.c.bf16 %v685, %v669
  %v702 = vpack.c.bf16 %v686, %v670
  %v703 = vpack.c.bf16 %v687, %v671
  %v704 = vpack.c.bf16 %v688, %v672
  %v705 = vpack.c.bf16 %v689, %v673
  %v706 = vld [vmem:[%s3] sm:$0xf]
  %v707 = vld [vmem:[%s3 + $0x4] sm:$0xf]
  %v708 = vld [vmem:[%s3 + $0x8] sm:$0xf]
  %v709 = vld [vmem:[%s3 + $0xc] sm:$0xf]
  %v710 = vld [vmem:[%s3 + $0x10] sm:$0xf]
  %v711 = vld [vmem:[%s3 + $0x14] sm:$0xf]
  %v712 = vld [vmem:[%s3 + $0x18] sm:$0xf]
  %v713 = vld [vmem:[%s3 + $0x1c] sm:$0xf]
  %v714 = vld [vmem:[%s3 + $0x20] sm:$0xf]
  %v715 = vld [vmem:[%s3 + $0x24] sm:$0xf]
  %v716 = vld [vmem:[%s3 + $0x28] sm:$0xf]
  %v717 = vld [vmem:[%s3 + $0x2c] sm:$0xf]
  %v718 = vld [vmem:[%s3 + $0x30] sm:$0xf]
  %v719 = vld [vmem:[%s3 + $0x34] sm:$0xf]
  %v720 = vld [vmem:[%s3 + $0x38] sm:$0xf]
  %v721 = vld [vmem:[%s3 + $0x3c] sm:$0xf]
  %v722 = vld [vmem:[%s3 + $0x40] sm:$0xf]
  %v723 = vld [vmem:[%s3 + $0x44] sm:$0xf]
  %v724 = vld [vmem:[%s3 + $0x48] sm:$0xf]
  %v725 = vld [vmem:[%s3 + $0x4c] sm:$0xf]
  %v726 = vld [vmem:[%s3 + $0x50] sm:$0xf]
  %v727 = vld [vmem:[%s3 + $0x54] sm:$0xf]
  %v728 = vld [vmem:[%s3 + $0x58] sm:$0xf]
  %v729 = vld [vmem:[%s3 + $0x5c] sm:$0xf]
  %v730 = vld [vmem:[%s3 + $0x60] sm:$0xf]
  %v731 = vld [vmem:[%s3 + $0x64] sm:$0xf]
  %v732 = vld [vmem:[%s3 + $0x68] sm:$0xf]
  %v733 = vld [vmem:[%s3 + $0x6c] sm:$0xf]
  %v734 = vld [vmem:[%s3 + $0x70] sm:$0xf]
  %v735 = vld [vmem:[%s3 + $0x74] sm:$0xf]
  %v736 = vld [vmem:[%s3 + $0x78] sm:$0xf]
  %v737 = vld [vmem:[%s3 + $0x7c] sm:$0xf]
  %v738 = vld [vmem:[%s3 + $0x80] sm:$0xf]
  %v739 = vld [vmem:[%s3 + $0x84] sm:$0xf]
  %v740 = vld [vmem:[%s3 + $0x88] sm:$0xf]
  %v741 = vld [vmem:[%s3 + $0x8c] sm:$0xf]
  %v742 = vld [vmem:[%s3 + $0x90] sm:$0xf]
  %v743 = vld [vmem:[%s3 + $0x94] sm:$0xf]
  %v744 = vld [vmem:[%s3 + $0x98] sm:$0xf]
  %v745 = vld [vmem:[%s3 + $0x9c] sm:$0xf]
  %v746 = vld [vmem:[%s3 + $0xa0] sm:$0xf]
  %v747 = vld [vmem:[%s3 + $0xa4] sm:$0xf]
  %v748 = vld [vmem:[%s3 + $0xa8] sm:$0xf]
  %v749 = vld [vmem:[%s3 + $0xac] sm:$0xf]
  %v750 = vld [vmem:[%s3 + $0xb0] sm:$0xf]
  %v751 = vld [vmem:[%s3 + $0xb4] sm:$0xf]
  %v752 = vld [vmem:[%s3 + $0xb8] sm:$0xf]
  %v753 = vld [vmem:[%s3 + $0xbc] sm:$0xf]
  %v754 = vld [vmem:[%s3 + $0xc0] sm:$0xf]
  %v755 = vld [vmem:[%s3 + $0xc4] sm:$0xf]
  %v756 = vld [vmem:[%s3 + $0xc8] sm:$0xf]
  %v757 = vld [vmem:[%s3 + $0xcc] sm:$0xf]
  %v758 = vld [vmem:[%s3 + $0xd0] sm:$0xf]
  %v759 = vld [vmem:[%s3 + $0xd4] sm:$0xf]
  %v760 = vld [vmem:[%s3 + $0xd8] sm:$0xf]
  %v761 = vld [vmem:[%s3 + $0xdc] sm:$0xf]
  %v762 = vld [vmem:[%s3 + $0xe0] sm:$0xf]
  %v763 = vld [vmem:[%s3 + $0xe4] sm:$0xf]
  %v764 = vld [vmem:[%s3 + $0xe8] sm:$0xf]
  %v765 = vld [vmem:[%s3 + $0xec] sm:$0xf]
  %v766 = vld [vmem:[%s3 + $0xf0] sm:$0xf]
  %v767 = vld [vmem:[%s3 + $0xf4] sm:$0xf]
  %v768 = vld [vmem:[%s3 + $0xf8] sm:$0xf]
  %v769 = vld [vmem:[%s3 + $0xfc] sm:$0xf]
  %v770 = vld [vmem:[%s3 + $0x100] sm:$0xf]
  %v771 = vld [vmem:[%s3 + $0x104] sm:$0xf]
  %v772 = vld [vmem:[%s3 + $0x108] sm:$0xf]
  %v773 = vld [vmem:[%s3 + $0x10c] sm:$0xf]
  %v774 = vld [vmem:[%s3 + $0x110] sm:$0xf]
  %v775 = vld [vmem:[%s3 + $0x114] sm:$0xf]
  %v776 = vld [vmem:[%s3 + $0x118] sm:$0xf]
  %v777 = vld [vmem:[%s3 + $0x11c] sm:$0xf]
  %v778 = vld [vmem:[%s3 + $0x120] sm:$0xf]
  %v779 = vld [vmem:[%s3 + $0x124] sm:$0xf]
  %v780 = vld [vmem:[%s3 + $0x128] sm:$0xf]
  %v781 = vld [vmem:[%s3 + $0x12c] sm:$0xf]
  %v782 = vld [vmem:[%s3 + $0x130] sm:$0xf]
  %v783 = vld [vmem:[%s3 + $0x134] sm:$0xf]
  %v784 = vld [vmem:[%s3 + $0x138] sm:$0xf]
  %v785 = vld [vmem:[%s3 + $0x13c] sm:$0xf]
  %v786 = vld [vmem:[%s3 + $0x140] sm:$0xf]
  %v787 = vld [vmem:[%s3 + $0x144] sm:$0xf]
  %v788 = vld [vmem:[%s3 + $0x148] sm:$0xf]
  %v789 = vld [vmem:[%s3 + $0x14c] sm:$0xf]
  %v790 = vld [vmem:[%s3 + $0x150] sm:$0xf]
  %v791 = vld [vmem:[%s3 + $0x154] sm:$0xf]
  %v792 = vld [vmem:[%s3 + $0x158] sm:$0xf]
  %v793 = vld [vmem:[%s3 + $0x15c] sm:$0xf]
  %v794 = vld [vmem:[%s3 + $0x160] sm:$0xf]
  %v795 = vld [vmem:[%s3 + $0x164] sm:$0xf]
  %v796 = vld [vmem:[%s3 + $0x168] sm:$0xf]
  %v797 = vld [vmem:[%s3 + $0x16c] sm:$0xf]
  %v798 = vld [vmem:[%s3 + $0x170] sm:$0xf]
  %v799 = vld [vmem:[%s3 + $0x174] sm:$0xf]
  %v800 = vld [vmem:[%s3 + $0x178] sm:$0xf]
  %v801 = vld [vmem:[%s3 + $0x17c] sm:$0xf]
  %v802 = vld [vmem:[%s3 + $0x180] sm:$0xf]
  %v803 = vld [vmem:[%s3 + $0x184] sm:$0xf]
  %v804 = vld [vmem:[%s3 + $0x188] sm:$0xf]
  %v805 = vld [vmem:[%s3 + $0x18c] sm:$0xf]
  %v806 = vld [vmem:[%s3 + $0x190] sm:$0xf]
  %v807 = vld [vmem:[%s3 + $0x194] sm:$0xf]
  %v808 = vld [vmem:[%s3 + $0x198] sm:$0xf]
  %v809 = vld [vmem:[%s3 + $0x19c] sm:$0xf]
  %v810 = vld [vmem:[%s3 + $0x1a0] sm:$0xf]
  %v811 = vld [vmem:[%s3 + $0x1a4] sm:$0xf]
  %v812 = vld [vmem:[%s3 + $0x1a8] sm:$0xf]
  %v813 = vld [vmem:[%s3 + $0x1ac] sm:$0xf]
  %v814 = vld [vmem:[%s3 + $0x1b0] sm:$0xf]
  %v815 = vld [vmem:[%s3 + $0x1b4] sm:$0xf]
  %v816 = vld [vmem:[%s3 + $0x1b8] sm:$0xf]
  %v817 = vld [vmem:[%s3 + $0x1bc] sm:$0xf]
  %v818 = vld [vmem:[%s3 + $0x1c0] sm:$0xf]
  %v819 = vld [vmem:[%s3 + $0x1c4] sm:$0xf]
  %v820 = vld [vmem:[%s3 + $0x1c8] sm:$0xf]
  %v821 = vld [vmem:[%s3 + $0x1cc] sm:$0xf]
  %v822 = vld [vmem:[%s3 + $0x1d0] sm:$0xf]
  %v823 = vld [vmem:[%s3 + $0x1d4] sm:$0xf]
  %v824 = vld [vmem:[%s3 + $0x1d8] sm:$0xf]
  %v825 = vld [vmem:[%s3 + $0x1dc] sm:$0xf]
  %v826 = vld [vmem:[%s3 + $0x1e0] sm:$0xf]
  %v827 = vld [vmem:[%s3 + $0x1e4] sm:$0xf]
  %v828 = vld [vmem:[%s3 + $0x1e8] sm:$0xf]
  %v829 = vld [vmem:[%s3 + $0x1ec] sm:$0xf]
  %v830 = vld [vmem:[%s3 + $0x1f0] sm:$0xf]
  %v831 = vld [vmem:[%s3 + $0x1f4] sm:$0xf]
  %v832 = vld [vmem:[%s3 + $0x1f8] sm:$0xf]
  %v833 = vld [vmem:[%s3 + $0x1fc] sm:$0xf]
  %v834 = vld [vmem:[%s3 + $0x200] sm:$0xf]
  %v835 = vld [vmem:[%s3 + $0x204] sm:$0xf]
  %v836 = vld [vmem:[%s3 + $0x208] sm:$0xf]
  %v837 = vld [vmem:[%s3 + $0x20c] sm:$0xf]
  %v838 = vld [vmem:[%s3 + $0x210] sm:$0xf]
  %v839 = vld [vmem:[%s3 + $0x214] sm:$0xf]
  %v840 = vld [vmem:[%s3 + $0x218] sm:$0xf]
  %v841 = vld [vmem:[%s3 + $0x21c] sm:$0xf]
  %v842 = vld [vmem:[%s3 + $0x220] sm:$0xf]
  %v843 = vld [vmem:[%s3 + $0x224] sm:$0xf]
  %v844 = vld [vmem:[%s3 + $0x228] sm:$0xf]
  %v845 = vld [vmem:[%s3 + $0x22c] sm:$0xf]
  %v846 = vld [vmem:[%s3 + $0x230] sm:$0xf]
  %v847 = vld [vmem:[%s3 + $0x234] sm:$0xf]
  %v848 = vld [vmem:[%s3 + $0x238] sm:$0xf]
  %v849 = vld [vmem:[%s3 + $0x23c] sm:$0xf]
  %v850 = vld [vmem:[%s3 + $0x240] sm:$0xf]
  %v851 = vld [vmem:[%s3 + $0x244] sm:$0xf]
  %v852 = vld [vmem:[%s3 + $0x248] sm:$0xf]
  %v853 = vld [vmem:[%s3 + $0x24c] sm:$0xf]
  %v854 = vld [vmem:[%s3 + $0x250] sm:$0xf]
  %v855 = vld [vmem:[%s3 + $0x254] sm:$0xf]
  %v856 = vld [vmem:[%s3 + $0x258] sm:$0xf]
  %v857 = vld [vmem:[%s3 + $0x25c] sm:$0xf]
  %v858 = vld [vmem:[%s3 + $0x260] sm:$0xf]
  %v859 = vld [vmem:[%s3 + $0x264] sm:$0xf]
  %v860 = vld [vmem:[%s3 + $0x268] sm:$0xf]
  %v861 = vld [vmem:[%s3 + $0x26c] sm:$0xf]
  %v862 = vld [vmem:[%s3 + $0x270] sm:$0xf]
  %v863 = vld [vmem:[%s3 + $0x274] sm:$0xf]
  %v864 = vld [vmem:[%s3 + $0x278] sm:$0xf]
  %v865 = vld [vmem:[%s3 + $0x27c] sm:$0xf]
  %v866 = vld [vmem:[%s3 + $0x280] sm:$0xf]
  %v867 = vld [vmem:[%s3 + $0x284] sm:$0xf]
  %v868 = vld [vmem:[%s3 + $0x288] sm:$0xf]
  %v869 = vld [vmem:[%s3 + $0x28c] sm:$0xf]
  %v870 = vld [vmem:[%s3 + $0x290] sm:$0xf]
  %v871 = vld [vmem:[%s3 + $0x294] sm:$0xf]
  %v872 = vld [vmem:[%s3 + $0x298] sm:$0xf]
  %v873 = vld [vmem:[%s3 + $0x29c] sm:$0xf]
  %v874 = vld [vmem:[%s3 + $0x2a0] sm:$0xf]
  %v875 = vld [vmem:[%s3 + $0x2a4] sm:$0xf]
  %v876 = vld [vmem:[%s3 + $0x2a8] sm:$0xf]
  %v877 = vld [vmem:[%s3 + $0x2ac] sm:$0xf]
  %v878 = vld [vmem:[%s3 + $0x2b0] sm:$0xf]
  %v879 = vld [vmem:[%s3 + $0x2b4] sm:$0xf]
  %v880 = vld [vmem:[%s3 + $0x2b8] sm:$0xf]
  %v881 = vld [vmem:[%s3 + $0x2bc] sm:$0xf]
  %v882 = vld [vmem:[%s3 + $0x2c0] sm:$0xf]
  %v883 = vld [vmem:[%s3 + $0x2c4] sm:$0xf]
  %v884 = vld [vmem:[%s3 + $0x2c8] sm:$0xf]
  %v885 = vld [vmem:[%s3 + $0x2cc] sm:$0xf]
  %v886 = vld [vmem:[%s3 + $0x2d0] sm:$0xf]
  %v887 = vld [vmem:[%s3 + $0x2d4] sm:$0xf]
  %v888 = vld [vmem:[%s3 + $0x2d8] sm:$0xf]
  %v889 = vld [vmem:[%s3 + $0x2dc] sm:$0xf]
  %v890 = vld [vmem:[%s3 + $0x2e0] sm:$0xf]
  %v891 = vld [vmem:[%s3 + $0x2e4] sm:$0xf]
  %v892 = vld [vmem:[%s3 + $0x2e8] sm:$0xf]
  %v893 = vld [vmem:[%s3 + $0x2ec] sm:$0xf]
  %v894 = vld [vmem:[%s3 + $0x2f0] sm:$0xf]
  %v895 = vld [vmem:[%s3 + $0x2f4] sm:$0xf]
  %v896 = vld [vmem:[%s3 + $0x2f8] sm:$0xf]
  %v897 = vld [vmem:[%s3 + $0x2fc] sm:$0xf]
  %v898 = vld [vmem:[%s3 + $0x300] sm:$0xf]
  %v899 = vld [vmem:[%s3 + $0x304] sm:$0xf]
  %v900 = vld [vmem:[%s3 + $0x308] sm:$0xf]
  %v901 = vld [vmem:[%s3 + $0x30c] sm:$0xf]
  %v902 = vld [vmem:[%s3 + $0x310] sm:$0xf]
  %v903 = vld [vmem:[%s3 + $0x314] sm:$0xf]
  %v904 = vld [vmem:[%s3 + $0x318] sm:$0xf]
  %v905 = vld [vmem:[%s3 + $0x31c] sm:$0xf]
  %v906 = vld [vmem:[%s3 + $0x320] sm:$0xf]
  %v907 = vld [vmem:[%s3 + $0x324] sm:$0xf]
  %v908 = vld [vmem:[%s3 + $0x328] sm:$0xf]
  %v909 = vld [vmem:[%s3 + $0x32c] sm:$0xf]
  %v910 = vld [vmem:[%s3 + $0x330] sm:$0xf]
  %v911 = vld [vmem:[%s3 + $0x334] sm:$0xf]
  %v912 = vld [vmem:[%s3 + $0x338] sm:$0xf]
  %v913 = vld [vmem:[%s3 + $0x33c] sm:$0xf]
  %v914 = vld [vmem:[%s3 + $0x340] sm:$0xf]
  %v915 = vld [vmem:[%s3 + $0x344] sm:$0xf]
  %v916 = vld [vmem:[%s3 + $0x348] sm:$0xf]
  %v917 = vld [vmem:[%s3 + $0x34c] sm:$0xf]
  %v918 = vld [vmem:[%s3 + $0x350] sm:$0xf]
  %v919 = vld [vmem:[%s3 + $0x354] sm:$0xf]
  %v920 = vld [vmem:[%s3 + $0x358] sm:$0xf]
  %v921 = vld [vmem:[%s3 + $0x35c] sm:$0xf]
  %v922 = vld [vmem:[%s3 + $0x360] sm:$0xf]
  %v923 = vld [vmem:[%s3 + $0x364] sm:$0xf]
  %v924 = vld [vmem:[%s3 + $0x368] sm:$0xf]
  %v925 = vld [vmem:[%s3 + $0x36c] sm:$0xf]
  %v926 = vld [vmem:[%s3 + $0x370] sm:$0xf]
  %v927 = vld [vmem:[%s3 + $0x374] sm:$0xf]
  %v928 = vld [vmem:[%s3 + $0x378] sm:$0xf]
  %v929 = vld [vmem:[%s3 + $0x37c] sm:$0xf]
  %v930 = vld [vmem:[%s3 + $0x380] sm:$0xf]
  %v931 = vld [vmem:[%s3 + $0x384] sm:$0xf]
  %v932 = vld [vmem:[%s3 + $0x388] sm:$0xf]
  %v933 = vld [vmem:[%s3 + $0x38c] sm:$0xf]
  %v934 = vld [vmem:[%s3 + $0x390] sm:$0xf]
  %v935 = vld [vmem:[%s3 + $0x394] sm:$0xf]
  %v936 = vld [vmem:[%s3 + $0x398] sm:$0xf]
  %v937 = vld [vmem:[%s3 + $0x39c] sm:$0xf]
  %v938 = vld [vmem:[%s3 + $0x3a0] sm:$0xf]
  %v939 = vld [vmem:[%s3 + $0x3a4] sm:$0xf]
  %v940 = vld [vmem:[%s3 + $0x3a8] sm:$0xf]
  %v941 = vld [vmem:[%s3 + $0x3ac] sm:$0xf]
  %v942 = vld [vmem:[%s3 + $0x3b0] sm:$0xf]
  %v943 = vld [vmem:[%s3 + $0x3b4] sm:$0xf]
  %v944 = vld [vmem:[%s3 + $0x3b8] sm:$0xf]
  %v945 = vld [vmem:[%s3 + $0x3bc] sm:$0xf]
  %v946 = vld [vmem:[%s3 + $0x3c0] sm:$0xf]
  %v947 = vld [vmem:[%s3 + $0x3c4] sm:$0xf]
  %v948 = vld [vmem:[%s3 + $0x3c8] sm:$0xf]
  %v949 = vld [vmem:[%s3 + $0x3cc] sm:$0xf]
  %v950 = vld [vmem:[%s3 + $0x3d0] sm:$0xf]
  %v951 = vld [vmem:[%s3 + $0x3d4] sm:$0xf]
  %v952 = vld [vmem:[%s3 + $0x3d8] sm:$0xf]
  %v953 = vld [vmem:[%s3 + $0x3dc] sm:$0xf]
  %v954 = vld [vmem:[%s3 + $0x3e0] sm:$0xf]
  %v955 = vld [vmem:[%s3 + $0x3e4] sm:$0xf]
  %v956 = vld [vmem:[%s3 + $0x3e8] sm:$0xf]
  %v957 = vld [vmem:[%s3 + $0x3ec] sm:$0xf]
  %v958 = vld [vmem:[%s3 + $0x3f0] sm:$0xf]
  %v959 = vld [vmem:[%s3 + $0x3f4] sm:$0xf]
  %v960 = vld [vmem:[%s3 + $0x3f8] sm:$0xf]
  %v961 = vld [vmem:[%s3 + $0x3fc] sm:$0xf]
  %v962 = vld [vmem:[%s4] sm:$0x1]
  %v964 = vlaneseq
  %v965 = vshrl.u32 %v964, 7
  %v966 = vsub.s32 0, %v965
  %v967 = vrot.slane %v962, %v966
  %v1225 = vunpack.c.l.b16 %v706
  %v1226 = vunpack.c.l.b16 %v707
  %v1227 = vunpack.c.l.b16 %v708
  %v1228 = vunpack.c.l.b16 %v709
  %v1229 = vunpack.c.l.b16 %v710
  %v1230 = vunpack.c.l.b16 %v711
  %v1231 = vunpack.c.l.b16 %v712
  %v1232 = vunpack.c.l.b16 %v713
  %v1233 = vunpack.c.l.b16 %v714
  %v1234 = vunpack.c.l.b16 %v715
  %v1235 = vunpack.c.l.b16 %v716
  %v1236 = vunpack.c.l.b16 %v717
  %v1237 = vunpack.c.l.b16 %v718
  %v1238 = vunpack.c.l.b16 %v719
  %v1239 = vunpack.c.l.b16 %v720
  %v1240 = vunpack.c.l.b16 %v721
  %v1241 = vunpack.c.l.b16 %v722
  %v1242 = vunpack.c.l.b16 %v723
  %v1243 = vunpack.c.l.b16 %v724
  %v1244 = vunpack.c.l.b16 %v725
  %v1245 = vunpack.c.l.b16 %v726
  %v1246 = vunpack.c.l.b16 %v727
  %v1247 = vunpack.c.l.b16 %v728
  %v1248 = vunpack.c.l.b16 %v729
  %v1249 = vunpack.c.l.b16 %v730
  %v1250 = vunpack.c.l.b16 %v731
  %v1251 = vunpack.c.l.b16 %v732
  %v1252 = vunpack.c.l.b16 %v733
  %v1253 = vunpack.c.l.b16 %v734
  %v1254 = vunpack.c.l.b16 %v735
  %v1255 = vunpack.c.l.b16 %v736
  %v1256 = vunpack.c.l.b16 %v737
  %v1257 = vunpack.c.l.b16 %v738
  %v1258 = vunpack.c.l.b16 %v739
  %v1259 = vunpack.c.l.b16 %v740
  %v1260 = vunpack.c.l.b16 %v741
  %v1261 = vunpack.c.l.b16 %v742
  %v1262 = vunpack.c.l.b16 %v743
  %v1263 = vunpack.c.l.b16 %v744
  %v1264 = vunpack.c.l.b16 %v745
  %v1265 = vunpack.c.l.b16 %v746
  %v1266 = vunpack.c.l.b16 %v747
  %v1267 = vunpack.c.l.b16 %v748
  %v1268 = vunpack.c.l.b16 %v749
  %v1269 = vunpack.c.l.b16 %v750
  %v1270 = vunpack.c.l.b16 %v751
  %v1271 = vunpack.c.l.b16 %v752
  %v1272 = vunpack.c.l.b16 %v753
  %v1273 = vunpack.c.l.b16 %v754
  %v1274 = vunpack.c.l.b16 %v755
  %v1275 = vunpack.c.l.b16 %v756
  %v1276 = vunpack.c.l.b16 %v757
  %v1277 = vunpack.c.l.b16 %v758
  %v1278 = vunpack.c.l.b16 %v759
  %v1279 = vunpack.c.l.b16 %v760
  %v1280 = vunpack.c.l.b16 %v761
  %v1281 = vunpack.c.l.b16 %v762
  %v1282 = vunpack.c.l.b16 %v763
  %v1283 = vunpack.c.l.b16 %v764
  %v1284 = vunpack.c.l.b16 %v765
  %v1285 = vunpack.c.l.b16 %v766
  %v1286 = vunpack.c.l.b16 %v767
  %v1287 = vunpack.c.l.b16 %v768
  %v1288 = vunpack.c.l.b16 %v769
  %v1289 = vunpack.c.l.b16 %v770
  %v1290 = vunpack.c.l.b16 %v771
  %v1291 = vunpack.c.l.b16 %v772
  %v1292 = vunpack.c.l.b16 %v773
  %v1293 = vunpack.c.l.b16 %v774
  %v1294 = vunpack.c.l.b16 %v775
  %v1295 = vunpack.c.l.b16 %v776
  %v1296 = vunpack.c.l.b16 %v777
  %v1297 = vunpack.c.l.b16 %v778
  %v1298 = vunpack.c.l.b16 %v779
  %v1299 = vunpack.c.l.b16 %v780
  %v1300 = vunpack.c.l.b16 %v781
  %v1301 = vunpack.c.l.b16 %v782
  %v1302 = vunpack.c.l.b16 %v783
  %v1303 = vunpack.c.l.b16 %v784
  %v1304 = vunpack.c.l.b16 %v785
  %v1305 = vunpack.c.l.b16 %v786
  %v1306 = vunpack.c.l.b16 %v787
  %v1307 = vunpack.c.l.b16 %v788
  %v1308 = vunpack.c.l.b16 %v789
  %v1309 = vunpack.c.l.b16 %v790
  %v1310 = vunpack.c.l.b16 %v791
  %v1311 = vunpack.c.l.b16 %v792
  %v1312 = vunpack.c.l.b16 %v793
  %v1313 = vunpack.c.l.b16 %v794
  %v1314 = vunpack.c.l.b16 %v795
  %v1315 = vunpack.c.l.b16 %v796
  %v1316 = vunpack.c.l.b16 %v797
  %v1317 = vunpack.c.l.b16 %v798
  %v1318 = vunpack.c.l.b16 %v799
  %v1319 = vunpack.c.l.b16 %v800
  %v1320 = vunpack.c.l.b16 %v801
  %v1321 = vunpack.c.l.b16 %v802
  %v1322 = vunpack.c.l.b16 %v803
  %v1323 = vunpack.c.l.b16 %v804
  %v1324 = vunpack.c.l.b16 %v805
  %v1325 = vunpack.c.l.b16 %v806
  %v1326 = vunpack.c.l.b16 %v807
  %v1327 = vunpack.c.l.b16 %v808
  %v1328 = vunpack.c.l.b16 %v809
  %v1329 = vunpack.c.l.b16 %v810
  %v1330 = vunpack.c.l.b16 %v811
  %v1331 = vunpack.c.l.b16 %v812
  %v1332 = vunpack.c.l.b16 %v813
  %v1333 = vunpack.c.l.b16 %v814
  %v1334 = vunpack.c.l.b16 %v815
  %v1335 = vunpack.c.l.b16 %v816
  %v1336 = vunpack.c.l.b16 %v817
  %v1337 = vunpack.c.l.b16 %v818
  %v1338 = vunpack.c.l.b16 %v819
  %v1339 = vunpack.c.l.b16 %v820
  %v1340 = vunpack.c.l.b16 %v821
  %v1341 = vunpack.c.l.b16 %v822
  %v1342 = vunpack.c.l.b16 %v823
  %v1343 = vunpack.c.l.b16 %v824
  %v1344 = vunpack.c.l.b16 %v825
  %v1345 = vunpack.c.l.b16 %v826
  %v1346 = vunpack.c.l.b16 %v827
  %v1347 = vunpack.c.l.b16 %v828
  %v1348 = vunpack.c.l.b16 %v829
  %v1349 = vunpack.c.l.b16 %v830
  %v1350 = vunpack.c.l.b16 %v831
  %v1351 = vunpack.c.l.b16 %v832
  %v1352 = vunpack.c.l.b16 %v833
  %v1353 = vunpack.c.l.b16 %v834
  %v1354 = vunpack.c.l.b16 %v835
  %v1355 = vunpack.c.l.b16 %v836
  %v1356 = vunpack.c.l.b16 %v837
  %v1357 = vunpack.c.l.b16 %v838
  %v1358 = vunpack.c.l.b16 %v839
  %v1359 = vunpack.c.l.b16 %v840
  %v1360 = vunpack.c.l.b16 %v841
  %v1361 = vunpack.c.l.b16 %v842
  %v1362 = vunpack.c.l.b16 %v843
  %v1363 = vunpack.c.l.b16 %v844
  %v1364 = vunpack.c.l.b16 %v845
  %v1365 = vunpack.c.l.b16 %v846
  %v1366 = vunpack.c.l.b16 %v847
  %v1367 = vunpack.c.l.b16 %v848
  %v1368 = vunpack.c.l.b16 %v849
  %v1369 = vunpack.c.l.b16 %v850
  %v1370 = vunpack.c.l.b16 %v851
  %v1371 = vunpack.c.l.b16 %v852
  %v1372 = vunpack.c.l.b16 %v853
  %v1373 = vunpack.c.l.b16 %v854
  %v1374 = vunpack.c.l.b16 %v855
  %v1375 = vunpack.c.l.b16 %v856
  %v1376 = vunpack.c.l.b16 %v857
  %v1377 = vunpack.c.l.b16 %v858
  %v1378 = vunpack.c.l.b16 %v859
  %v1379 = vunpack.c.l.b16 %v860
  %v1380 = vunpack.c.l.b16 %v861
  %v1381 = vunpack.c.l.b16 %v862
  %v1382 = vunpack.c.l.b16 %v863
  %v1383 = vunpack.c.l.b16 %v864
  %v1384 = vunpack.c.l.b16 %v865
  %v1385 = vunpack.c.l.b16 %v866
  %v1386 = vunpack.c.l.b16 %v867
  %v1387 = vunpack.c.l.b16 %v868
  %v1388 = vunpack.c.l.b16 %v869
  %v1389 = vunpack.c.l.b16 %v870
  %v1390 = vunpack.c.l.b16 %v871
  %v1391 = vunpack.c.l.b16 %v872
  %v1392 = vunpack.c.l.b16 %v873
  %v1393 = vunpack.c.l.b16 %v874
  %v1394 = vunpack.c.l.b16 %v875
  %v1395 = vunpack.c.l.b16 %v876
  %v1396 = vunpack.c.l.b16 %v877
  %v1397 = vunpack.c.l.b16 %v878
  %v1398 = vunpack.c.l.b16 %v879
  %v1399 = vunpack.c.l.b16 %v880
  %v1400 = vunpack.c.l.b16 %v881
  %v1401 = vunpack.c.l.b16 %v882
  %v1402 = vunpack.c.l.b16 %v883
  %v1403 = vunpack.c.l.b16 %v884
  %v1404 = vunpack.c.l.b16 %v885
  %v1405 = vunpack.c.l.b16 %v886
  %v1406 = vunpack.c.l.b16 %v887
  %v1407 = vunpack.c.l.b16 %v888
  %v1408 = vunpack.c.l.b16 %v889
  %v1409 = vunpack.c.l.b16 %v890
  %v1410 = vunpack.c.l.b16 %v891
  %v1411 = vunpack.c.l.b16 %v892
  %v1412 = vunpack.c.l.b16 %v893
  %v1413 = vunpack.c.l.b16 %v894
  %v1414 = vunpack.c.l.b16 %v895
  %v1415 = vunpack.c.l.b16 %v896
  %v1416 = vunpack.c.l.b16 %v897
  %v1417 = vunpack.c.l.b16 %v898
  %v1418 = vunpack.c.l.b16 %v899
  %v1419 = vunpack.c.l.b16 %v900
  %v1420 = vunpack.c.l.b16 %v901
  %v1421 = vunpack.c.l.b16 %v902
  %v1422 = vunpack.c.l.b16 %v903
  %v1423 = vunpack.c.l.b16 %v904
  %v1424 = vunpack.c.l.b16 %v905
  %v1425 = vunpack.c.l.b16 %v906
  %v1426 = vunpack.c.l.b16 %v907
  %v1427 = vunpack.c.l.b16 %v908
  %v1428 = vunpack.c.l.b16 %v909
  %v1429 = vunpack.c.l.b16 %v910
  %v1430 = vunpack.c.l.b16 %v911
  %v1431 = vunpack.c.l.b16 %v912
  %v1432 = vunpack.c.l.b16 %v913
  %v1433 = vunpack.c.l.b16 %v914
  %v1434 = vunpack.c.l.b16 %v915
  %v1435 = vunpack.c.l.b16 %v916
  %v1436 = vunpack.c.l.b16 %v917
  %v1437 = vunpack.c.l.b16 %v918
  %v1438 = vunpack.c.l.b16 %v919
  %v1439 = vunpack.c.l.b16 %v920
  %v1440 = vunpack.c.l.b16 %v921
  %v1441 = vunpack.c.l.b16 %v922
  %v1442 = vunpack.c.l.b16 %v923
  %v1443 = vunpack.c.l.b16 %v924
  %v1444 = vunpack.c.l.b16 %v925
  %v1445 = vunpack.c.l.b16 %v926
  %v1446 = vunpack.c.l.b16 %v927
  %v1447 = vunpack.c.l.b16 %v928
  %v1448 = vunpack.c.l.b16 %v929
  %v1449 = vunpack.c.l.b16 %v930
  %v1450 = vunpack.c.l.b16 %v931
  %v1451 = vunpack.c.l.b16 %v932
  %v1452 = vunpack.c.l.b16 %v933
  %v1453 = vunpack.c.l.b16 %v934
  %v1454 = vunpack.c.l.b16 %v935
  %v1455 = vunpack.c.l.b16 %v936
  %v1456 = vunpack.c.l.b16 %v937
  %v1457 = vunpack.c.l.b16 %v938
  %v1458 = vunpack.c.l.b16 %v939
  %v1459 = vunpack.c.l.b16 %v940
  %v1460 = vunpack.c.l.b16 %v941
  %v1461 = vunpack.c.l.b16 %v942
  %v1462 = vunpack.c.l.b16 %v943
  %v1463 = vunpack.c.l.b16 %v944
  %v1464 = vunpack.c.l.b16 %v945
  %v1465 = vunpack.c.l.b16 %v946
  %v1466 = vunpack.c.l.b16 %v947
  %v1467 = vunpack.c.l.b16 %v948
  %v1468 = vunpack.c.l.b16 %v949
  %v1469 = vunpack.c.l.b16 %v950
  %v1470 = vunpack.c.l.b16 %v951
  %v1471 = vunpack.c.l.b16 %v952
  %v1472 = vunpack.c.l.b16 %v953
  %v1473 = vunpack.c.l.b16 %v954
  %v1474 = vunpack.c.l.b16 %v955
  %v1475 = vunpack.c.l.b16 %v956
  %v1476 = vunpack.c.l.b16 %v957
  %v1477 = vunpack.c.l.b16 %v958
  %v1478 = vunpack.c.l.b16 %v959
  %v1479 = vunpack.c.l.b16 %v960
  %v1480 = vunpack.c.l.b16 %v961
  %v1481 = vpack.c.b16 %v1226, %v1225
  %v1482 = vpack.c.b16 %v1228, %v1227
  %v1483 = vpack.c.b16 %v1230, %v1229
  %v1484 = vpack.c.b16 %v1232, %v1231
  %v1485 = vpack.c.b16 %v1234, %v1233
  %v1486 = vpack.c.b16 %v1236, %v1235
  %v1487 = vpack.c.b16 %v1238, %v1237
  %v1488 = vpack.c.b16 %v1240, %v1239
  %v1489 = vpack.c.b16 %v1242, %v1241
  %v1490 = vpack.c.b16 %v1244, %v1243
  %v1491 = vpack.c.b16 %v1246, %v1245
  %v1492 = vpack.c.b16 %v1248, %v1247
  %v1493 = vpack.c.b16 %v1250, %v1249
  %v1494 = vpack.c.b16 %v1252, %v1251
  %v1495 = vpack.c.b16 %v1254, %v1253
  %v1496 = vpack.c.b16 %v1256, %v1255
  %v1497 = vpack.c.b16 %v1258, %v1257
  %v1498 = vpack.c.b16 %v1260, %v1259
  %v1499 = vpack.c.b16 %v1262, %v1261
  %v1500 = vpack.c.b16 %v1264, %v1263
  %v1501 = vpack.c.b16 %v1266, %v1265
  %v1502 = vpack.c.b16 %v1268, %v1267
  %v1503 = vpack.c.b16 %v1270, %v1269
  %v1504 = vpack.c.b16 %v1272, %v1271
  %v1505 = vpack.c.b16 %v1274, %v1273
  %v1506 = vpack.c.b16 %v1276, %v1275
  %v1507 = vpack.c.b16 %v1278, %v1277
  %v1508 = vpack.c.b16 %v1280, %v1279
  %v1509 = vpack.c.b16 %v1282, %v1281
  %v1510 = vpack.c.b16 %v1284, %v1283
  %v1511 = vpack.c.b16 %v1286, %v1285
  %v1512 = vpack.c.b16 %v1288, %v1287
  %v1513 = vpack.c.b16 %v1290, %v1289
  %v1514 = vpack.c.b16 %v1292, %v1291
  %v1515 = vpack.c.b16 %v1294, %v1293
  %v1516 = vpack.c.b16 %v1296, %v1295
  %v1517 = vpack.c.b16 %v1298, %v1297
  %v1518 = vpack.c.b16 %v1300, %v1299
  %v1519 = vpack.c.b16 %v1302, %v1301
  %v1520 = vpack.c.b16 %v1304, %v1303
  %v1521 = vpack.c.b16 %v1306, %v1305
  %v1522 = vpack.c.b16 %v1308, %v1307
  %v1523 = vpack.c.b16 %v1310, %v1309
  %v1524 = vpack.c.b16 %v1312, %v1311
  %v1525 = vpack.c.b16 %v1314, %v1313
  %v1526 = vpack.c.b16 %v1316, %v1315
  %v1527 = vpack.c.b16 %v1318, %v1317
  %v1528 = vpack.c.b16 %v1320, %v1319
  %v1529 = vpack.c.b16 %v1322, %v1321
  %v1530 = vpack.c.b16 %v1324, %v1323
  %v1531 = vpack.c.b16 %v1326, %v1325
  %v1532 = vpack.c.b16 %v1328, %v1327
  %v1533 = vpack.c.b16 %v1330, %v1329
  %v1534 = vpack.c.b16 %v1332, %v1331
  %v1535 = vpack.c.b16 %v1334, %v1333
  %v1536 = vpack.c.b16 %v1336, %v1335
  %v1537 = vpack.c.b16 %v1338, %v1337
  %v1538 = vpack.c.b16 %v1340, %v1339
  %v1539 = vpack.c.b16 %v1342, %v1341
  %v1540 = vpack.c.b16 %v1344, %v1343
  %v1541 = vpack.c.b16 %v1346, %v1345
  %v1542 = vpack.c.b16 %v1348, %v1347
  %v1543 = vpack.c.b16 %v1350, %v1349
  %v1544 = vpack.c.b16 %v1352, %v1351
  %v1545 = vpack.c.b16 %v1354, %v1353
  %v1546 = vpack.c.b16 %v1356, %v1355
  %v1547 = vpack.c.b16 %v1358, %v1357
  %v1548 = vpack.c.b16 %v1360, %v1359
  %v1549 = vpack.c.b16 %v1362, %v1361
  %v1550 = vpack.c.b16 %v1364, %v1363
  %v1551 = vpack.c.b16 %v1366, %v1365
  %v1552 = vpack.c.b16 %v1368, %v1367
  %v1553 = vpack.c.b16 %v1370, %v1369
  %v1554 = vpack.c.b16 %v1372, %v1371
  %v1555 = vpack.c.b16 %v1374, %v1373
  %v1556 = vpack.c.b16 %v1376, %v1375
  %v1557 = vpack.c.b16 %v1378, %v1377
  %v1558 = vpack.c.b16 %v1380, %v1379
  %v1559 = vpack.c.b16 %v1382, %v1381
  %v1560 = vpack.c.b16 %v1384, %v1383
  %v1561 = vpack.c.b16 %v1386, %v1385
  %v1562 = vpack.c.b16 %v1388, %v1387
  %v1563 = vpack.c.b16 %v1390, %v1389
  %v1564 = vpack.c.b16 %v1392, %v1391
  %v1565 = vpack.c.b16 %v1394, %v1393
  %v1566 = vpack.c.b16 %v1396, %v1395
  %v1567 = vpack.c.b16 %v1398, %v1397
  %v1568 = vpack.c.b16 %v1400, %v1399
  %v1569 = vpack.c.b16 %v1402, %v1401
  %v1570 = vpack.c.b16 %v1404, %v1403
  %v1571 = vpack.c.b16 %v1406, %v1405
  %v1572 = vpack.c.b16 %v1408, %v1407
  %v1573 = vpack.c.b16 %v1410, %v1409
  %v1574 = vpack.c.b16 %v1412, %v1411
  %v1575 = vpack.c.b16 %v1414, %v1413
  %v1576 = vpack.c.b16 %v1416, %v1415
  %v1577 = vpack.c.b16 %v1418, %v1417
  %v1578 = vpack.c.b16 %v1420, %v1419
  %v1579 = vpack.c.b16 %v1422, %v1421
  %v1580 = vpack.c.b16 %v1424, %v1423
  %v1581 = vpack.c.b16 %v1426, %v1425
  %v1582 = vpack.c.b16 %v1428, %v1427
  %v1583 = vpack.c.b16 %v1430, %v1429
  %v1584 = vpack.c.b16 %v1432, %v1431
  %v1585 = vpack.c.b16 %v1434, %v1433
  %v1586 = vpack.c.b16 %v1436, %v1435
  %v1587 = vpack.c.b16 %v1438, %v1437
  %v1588 = vpack.c.b16 %v1440, %v1439
  %v1589 = vpack.c.b16 %v1442, %v1441
  %v1590 = vpack.c.b16 %v1444, %v1443
  %v1591 = vpack.c.b16 %v1446, %v1445
  %v1592 = vpack.c.b16 %v1448, %v1447
  %v1593 = vpack.c.b16 %v1450, %v1449
  %v1594 = vpack.c.b16 %v1452, %v1451
  %v1595 = vpack.c.b16 %v1454, %v1453
  %v1596 = vpack.c.b16 %v1456, %v1455
  %v1597 = vpack.c.b16 %v1458, %v1457
  %v1598 = vpack.c.b16 %v1460, %v1459
  %v1599 = vpack.c.b16 %v1462, %v1461
  %v1600 = vpack.c.b16 %v1464, %v1463
  %v1601 = vpack.c.b16 %v1466, %v1465
  %v1602 = vpack.c.b16 %v1468, %v1467
  %v1603 = vpack.c.b16 %v1470, %v1469
  %v1604 = vpack.c.b16 %v1472, %v1471
  %v1605 = vpack.c.b16 %v1474, %v1473
  %v1606 = vpack.c.b16 %v1476, %v1475
  %v1607 = vpack.c.b16 %v1478, %v1477
  %v1608 = vpack.c.b16 %v1480, %v1479
  %1737 = vmatprep.subr.bf16.mxu0 0
  %1738 = vmatpush1.bf16.msra.mxu0 %v1481
  %1739 = vmatprep.subr.bf16.mxu0 0
  %1740 = vmatpush1.bf16.msra.mxu0 %v1482
  %1741 = vmatprep.subr.bf16.mxu0 0
  %1742 = vmatpush1.bf16.msra.mxu0 %v1483
  %1743 = vmatprep.subr.bf16.mxu0 0
  %1744 = vmatpush1.bf16.msra.mxu0 %v1484
  %1745 = vmatprep.subr.bf16.mxu0 0
  %1746 = vmatpush1.bf16.msra.mxu0 %v1485
  %1747 = vmatprep.subr.bf16.mxu0 0
  %1748 = vmatpush1.bf16.msra.mxu0 %v1486
  %1749 = vmatprep.subr.bf16.mxu0 0
  %1750 = vmatpush1.bf16.msra.mxu0 %v1487
  %1751 = vmatprep.subr.bf16.mxu0 0
  %1752 = vmatpush1.bf16.msra.mxu0 %v1488
  %1753 = vmatprep.subr.bf16.mxu0 0
  %1754 = vmatpush1.bf16.msra.mxu0 %v1489
  %1755 = vmatprep.subr.bf16.mxu0 0
  %1756 = vmatpush1.bf16.msra.mxu0 %v1490
  %1757 = vmatprep.subr.bf16.mxu0 0
  %1758 = vmatpush1.bf16.msra.mxu0 %v1491
  %1759 = vmatprep.subr.bf16.mxu0 0
  %1760 = vmatpush1.bf16.msra.mxu0 %v1492
  %1761 = vmatprep.subr.bf16.mxu0 0
  %1762 = vmatpush1.bf16.msra.mxu0 %v1493
  %1763 = vmatprep.subr.bf16.mxu0 0
  %1764 = vmatpush1.bf16.msra.mxu0 %v1494
  %1765 = vmatprep.subr.bf16.mxu0 0
  %1766 = vmatpush1.bf16.msra.mxu0 %v1495
  %1767 = vmatprep.subr.bf16.mxu0 0
  %1768 = vmatpush1.bf16.msra.mxu0 %v1496
  %1769 = vmatprep.mubr.bf16.mxu0 %v691
  %1770 = vmatmul.mubr.bf16.gmra.mrb[0].mxu0 %v690
  %v1771 = vpop.f32.mrb[0].mxu0
  %v1772 = vadd.f32 %v967, %v1771
  %v1773 = vpop.f32.mrb[0].mxu0
  %v1774 = vpop.f32.mrb[0].mxu0
  %v1775 = vadd.f32 %v967, %v1774
  %v1776 = vpop.f32.mrb[0].mxu0
  %1777 = vdwg.mxu0
  %1778 = vmatprep.subr.bf16.mxu0 0
  %1779 = vmatpush1.bf16.msra.mxu0 %v1497
  %1780 = vmatprep.subr.bf16.mxu0 0
  %1781 = vmatpush1.bf16.msra.mxu0 %v1498
  %1782 = vmatprep.subr.bf16.mxu0 0
  %1783 = vmatpush1.bf16.msra.mxu0 %v1499
  %1784 = vmatprep.subr.bf16.mxu0 0
  %1785 = vmatpush1.bf16.msra.mxu0 %v1500
  %1786 = vmatprep.subr.bf16.mxu0 0
  %1787 = vmatpush1.bf16.msra.mxu0 %v1501
  %1788 = vmatprep.subr.bf16.mxu0 0
  %1789 = vmatpush1.bf16.msra.mxu0 %v1502
  %1790 = vmatprep.subr.bf16.mxu0 0
  %1791 = vmatpush1.bf16.msra.mxu0 %v1503
  %1792 = vmatprep.subr.bf16.mxu0 0
  %1793 = vmatpush1.bf16.msra.mxu0 %v1504
  %1794 = vmatprep.subr.bf16.mxu0 0
  %1795 = vmatpush1.bf16.msra.mxu0 %v1505
  %1796 = vmatprep.subr.bf16.mxu0 0
  %1797 = vmatpush1.bf16.msra.mxu0 %v1506
  %1798 = vmatprep.subr.bf16.mxu0 0
  %1799 = vmatpush1.bf16.msra.mxu0 %v1507
  %1800 = vmatprep.subr.bf16.mxu0 0
  %1801 = vmatpush1.bf16.msra.mxu0 %v1508
  %1802 = vmatprep.subr.bf16.mxu0 0
  %1803 = vmatpush1.bf16.msra.mxu0 %v1509
  %1804 = vmatprep.subr.bf16.mxu0 0
  %1805 = vmatpush1.bf16.msra.mxu0 %v1510
  %1806 = vmatprep.subr.bf16.mxu0 0
  %1807 = vmatpush1.bf16.msra.mxu0 %v1511
  %1808 = vmatprep.subr.bf16.mxu0 0
  %1809 = vmatpush1.bf16.msra.mxu0 %v1512
  %1810 = vmatprep.mubr.bf16.mxu0 %v693
  %1811 = vmatmul.mubr.bf16.gmra.mrb[0].mxu0 %v692
  %v1812 = vpop.f32.mrb[0].mxu0
  %v1813 = vadd.f32 %v1772, %v1812
  %v1814 = vpop.f32.mrb[0].mxu0
  %v1815 = vpop.f32.mrb[0].mxu0
  %v1816 = vadd.f32 %v1775, %v1815
  %v1817 = vpop.f32.mrb[0].mxu0
  %1818 = vdwg.mxu0
  %1819 = vmatprep.subr.bf16.mxu0 0
  %1820 = vmatpush1.bf16.msra.mxu0 %v1513
  %1821 = vmatprep.subr.bf16.mxu0 0
  %1822 = vmatpush1.bf16.msra.mxu0 %v1514
  %1823 = vmatprep.subr.bf16.mxu0 0
  %1824 = vmatpush1.bf16.msra.mxu0 %v1515
  %1825 = vmatprep.subr.bf16.mxu0 0
  %1826 = vmatpush1.bf16.msra.mxu0 %v1516
  %1827 = vmatprep.subr.bf16.mxu0 0
  %1828 = vmatpush1.bf16.msra.mxu0 %v1517
  %1829 = vmatprep.subr.bf16.mxu0 0
  %1830 = vmatpush1.bf16.msra.mxu0 %v1518
  %1831 = vmatprep.subr.bf16.mxu0 0
  %1832 = vmatpush1.bf16.msra.mxu0 %v1519
  %1833 = vmatprep.subr.bf16.mxu0 0
  %1834 = vmatpush1.bf16.msra.mxu0 %v1520
  %1835 = vmatprep.subr.bf16.mxu0 0
  %1836 = vmatpush1.bf16.msra.mxu0 %v1521
  %1837 = vmatprep.subr.bf16.mxu0 0
  %1838 = vmatpush1.bf16.msra.mxu0 %v1522
  %1839 = vmatprep.subr.bf16.mxu0 0
  %1840 = vmatpush1.bf16.msra.mxu0 %v1523
  %1841 = vmatprep.subr.bf16.mxu0 0
  %1842 = vmatpush1.bf16.msra.mxu0 %v1524
  %1843 = vmatprep.subr.bf16.mxu0 0
  %1844 = vmatpush1.bf16.msra.mxu0 %v1525
  %1845 = vmatprep.subr.bf16.mxu0 0
  %1846 = vmatpush1.bf16.msra.mxu0 %v1526
  %1847 = vmatprep.subr.bf16.mxu0 0
  %1848 = vmatpush1.bf16.msra.mxu0 %v1527
  %1849 = vmatprep.subr.bf16.mxu0 0
  %1850 = vmatpush1.bf16.msra.mxu0 %v1528
  %1851 = vmatprep.mubr.bf16.mxu0 %v695
  %1852 = vmatmul.mubr.bf16.gmra.mrb[0].mxu0 %v694
  %v1853 = vpop.f32.mrb[0].mxu0
  %v1854 = vadd.f32 %v1813, %v1853
  %v1855 = vpop.f32.mrb[0].mxu0
  %v1856 = vpop.f32.mrb[0].mxu0
  %v1857 = vadd.f32 %v1816, %v1856
  %v1858 = vpop.f32.mrb[0].mxu0
  %1859 = vdwg.mxu0
  %1860 = vmatprep.subr.bf16.mxu0 0
  %1861 = vmatpush1.bf16.msra.mxu0 %v1529
  %1862 = vmatprep.subr.bf16.mxu0 0
  %1863 = vmatpush1.bf16.msra.mxu0 %v1530
  %1864 = vmatprep.subr.bf16.mxu0 0
  %1865 = vmatpush1.bf16.msra.mxu0 %v1531
  %1866 = vmatprep.subr.bf16.mxu0 0
  %1867 = vmatpush1.bf16.msra.mxu0 %v1532
  %1868 = vmatprep.subr.bf16.mxu0 0
  %1869 = vmatpush1.bf16.msra.mxu0 %v1533
  %1870 = vmatprep.subr.bf16.mxu0 0
  %1871 = vmatpush1.bf16.msra.mxu0 %v1534
  %1872 = vmatprep.subr.bf16.mxu0 0
  %1873 = vmatpush1.bf16.msra.mxu0 %v1535
  %1874 = vmatprep.subr.bf16.mxu0 0
  %1875 = vmatpush1.bf16.msra.mxu0 %v1536
  %1876 = vmatprep.subr.bf16.mxu0 0
  %1877 = vmatpush1.bf16.msra.mxu0 %v1537
  %1878 = vmatprep.subr.bf16.mxu0 0
  %1879 = vmatpush1.bf16.msra.mxu0 %v1538
  %1880 = vmatprep.subr.bf16.mxu0 0
  %1881 = vmatpush1.bf16.msra.mxu0 %v1539
  %1882 = vmatprep.subr.bf16.mxu0 0
  %1883 = vmatpush1.bf16.msra.mxu0 %v1540
  %1884 = vmatprep.subr.bf16.mxu0 0
  %1885 = vmatpush1.bf16.msra.mxu0 %v1541
  %1886 = vmatprep.subr.bf16.mxu0 0
  %1887 = vmatpush1.bf16.msra.mxu0 %v1542
  %1888 = vmatprep.subr.bf16.mxu0 0
  %1889 = vmatpush1.bf16.msra.mxu0 %v1543
  %1890 = vmatprep.subr.bf16.mxu0 0
  %1891 = vmatpush1.bf16.msra.mxu0 %v1544
  %1892 = vmatprep.mubr.bf16.mxu0 %v697
  %1893 = vmatmul.mubr.bf16.gmra.mrb[0].mxu0 %v696
  %v1894 = vpop.f32.mrb[0].mxu0
  %v1895 = vadd.f32 %v1854, %v1894
  %v1896 = vpop.f32.mrb[0].mxu0
  %v1897 = vpop.f32.mrb[0].mxu0
  %v1898 = vadd.f32 %v1857, %v1897
  %v1899 = vpop.f32.mrb[0].mxu0
  %1900 = vdwg.mxu0
  %1901 = vmatprep.subr.bf16.mxu0 0
  %1902 = vmatpush1.bf16.msra.mxu0 %v1545
  %1903 = vmatprep.subr.bf16.mxu0 0
  %1904 = vmatpush1.bf16.msra.mxu0 %v1546
  %1905 = vmatprep.subr.bf16.mxu0 0
  %1906 = vmatpush1.bf16.msra.mxu0 %v1547
  %1907 = vmatprep.subr.bf16.mxu0 0
  %1908 = vmatpush1.bf16.msra.mxu0 %v1548
  %1909 = vmatprep.subr.bf16.mxu0 0
  %1910 = vmatpush1.bf16.msra.mxu0 %v1549
  %1911 = vmatprep.subr.bf16.mxu0 0
  %1912 = vmatpush1.bf16.msra.mxu0 %v1550
  %1913 = vmatprep.subr.bf16.mxu0 0
  %1914 = vmatpush1.bf16.msra.mxu0 %v1551
  %1915 = vmatprep.subr.bf16.mxu0 0
  %1916 = vmatpush1.bf16.msra.mxu0 %v1552
  %1917 = vmatprep.subr.bf16.mxu0 0
  %1918 = vmatpush1.bf16.msra.mxu0 %v1553
  %1919 = vmatprep.subr.bf16.mxu0 0
  %1920 = vmatpush1.bf16.msra.mxu0 %v1554
  %1921 = vmatprep.subr.bf16.mxu0 0
  %1922 = vmatpush1.bf16.msra.mxu0 %v1555
  %1923 = vmatprep.subr.bf16.mxu0 0
  %1924 = vmatpush1.bf16.msra.mxu0 %v1556
  %1925 = vmatprep.subr.bf16.mxu0 0
  %1926 = vmatpush1.bf16.msra.mxu0 %v1557
  %1927 = vmatprep.subr.bf16.mxu0 0
  %1928 = vmatpush1.bf16.msra.mxu0 %v1558
  %1929 = vmatprep.subr.bf16.mxu0 0
  %1930 = vmatpush1.bf16.msra.mxu0 %v1559
  %1931 = vmatprep.subr.bf16.mxu0 0
  %1932 = vmatpush1.bf16.msra.mxu0 %v1560
  %1933 = vmatprep.mubr.bf16.mxu0 %v699
  %1934 = vmatmul.mubr.bf16.gmra.mrb[0].mxu0 %v698
  %v1935 = vpop.f32.mrb[0].mxu0
  %v1936 = vadd.f32 %v1895, %v1935
  %v1937 = vpop.f32.mrb[0].mxu0
  %v1938 = vpop.f32.mrb[0].mxu0
  %v1939 = vadd.f32 %v1898, %v1938
  %v1940 = vpop.f32.mrb[0].mxu0
  %1941 = vdwg.mxu0
  %1942 = vmatprep.subr.bf16.mxu0 0
  %1943 = vmatpush1.bf16.msra.mxu0 %v1561
  %1944 = vmatprep.subr.bf16.mxu0 0
  %1945 = vmatpush1.bf16.msra.mxu0 %v1562
  %1946 = vmatprep.subr.bf16.mxu0 0
  %1947 = vmatpush1.bf16.msra.mxu0 %v1563
  %1948 = vmatprep.subr.bf16.mxu0 0
  %1949 = vmatpush1.bf16.msra.mxu0 %v1564
  %1950 = vmatprep.subr.bf16.mxu0 0
  %1951 = vmatpush1.bf16.msra.mxu0 %v1565
  %1952 = vmatprep.subr.bf16.mxu0 0
  %1953 = vmatpush1.bf16.msra.mxu0 %v1566
  %1954 = vmatprep.subr.bf16.mxu0 0
  %1955 = vmatpush1.bf16.msra.mxu0 %v1567
  %1956 = vmatprep.subr.bf16.mxu0 0
  %1957 = vmatpush1.bf16.msra.mxu0 %v1568
  %1958 = vmatprep.subr.bf16.mxu0 0
  %1959 = vmatpush1.bf16.msra.mxu0 %v1569
  %1960 = vmatprep.subr.bf16.mxu0 0
  %1961 = vmatpush1.bf16.msra.mxu0 %v1570
  %1962 = vmatprep.subr.bf16.mxu0 0
  %1963 = vmatpush1.bf16.msra.mxu0 %v1571
  %1964 = vmatprep.subr.bf16.mxu0 0
  %1965 = vmatpush1.bf16.msra.mxu0 %v1572
  %1966 = vmatprep.subr.bf16.mxu0 0
  %1967 = vmatpush1.bf16.msra.mxu0 %v1573
  %1968 = vmatprep.subr.bf16.mxu0 0
  %1969 = vmatpush1.bf16.msra.mxu0 %v1574
  %1970 = vmatprep.subr.bf16.mxu0 0
  %1971 = vmatpush1.bf16.msra.mxu0 %v1575
  %1972 = vmatprep.subr.bf16.mxu0 0
  %1973 = vmatpush1.bf16.msra.mxu0 %v1576
  %1974 = vmatprep.mubr.bf16.mxu0 %v701
  %1975 = vmatmul.mubr.bf16.gmra.mrb[0].mxu0 %v700
  %v1976 = vpop.f32.mrb[0].mxu0
  %v1977 = vadd.f32 %v1936, %v1976
  %v1978 = vpop.f32.mrb[0].mxu0
  %v1979 = vpop.f32.mrb[0].mxu0
  %v1980 = vadd.f32 %v1939, %v1979
  %v1981 = vpop.f32.mrb[0].mxu0
  %1982 = vdwg.mxu0
  %1983 = vmatprep.subr.bf16.mxu0 0
  %1984 = vmatpush1.bf16.msra.mxu0 %v1577
  %1985 = vmatprep.subr.bf16.mxu0 0
  %1986 = vmatpush1.bf16.msra.mxu0 %v1578
  %1987 = vmatprep.subr.bf16.mxu0 0
  %1988 = vmatpush1.bf16.msra.mxu0 %v1579
  %1989 = vmatprep.subr.bf16.mxu0 0
  %1990 = vmatpush1.bf16.msra.mxu0 %v1580
  %1991 = vmatprep.subr.bf16.mxu0 0
  %1992 = vmatpush1.bf16.msra.mxu0 %v1581
  %1993 = vmatprep.subr.bf16.mxu0 0
  %1994 = vmatpush1.bf16.msra.mxu0 %v1582
  %1995 = vmatprep.subr.bf16.mxu0 0
  %1996 = vmatpush1.bf16.msra.mxu0 %v1583
  %1997 = vmatprep.subr.bf16.mxu0 0
  %1998 = vmatpush1.bf16.msra.mxu0 %v1584
  %1999 = vmatprep.subr.bf16.mxu0 0
  %2000 = vmatpush1.bf16.msra.mxu0 %v1585
  %2001 = vmatprep.subr.bf16.mxu0 0
  %2002 = vmatpush1.bf16.msra.mxu0 %v1586
  %2003 = vmatprep.subr.bf16.mxu0 0
  %2004 = vmatpush1.bf16.msra.mxu0 %v1587
  %2005 = vmatprep.subr.bf16.mxu0 0
  %2006 = vmatpush1.bf16.msra.mxu0 %v1588
  %2007 = vmatprep.subr.bf16.mxu0 0
  %2008 = vmatpush1.bf16.msra.mxu0 %v1589
  %2009 = vmatprep.subr.bf16.mxu0 0
  %2010 = vmatpush1.bf16.msra.mxu0 %v1590
  %2011 = vmatprep.subr.bf16.mxu0 0
  %2012 = vmatpush1.bf16.msra.mxu0 %v1591
  %2013 = vmatprep.subr.bf16.mxu0 0
  %2014 = vmatpush1.bf16.msra.mxu0 %v1592
  %2015 = vmatprep.mubr.bf16.mxu0 %v703
  %2016 = vmatmul.mubr.bf16.gmra.mrb[0].mxu0 %v702
  %v2017 = vpop.f32.mrb[0].mxu0
  %v2018 = vadd.f32 %v1977, %v2017
  %v2019 = vpop.f32.mrb[0].mxu0
  %v2020 = vpop.f32.mrb[0].mxu0
  %v2021 = vadd.f32 %v1980, %v2020
  %v2022 = vpop.f32.mrb[0].mxu0
  %2023 = vdwg.mxu0
  %2024 = vmatprep.subr.bf16.mxu0 0
  %2025 = vmatpush1.bf16.msra.mxu0 %v1593
  %2026 = vmatprep.subr.bf16.mxu0 0
  %2027 = vmatpush1.bf16.msra.mxu0 %v1594
  %2028 = vmatprep.subr.bf16.mxu0 0
  %2029 = vmatpush1.bf16.msra.mxu0 %v1595
  %2030 = vmatprep.subr.bf16.mxu0 0
  %2031 = vmatpush1.bf16.msra.mxu0 %v1596
  %2032 = vmatprep.subr.bf16.mxu0 0
  %2033 = vmatpush1.bf16.msra.mxu0 %v1597
  %2034 = vmatprep.subr.bf16.mxu0 0
  %2035 = vmatpush1.bf16.msra.mxu0 %v1598
  %2036 = vmatprep.subr.bf16.mxu0 0
  %2037 = vmatpush1.bf16.msra.mxu0 %v1599
  %2038 = vmatprep.subr.bf16.mxu0 0
  %2039 = vmatpush1.bf16.msra.mxu0 %v1600
  %2040 = vmatprep.subr.bf16.mxu0 0
  %2041 = vmatpush1.bf16.msra.mxu0 %v1601
  %2042 = vmatprep.subr.bf16.mxu0 0
  %2043 = vmatpush1.bf16.msra.mxu0 %v1602
  %2044 = vmatprep.subr.bf16.mxu0 0
  %2045 = vmatpush1.bf16.msra.mxu0 %v1603
  %2046 = vmatprep.subr.bf16.mxu0 0
  %2047 = vmatpush1.bf16.msra.mxu0 %v1604
  %2048 = vmatprep.subr.bf16.mxu0 0
  %2049 = vmatpush1.bf16.msra.mxu0 %v1605
  %2050 = vmatprep.subr.bf16.mxu0 0
  %2051 = vmatpush1.bf16.msra.mxu0 %v1606
  %2052 = vmatprep.subr.bf16.mxu0 0
  %2053 = vmatpush1.bf16.msra.mxu0 %v1607
  %2054 = vmatprep.subr.bf16.mxu0 0
  %2055 = vmatpush1.bf16.msra.mxu0 %v1608
  %2056 = vmatprep.mubr.bf16.mxu0 %v705
  %2057 = vmatmul.mubr.bf16.gmra.mrb[0].mxu0 %v704
  %v2058 = vpop.f32.mrb[0].mxu0
  %v2059 = vadd.f32 %v2018, %v2058
  %v2060 = vpop.f32.mrb[0].mxu0
  %v2061 = vpop.f32.mrb[0].mxu0
  %v2062 = vadd.f32 %v2021, %v2061
  %v2063 = vpop.f32.mrb[0].mxu0
  %2064 = vdwg.mxu0
  %v2065 = vunpack.c.l.bf16 %v27
  %v2066 = vunpack.c.l.bf16 %v28
  %v2067 = vadd.f32 %v2065, %v2059
  %v2068 = vadd.f32 %v2066, %v2062
  %v2069 = vld [vmem:[%s5] sm:$0x1]
  %v2070 = vld [vmem:[%s6] sm:$0x1]
  %v2071 = vsel %vm310, %v2067, 0.0
  %2072 = vadd.xlane.f32.xlu0 %v2071
  %v2073 = vpop.xlane.xlu0 %2072
  %v2074 = vsel %vm310, %v2068, 0.0
  %2075 = vadd.xlane.f32.xlu0 %v2074
  %v2076 = vpop.xlane.xlu0 %2075
  %v2077 = vrcp.pop 32.0
  %v2078 = vmul.f32 %v2073, %v2077
  %v2079 = vmul.f32 %v2076, %v2077
  %v2080 = vsub.f32 %v2067, %v2078
  %v2081 = vsub.f32 %v2068, %v2079
  %v2082 = vmul.f32 %v2080, %v2080
  %v2083 = vmul.f32 %v2081, %v2081
  %v2084 = vsel %vm310, %v2082, 0.0
  %2085 = vadd.xlane.f32.xlu0 %v2084
  %v2086 = vpop.xlane.xlu0 %2085
  %v2087 = vsel %vm310, %v2083, 0.0
  %2088 = vadd.xlane.f32.xlu0 %v2087
  %v2089 = vpop.xlane.xlu0 %2088
  %v2090 = vmul.f32 %v2086, %v2077
  %v2091 = vmul.f32 %v2089, %v2077
  %v2092 = vadd.f32 %v2090, 1e-05
  %v2093 = vadd.f32 %v2091, 1e-05
  %v2094 = vrsqrt.pop %v2092
  %v2095 = vrsqrt.pop %v2093
  %v2096 = vmul.f32 %v2080, %v2094
  %v2097 = vmul.f32 %v2081, %v2095
  %v2099 = vlaneseq
  %v2100 = vshrl.u32 %v2099, 7
  %v2101 = vsub.s32 0, %v2100
  %v2102 = vrot.slane %v2069, %v2101
  %v2104 = vmul.f32 %v2096, %v2102
  %v2105 = vmul.f32 %v2097, %v2102
  %v2107 = vlaneseq
  %v2108 = vshrl.u32 %v2107, 7
  %v2109 = vsub.s32 0, %v2108
  %v2110 = vrot.slane %v2070, %v2109
  %v2112 = vadd.f32 %v2104, %v2110
  %v2113 = vadd.f32 %v2105, %v2110
  %v2114 = vpack.c.bf16 %v2113, %v2112
  %v2116 = vunpack.c.l.b16 %v2114
  %v2117 = vunpack.c.h.b16 %v2114
  %v2118 = vpack.c.b16 %v2116, %v2116
  %v2119 = vpack.c.b16 %v2117, %v2117
  %vm2122 = vcmask 257024
  %2123 = vst.msk [vmem:[%s7] sm:$0xf] %vm2122, %v2118
  %2124 = vst.msk [vmem:[%s7 + $0x4] sm:$0xf] %vm2122, %v2119
  // Predicated region
  $region30: #{transformer_forward.8} parent=0 // pred_check
    _
  $region31: #{transformer_forward.8} parent=0 // pred_check_branch
    %2126 = sbr.rel (0) target = $region33
  $region32: #{transformer_forward.8} parent=0 // pred_region
    _
  $region33: #{transformer_forward.8} parent=0 // pred_fallthru
    _
  // Predicated region
  $region34: #{transformer_forward.8} parent=0 // pred_check
    _
  $region35: #{transformer_forward.8} parent=0 // pred_check_branch
    %2128 = sbr.rel (0) target = $region37
  $region36: #{transformer_forward.8} parent=0 // pred_region
    _
  $region37: #{transformer_forward.8} parent=0 // pred_fallthru
    _

</llo_original>
